<compile_context>
chip_gen: v5e
topology: v5e:2x2
jax: 0.10.0
libtpu: 0.0.40
codegen_flags: <defaults>
</compile_context>

<pallas_src>
import math

import jax
import jax.numpy as jnp
from jax.experimental import pallas as pl
from jax.experimental.pallas import tpu as pltpu

# ----------------------------- hyper-parameters -------------------------------
# Small but structurally identical to the PyTorch defaults
# (3*53 -> 48 features, seq_len 128 -> 8; hidden/latent 32; n_layers 2).
BATCH = 2
SEQ_LEN = 8
INPUT_FEATURES = 48          # stands in for 3 * 53
H_FEATURES_LOOP = 32
LATENT_DIM = 32
N_LAYERS = 2
NEG_SLOPE = 0.2


def _pad_hidden(h):
    """Smallest hidden size >= h whose 4*h gate width is a multiple of 128."""
    return ((h + 31) // 32) * 32


# ------------------------------- fused kernel ---------------------------------
def _lstm_vae_kernel(
    # inputs
    xtm_ref, eps_ref,                # x time-major (T*B, F_in); eps (B, L)
    wih1_ref, whh1_ref, b1_ref,      # encoder lstm1:      F_in -> H
    wih2_ref, whh2_ref, b2_ref,      # encoder lstm2:      H    -> H
    wmv_ref, bmv_ref,                # fused mean|logvar:  H    -> 2L
    wd_ref, bd_ref,                  # decoder linear:     L    -> H
    wihL_ref, whhL_ref, bL_ref,      # decoder lstm_loop:  H    -> H
    wih3_ref, whh3_ref, b3_ref,      # decoder lstm2:      H    -> HP (padded)
    # outputs
    lat_ref,                         # (B, 3L+1)  [ z | mean | logvar | kl ]
    xmean_ref,                       # (B, T*F_out) lane-dense reconstruction
    # scratch
    gxh_scr,                         # (T*B, 4*H)   hoisted gate inputs (H layers)
    gxo_scr,                         # (T*B, 4*HP)  hoisted gate inputs (output layer)
):
    TB, _ = xtm_ref.shape
    B, L = eps_ref.shape
    T = TB // B
    H = whh2_ref.shape[0]
    HP = whh3_ref.shape[0]                       # padded output-LSTM hidden
    F_out = xmean_ref.shape[1] // T

    def run_lstm(gx_at, whh_ref, hdim):
        """Serial LSTM recurrence.  gx_at(t) = x_t @ W_ih + (b_ih + b_hh) is
        precomputed, so each step only does h_{t-1} @ W_hh + gate math.
        Returns the list of per-step hidden states and h_T."""
        whh = whh_ref[...]                       # hoisted once per pass
        h = jnp.zeros((B, hdim), jnp.float32)
        c = jnp.zeros((B, hdim), jnp.float32)
        hs = []
        for t in range(T):                       # fully unrolled time loop
            gates = gx_at(t) + jnp.dot(h, whh,
                                       preferred_element_type=jnp.float32)
            sg = jax.nn.sigmoid(gates)           # full-width EUP op
            tg = jnp.tanh(gates)                 # full-width EUP op
            i_g = sg[:, 0 * hdim:1 * hdim]       # PyTorch gate order: i, f, g, o
            f_g = sg[:, 1 * hdim:2 * hdim]
            g_g = tg[:, 2 * hdim:3 * hdim]
            o_g = sg[:, 3 * hdim:4 * hdim]
            c = f_g * c + i_g * g_g
            h = o_g * jnp.tanh(c)
            hs.append(h)
        return hs, h

    def gxh_at(t):                               # per-step read from scratch ref
        return gxh_scr[t * B:(t + 1) * B, :]

    def gxo_at(t):
        return gxo_scr[t * B:(t + 1) * B, :]

    # -------------------------------- encoder ---------------------------------
    # Hoisted layer-1 input projection: ONE (T*B, F_in) @ (F_in, 4H) matmul and
    # ONE dense store (x arrives time-major flattened from the wrapper).
    gxh_scr[...] = (jnp.dot(xtm_ref[...], wih1_ref[...],
                            preferred_element_type=jnp.float32) + b1_ref[...])
    hs, h_T = run_lstm(gxh_at, whh1_ref, H)

    # Stacked (weight-shared) encoder layers, as in the PyTorch reference loop.
    for _ in range(N_LAYERS - 1):
        seq = jnp.concatenate(hs, axis=0)        # (T*B, H) time-major value
        gxh_scr[...] = (jnp.dot(seq, wih2_ref[...],
                                preferred_element_type=jnp.float32) + b2_ref[...])
        hs, h_T = run_lstm(gxh_at, whh2_ref, H)

    # ----------------- latent heads (fused mean|logvar, in VMEM) --------------
    mv = (jnp.dot(h_T, wmv_ref[...], preferred_element_type=jnp.float32)
          + bmv_ref[...])                        # (B, 2L)
    z_mean = mv[:, :L]
    z_logvar = mv[:, L:]
    std = jnp.exp(0.5 * z_logvar)
    z = eps_ref[...] * std + z_mean              # reparametrize: eps*std + mean
    # KL(q||p) = -sum(1 + logvar - mu^2 - exp(logvar))  (exactly LstmVAE._kld,
    # which has no 0.5 factor).
    kl = -jnp.sum(1.0 + z_logvar - z_mean * z_mean - jnp.exp(z_logvar),
                  axis=-1, keepdims=True)
    # Single lane-dense store of all latent outputs: [ z | mean | logvar | kl ].
    lat_ref[...] = jnp.concatenate([z, z_mean, z_logvar, kl], axis=1)

    # -------------------------------- decoder ---------------------------------
    hd = (jnp.dot(z, wd_ref[...], preferred_element_type=jnp.float32)
          + bd_ref[...])
    hd = jnp.where(hd >= 0.0, hd, NEG_SLOPE * hd)            # LeakyReLU(0.2)

    # First lstm_loop pass: the input is hd repeated over the sequence, so its
    # hoisted projection is a single (B, 4H) row reused every step (no tiling).
    gxc = (jnp.dot(hd, wihL_ref[...], preferred_element_type=jnp.float32)
           + bL_ref[...])
    hs, _ = run_lstm(lambda t: gxc, whhL_ref, H)
    for _ in range(N_LAYERS - 2):                # extra weight-shared passes
        seq = jnp.concatenate(hs, axis=0)
        gxh_scr[...] = (jnp.dot(seq, wihL_ref[...],
                                preferred_element_type=jnp.float32) + bL_ref[...])
        hs, _ = run_lstm(gxh_at, whhL_ref, H)

    # Output LSTM (hidden padded F_out -> HP so gate math is whole vregs).
    seq = jnp.concatenate(hs, axis=0)
    gxo_scr[...] = (jnp.dot(seq, wih3_ref[...],
                            preferred_element_type=jnp.float32) + b3_ref[...])
    hs, _ = run_lstm(gxo_at, whh3_ref, HP)

    # ONE lane-dense (B, T*F_out) store of the reconstruction (padded hidden
    # lanes are exactly zero and sliced away here).
    xmean_ref[...] = jnp.concatenate([h[:, :F_out] for h in hs], axis=1)


# ------------------------------- parameters -----------------------------------
def _xavier_normal(key, out_f, in_f):
    std = math.sqrt(2.0 / (in_f + out_f))
    return std * jax.random.normal(key, (out_f, in_f), dtype=jnp.float32)


def _linear_params(key, in_f, out_f):
    # nn.Linear weight (out,in) xavier-normal'd, bias zeroed (LstmVAE.__init__)
    w = _xavier_normal(key, out_f, in_f)
    return w.T, jnp.zeros((1, out_f), jnp.float32)


def _lstm_params(key, in_f, hid):
    # PyTorch LSTM default init: U(-1/sqrt(H), 1/sqrt(H)); gate order (i,f,g,o)
    k = 1.0 / math.sqrt(hid)
    k1, k2, k3, k4 = jax.random.split(key, 4)
    wih = jax.random.uniform(k1, (4 * hid, in_f), jnp.float32, -k, k)
    whh = jax.random.uniform(k2, (4 * hid, hid), jnp.float32, -k, k)
    bih = jax.random.uniform(k3, (4 * hid,), jnp.float32, -k, k)
    bhh = jax.random.uniform(k4, (4 * hid,), jnp.float32, -k, k)
    return wih.T, whh.T, (bih + bhh).reshape(1, 4 * hid)


def init_params(key):
    ks = jax.random.split(key, 7)
    return {
        "enc_lstm1": _lstm_params(ks[0], INPUT_FEATURES, H_FEATURES_LOOP),
        "enc_lstm2": _lstm_params(ks[1], H_FEATURES_LOOP, H_FEATURES_LOOP),
        "mean": _linear_params(ks[2], H_FEATURES_LOOP, LATENT_DIM),
        "logvar": _linear_params(ks[3], H_FEATURES_LOOP, LATENT_DIM),
        "dec_linear": _linear_params(ks[4], LATENT_DIM, H_FEATURES_LOOP),
        "dec_lstm_loop": _lstm_params(ks[5], H_FEATURES_LOOP, H_FEATURES_LOOP),
        "dec_lstm2": _lstm_params(ks[6], H_FEATURES_LOOP, INPUT_FEATURES),
    }


def _pad_lstm_hidden(wih, whh, b, hid, hid_pad):
    """Zero-pad an LSTM's hidden size hid -> hid_pad, per gate block (i,f,g,o).
    Padded gate lanes get zero W_ih/W_hh columns and zero bias, so their
    pre-activation is 0 and the padded h/c lanes stay exactly 0 forever."""
    pad = hid_pad - hid

    def pad_cols(m):
        blocks = [m[:, g * hid:(g + 1) * hid] for g in range(4)]
        return jnp.concatenate(
            [jnp.pad(blk, ((0, 0), (0, pad))) for blk in blocks], axis=1)

    wih_p = pad_cols(wih)                                  # (in_f, 4*hid_pad)
    whh_p = jnp.pad(pad_cols(whh), ((0, pad), (0, 0)))     # (hid_pad, 4*hid_pad)
    b_p = pad_cols(b)                                      # (1, 4*hid_pad)
    return wih_p, whh_p, b_p


# --------------------------------- forward ------------------------------------
def lstm_vae_forward(x, params, eps):
    """x: [B, T, F_in] (batch-first, like PyTorch). Returns
    (x_mean [B,T,F_out], z_sample, z_mean, z_logvar, kl_divergence)."""
    x = x.astype(jnp.float32)
    B, T, F_in = x.shape
    wih1, whh1, b1 = params["enc_lstm1"]
    wih2, whh2, b2 = params["enc_lstm2"]
    wm, bm = params["mean"]
    wv, bv = params["logvar"]
    wd, bd = params["dec_linear"]
    wihL, whhL, bL = params["dec_lstm_loop"]
    wih3, whh3, b3 = params["dec_lstm2"]
    H = whh2.shape[0]
    L = wm.shape[1]
    F_out = whh3.shape[0]
    HP = _pad_hidden(F_out)                       # 48 -> 64 (whole-vreg gates)

    # Wrapper-side layout plumbing (cheap XLA ops, not compute hoisting):
    # time-major flattened x for the one-shot layer-1 projection, fused
    # mean|logvar head, and per-gate zero-padded output LSTM.
    x_tm = jnp.transpose(x, (1, 0, 2)).reshape(T * B, F_in)
    wmv = jnp.concatenate([wm, wv], axis=1)       # (H, 2L)
    bmv = jnp.concatenate([bm, bv], axis=1)       # (1, 2L)
    wih3p, whh3p, b3p = _pad_lstm_hidden(wih3, whh3, b3, F_out, HP)

    inputs = (x_tm, eps, wih1, whh1, b1, wih2, whh2, b2, wmv, bmv,
              wd, bd, wihL, whhL, bL, wih3p, whh3p, b3p)

    def full_spec(shape):
        n = len(shape)
        return pl.BlockSpec(shape, lambda i, n=n: (0,) * n)

    out_shapes = (
        jax.ShapeDtypeStruct((B, 3 * L + 1), jnp.float32),   # [z|mean|logvar|kl]
        jax.ShapeDtypeStruct((B, T * F_out), jnp.float32),   # x_mean (lane-dense)
    )

    lat, x_flat = pl.pallas_call(
        _lstm_vae_kernel,
        grid=(1,),                                           # single fused launch
        in_specs=[full_spec(a.shape) for a in inputs],
        out_specs=[full_spec(s.shape) for s in out_shapes],
        out_shape=out_shapes,
        scratch_shapes=[pltpu.VMEM((T * B, 4 * H), jnp.float32),
                        pltpu.VMEM((T * B, 4 * HP), jnp.float32)],
    )(*inputs)

    z = lat[:, :L]
    z_mean = lat[:, L:2 * L]
    z_logvar = lat[:, 2 * L:3 * L]
    kl = lat[:, 3 * L]
    x_mean = x_flat.reshape(B, T, F_out)   # free row-major collapse back
    return x_mean, z, z_mean, z_logvar, kl


# ----------------------------------- main --------------------------------------
if __name__ == "__main__":
    key = jax.random.PRNGKey(0)
    k_x, k_eps, k_p = jax.random.split(key, 3)

    x = jax.random.normal(k_x, (BATCH, SEQ_LEN, INPUT_FEATURES),
                          dtype=jnp.float32)
    # deterministic stand-in for torch.randn_like(std) in reparametrize()
    eps = jax.random.normal(k_eps, (BATCH, LATENT_DIM), dtype=jnp.float32)
    params = init_params(k_p)

    fwd = jax.jit(lstm_vae_forward)
    x_mean, z_sample, z_mean, z_logvar, kl = jax.block_until_ready(
        fwd(x, params, eps))

    assert x_mean.shape == (BATCH, SEQ_LEN, INPUT_FEATURES)
    assert z_sample.shape == (BATCH, LATENT_DIM)
    assert z_mean.shape == (BATCH, LATENT_DIM)
    assert z_logvar.shape == (BATCH, LATENT_DIM)
    assert kl.shape == (BATCH,)
    assert bool(jnp.all(jnp.isfinite(x_mean)))
    assert bool(jnp.all(jnp.isfinite(kl)))
    print("KERNEL_OK")
</pallas_src>

<mosaic_0001>
module attributes {stable_mosaic.version = 11 : i64} {
  func.func @_lstm_vae_kernel(%arg0: i32, %arg1: memref<16x48xf32, #tpu.memory_space<vmem>>, %arg2: memref<2x32xf32, #tpu.memory_space<vmem>>, %arg3: memref<48x128xf32, #tpu.memory_space<vmem>>, %arg4: memref<32x128xf32, #tpu.memory_space<vmem>>, %arg5: memref<1x128xf32, #tpu.memory_space<vmem>>, %arg6: memref<32x128xf32, #tpu.memory_space<vmem>>, %arg7: memref<32x128xf32, #tpu.memory_space<vmem>>, %arg8: memref<1x128xf32, #tpu.memory_space<vmem>>, %arg9: memref<32x64xf32, #tpu.memory_space<vmem>>, %arg10: memref<1x64xf32, #tpu.memory_space<vmem>>, %arg11: memref<32x32xf32, #tpu.memory_space<vmem>>, %arg12: memref<1x32xf32, #tpu.memory_space<vmem>>, %arg13: memref<32x128xf32, #tpu.memory_space<vmem>>, %arg14: memref<32x128xf32, #tpu.memory_space<vmem>>, %arg15: memref<1x128xf32, #tpu.memory_space<vmem>>, %arg16: memref<32x256xf32, #tpu.memory_space<vmem>>, %arg17: memref<64x256xf32, #tpu.memory_space<vmem>>, %arg18: memref<1x256xf32, #tpu.memory_space<vmem>>, %arg19: memref<2x97xf32, #tpu.memory_space<vmem>>, %arg20: memref<2x384xf32, #tpu.memory_space<vmem>>, %arg21: memref<16x128xf32, #tpu.memory_space<vmem>>, %arg22: memref<16x256xf32, #tpu.memory_space<vmem>>) attributes {dimension_semantics = [#tpu.dimension_semantics<arbitrary>], iteration_bounds = array<i64: 1>, scalar_prefetch = 0 : i64, scratch_operands = 2 : i64, tpu.core_type = #tpu.core_type<tc>, window_params = [{pipeline_mode = #tpu.pipeline_mode<synchronous>, transform_indices = @transform_0, window_bounds = array<i64: 16, 48>}, {pipeline_mode = #tpu.pipeline_mode<synchronous>, transform_indices = @transform_1, window_bounds = array<i64: 2, 32>}, {pipeline_mode = #tpu.pipeline_mode<synchronous>, transform_indices = @transform_2, window_bounds = array<i64: 48, 128>}, {pipeline_mode = #tpu.pipeline_mode<synchronous>, transform_indices = @transform_3, window_bounds = array<i64: 32, 128>}, {pipeline_mode = #tpu.pipeline_mode<synchronous>, transform_indices = @transform_4, window_bounds = array<i64: 1, 128>}, {pipeline_mode = #tpu.pipeline_mode<synchronous>, transform_indices = @transform_5, window_bounds = array<i64: 32, 128>}, {pipeline_mode = #tpu.pipeline_mode<synchronous>, transform_indices = @transform_6, window_bounds = array<i64: 32, 128>}, {pipeline_mode = #tpu.pipeline_mode<synchronous>, transform_indices = @transform_7, window_bounds = array<i64: 1, 128>}, {pipeline_mode = #tpu.pipeline_mode<synchronous>, transform_indices = @transform_8, window_bounds = array<i64: 32, 64>}, {pipeline_mode = #tpu.pipeline_mode<synchronous>, transform_indices = @transform_9, window_bounds = array<i64: 1, 64>}, {pipeline_mode = #tpu.pipeline_mode<synchronous>, transform_indices = @transform_10, window_bounds = array<i64: 32, 32>}, {pipeline_mode = #tpu.pipeline_mode<synchronous>, transform_indices = @transform_11, window_bounds = array<i64: 1, 32>}, {pipeline_mode = #tpu.pipeline_mode<synchronous>, transform_indices = @transform_12, window_bounds = array<i64: 32, 128>}, {pipeline_mode = #tpu.pipeline_mode<synchronous>, transform_indices = @transform_13, window_bounds = array<i64: 32, 128>}, {pipeline_mode = #tpu.pipeline_mode<synchronous>, transform_indices = @transform_14, window_bounds = array<i64: 1, 128>}, {pipeline_mode = #tpu.pipeline_mode<synchronous>, transform_indices = @transform_15, window_bounds = array<i64: 32, 256>}, {pipeline_mode = #tpu.pipeline_mode<synchronous>, transform_indices = @transform_16, window_bounds = array<i64: 64, 256>}, {pipeline_mode = #tpu.pipeline_mode<synchronous>, transform_indices = @transform_17, window_bounds = array<i64: 1, 256>}, {pipeline_mode = #tpu.pipeline_mode<synchronous>, transform_indices = @transform_18, window_bounds = array<i64: 2, 97>}, {pipeline_mode = #tpu.pipeline_mode<synchronous>, transform_indices = @transform_19, window_bounds = array<i64: 2, 384>}]} {
    %c0 = arith.constant 0 : index
    %c0_0 = arith.constant 0 : index
    %0 = vector.load %arg1[%c0, %c0_0] : memref<16x48xf32, #tpu.memory_space<vmem>>, vector<16x48xf32>
    %c0_1 = arith.constant 0 : index
    %c0_2 = arith.constant 0 : index
    %1 = vector.load %arg3[%c0_1, %c0_2] : memref<48x128xf32, #tpu.memory_space<vmem>>, vector<48x128xf32>
    %cst = arith.constant dense<0.000000e+00> : vector<16x128xf32>
    %2 = tpu.matmul %0, %1, %cst {dimension_numbers = #tpu.dot_dimension_numbers<[1], [0], [0], [1], [0, 0, 1, 1], [], []>} : vector<16x48xf32>, vector<48x128xf32>, vector<16x128xf32> -> vector<16x128xf32>
    %c0_3 = arith.constant 0 : index
    %c0_4 = arith.constant 0 : index
    %3 = vector.load %arg5[%c0_3, %c0_4] : memref<1x128xf32, #tpu.memory_space<vmem>>, vector<1x128xf32>
    %4 = vector.broadcast %3 : vector<1x128xf32> to vector<16x128xf32>
    %5 = arith.addf %2, %4 : vector<16x128xf32>
    %c0_5 = arith.constant 0 : index
    %c0_6 = arith.constant 0 : index
    %6 = vector.load %arg21[%c0_5, %c0_6] : memref<16x128xf32, #tpu.memory_space<vmem>>, vector<16x128xf32>
    tpu.vector_store %arg21[%c0_5, %c0_6], %5 {strides = array<i32>} : memref<16x128xf32, #tpu.memory_space<vmem>>, vector<16x128xf32>,
    %c0_7 = arith.constant 0 : index
    %c0_8 = arith.constant 0 : index
    %7 = vector.load %arg4[%c0_7, %c0_8] : memref<32x128xf32, #tpu.memory_space<vmem>>, vector<32x128xf32>
    %cst_9 = arith.constant 0.000000e+00 : f32
    %8 = vector.broadcast %cst_9 : f32 to vector<2x32xf32>
    %cst_10 = arith.constant 0.000000e+00 : f32
    %9 = vector.broadcast %cst_10 : f32 to vector<2x32xf32>
    %c0_11 = arith.constant 0 : index
    %c0_12 = arith.constant 0 : index
    %10 = vector.load %arg21[%c0_11, %c0_12] : memref<16x128xf32, #tpu.memory_space<vmem>>, vector<2x128xf32>
    %cst_13 = arith.constant dense<0.000000e+00> : vector<2x128xf32>
    %11 = tpu.matmul %8, %7, %cst_13 {dimension_numbers = #tpu.dot_dimension_numbers<[1], [0], [0], [1], [0, 0, 1, 1], [], []>} : vector<2x32xf32>, vector<32x128xf32>, vector<2x128xf32> -> vector<2x128xf32>
    %12 = arith.addf %10, %11 : vector<2x128xf32>
    %13 = arith.negf %12 : vector<2x128xf32>
    %14 = math.exp %13 : vector<2x128xf32>
    %cst_14 = arith.constant 1.000000e+00 : f32
    %15 = vector.broadcast %cst_14 : f32 to vector<2x128xf32>
    %16 = arith.addf %15, %14 : vector<2x128xf32>
    %17 = arith.divf %15, %16 : vector<2x128xf32>
    %18 = math.tanh %12 : vector<2x128xf32>
    %19 = vector.extract_strided_slice %17 {offsets = [0, 0], sizes = [2, 32], strides = [1, 1]} : vector<2x128xf32> to vector<2x32xf32>
    %20 = vector.extract_strided_slice %17 {offsets = [0, 32], sizes = [2, 32], strides = [1, 1]} : vector<2x128xf32> to vector<2x32xf32>
    %21 = vector.extract_strided_slice %18 {offsets = [0, 64], sizes = [2, 32], strides = [1, 1]} : vector<2x128xf32> to vector<2x32xf32>
    %22 = vector.extract_strided_slice %17 {offsets = [0, 96], sizes = [2, 32], strides = [1, 1]} : vector<2x128xf32> to vector<2x32xf32>
    %23 = arith.mulf %20, %9 : vector<2x32xf32>
    %24 = arith.mulf %19, %21 : vector<2x32xf32>
    %25 = arith.addf %23, %24 : vector<2x32xf32>
    %26 = math.tanh %25 : vector<2x32xf32>
    %27 = arith.mulf %22, %26 : vector<2x32xf32>
    %c2 = arith.constant 2 : index
    %c0_15 = arith.constant 0 : index
    %28 = vector.load %arg21[%c2, %c0_15] : memref<16x128xf32, #tpu.memory_space<vmem>>, vector<2x128xf32>
    %cst_16 = arith.constant dense<0.000000e+00> : vector<2x128xf32>
    %29 = tpu.matmul %27, %7, %cst_16 {dimension_numbers = #tpu.dot_dimension_numbers<[1], [0], [0], [1], [0, 0, 1, 1], [], []>} : vector<2x32xf32>, vector<32x128xf32>, vector<2x128xf32> -> vector<2x128xf32>
    %30 = arith.addf %28, %29 : vector<2x128xf32>
    %31 = arith.negf %30 : vector<2x128xf32>
    %32 = math.exp %31 : vector<2x128xf32>
    %cst_17 = arith.constant 1.000000e+00 : f32
    %33 = vector.broadcast %cst_17 : f32 to vector<2x128xf32>
    %34 = arith.addf %33, %32 : vector<2x128xf32>
    %35 = arith.divf %33, %34 : vector<2x128xf32>
    %36 = math.tanh %30 : vector<2x128xf32>
    %37 = vector.extract_strided_slice %35 {offsets = [0, 0], sizes = [2, 32], strides = [1, 1]} : vector<2x128xf32> to vector<2x32xf32>
    %38 = vector.extract_strided_slice %35 {offsets = [0, 32], sizes = [2, 32], strides = [1, 1]} : vector<2x128xf32> to vector<2x32xf32>
    %39 = vector.extract_strided_slice %36 {offsets = [0, 64], sizes = [2, 32], strides = [1, 1]} : vector<2x128xf32> to vector<2x32xf32>
    %40 = vector.extract_strided_slice %35 {offsets = [0, 96], sizes = [2, 32], strides = [1, 1]} : vector<2x128xf32> to vector<2x32xf32>
    %41 = arith.mulf %38, %25 : vector<2x32xf32>
    %42 = arith.mulf %37, %39 : vector<2x32xf32>
    %43 = arith.addf %41, %42 : vector<2x32xf32>
    %44 = math.tanh %43 : vector<2x32xf32>
    %45 = arith.mulf %40, %44 : vector<2x32xf32>
    %c4 = arith.constant 4 : index
    %c0_18 = arith.constant 0 : index
    %46 = vector.load %arg21[%c4, %c0_18] : memref<16x128xf32, #tpu.memory_space<vmem>>, vector<2x128xf32>
    %cst_19 = arith.constant dense<0.000000e+00> : vector<2x128xf32>
    %47 = tpu.matmul %45, %7, %cst_19 {dimension_numbers = #tpu.dot_dimension_numbers<[1], [0], [0], [1], [0, 0, 1, 1], [], []>} : vector<2x32xf32>, vector<32x128xf32>, vector<2x128xf32> -> vector<2x128xf32>
    %48 = arith.addf %46, %47 : vector<2x128xf32>
    %49 = arith.negf %48 : vector<2x128xf32>
    %50 = math.exp %49 : vector<2x128xf32>
    %cst_20 = arith.constant 1.000000e+00 : f32
    %51 = vector.broadcast %cst_20 : f32 to vector<2x128xf32>
    %52 = arith.addf %51, %50 : vector<2x128xf32>
    %53 = arith.divf %51, %52 : vector<2x128xf32>
    %54 = math.tanh %48 : vector<2x128xf32>
    %55 = vector.extract_strided_slice %53 {offsets = [0, 0], sizes = [2, 32], strides = [1, 1]} : vector<2x128xf32> to vector<2x32xf32>
    %56 = vector.extract_strided_slice %53 {offsets = [0, 32], sizes = [2, 32], strides = [1, 1]} : vector<2x128xf32> to vector<2x32xf32>
    %57 = vector.extract_strided_slice %54 {offsets = [0, 64], sizes = [2, 32], strides = [1, 1]} : vector<2x128xf32> to vector<2x32xf32>
    %58 = vector.extract_strided_slice %53 {offsets = [0, 96], sizes = [2, 32], strides = [1, 1]} : vector<2x128xf32> to vector<2x32xf32>
    %59 = arith.mulf %56, %43 : vector<2x32xf32>
    %60 = arith.mulf %55, %57 : vector<2x32xf32>
    %61 = arith.addf %59, %60 : vector<2x32xf32>
    %62 = math.tanh %61 : vector<2x32xf32>
    %63 = arith.mulf %58, %62 : vector<2x32xf32>
    %c6 = arith.constant 6 : index
    %c0_21 = arith.constant 0 : index
    %64 = vector.load %arg21[%c6, %c0_21] : memref<16x128xf32, #tpu.memory_space<vmem>>, vector<2x128xf32>
    %cst_22 = arith.constant dense<0.000000e+00> : vector<2x128xf32>
    %65 = tpu.matmul %63, %7, %cst_22 {dimension_numbers = #tpu.dot_dimension_numbers<[1], [0], [0], [1], [0, 0, 1, 1], [], []>} : vector<2x32xf32>, vector<32x128xf32>, vector<2x128xf32> -> vector<2x128xf32>
    %66 = arith.addf %64, %65 : vector<2x128xf32>
    %67 = arith.negf %66 : vector<2x128xf32>
    %68 = math.exp %67 : vector<2x128xf32>
    %cst_23 = arith.constant 1.000000e+00 : f32
    %69 = vector.broadcast %cst_23 : f32 to vector<2x128xf32>
    %70 = arith.addf %69, %68 : vector<2x128xf32>
    %71 = arith.divf %69, %70 : vector<2x128xf32>
    %72 = math.tanh %66 : vector<2x128xf32>
    %73 = vector.extract_strided_slice %71 {offsets = [0, 0], sizes = [2, 32], strides = [1, 1]} : vector<2x128xf32> to vector<2x32xf32>
    %74 = vector.extract_strided_slice %71 {offsets = [0, 32], sizes = [2, 32], strides = [1, 1]} : vector<2x128xf32> to vector<2x32xf32>
    %75 = vector.extract_strided_slice %72 {offsets = [0, 64], sizes = [2, 32], strides = [1, 1]} : vector<2x128xf32> to vector<2x32xf32>
    %76 = vector.extract_strided_slice %71 {offsets = [0, 96], sizes = [2, 32], strides = [1, 1]} : vector<2x128xf32> to vector<2x32xf32>
    %77 = arith.mulf %74, %61 : vector<2x32xf32>
    %78 = arith.mulf %73, %75 : vector<2x32xf32>
    %79 = arith.addf %77, %78 : vector<2x32xf32>
    %80 = math.tanh %79 : vector<2x32xf32>
    %81 = arith.mulf %76, %80 : vector<2x32xf32>
    %c8 = arith.constant 8 : index
    %c0_24 = arith.constant 0 : index
    %82 = vector.load %arg21[%c8, %c0_24] : memref<16x128xf32, #tpu.memory_space<vmem>>, vector<2x128xf32>
    %cst_25 = arith.constant dense<0.000000e+00> : vector<2x128xf32>
    %83 = tpu.matmul %81, %7, %cst_25 {dimension_numbers = #tpu.dot_dimension_numbers<[1], [0], [0], [1], [0, 0, 1, 1], [], []>} : vector<2x32xf32>, vector<32x128xf32>, vector<2x128xf32> -> vector<2x128xf32>
    %84 = arith.addf %82, %83 : vector<2x128xf32>
    %85 = arith.negf %84 : vector<2x128xf32>
    %86 = math.exp %85 : vector<2x128xf32>
    %cst_26 = arith.constant 1.000000e+00 : f32
    %87 = vector.broadcast %cst_26 : f32 to vector<2x128xf32>
    %88 = arith.addf %87, %86 : vector<2x128xf32>
    %89 = arith.divf %87, %88 : vector<2x128xf32>
    %90 = math.tanh %84 : vector<2x128xf32>
    %91 = vector.extract_strided_slice %89 {offsets = [0, 0], sizes = [2, 32], strides = [1, 1]} : vector<2x128xf32> to vector<2x32xf32>
    %92 = vector.extract_strided_slice %89 {offsets = [0, 32], sizes = [2, 32], strides = [1, 1]} : vector<2x128xf32> to vector<2x32xf32>
    %93 = vector.extract_strided_slice %90 {offsets = [0, 64], sizes = [2, 32], strides = [1, 1]} : vector<2x128xf32> to vector<2x32xf32>
    %94 = vector.extract_strided_slice %89 {offsets = [0, 96], sizes = [2, 32], strides = [1, 1]} : vector<2x128xf32> to vector<2x32xf32>
    %95 = arith.mulf %92, %79 : vector<2x32xf32>
    %96 = arith.mulf %91, %93 : vector<2x32xf32>
    %97 = arith.addf %95, %96 : vector<2x32xf32>
    %98 = math.tanh %97 : vector<2x32xf32>
    %99 = arith.mulf %94, %98 : vector<2x32xf32>
    %c10 = arith.constant 10 : index
    %c0_27 = arith.constant 0 : index
    %100 = vector.load %arg21[%c10, %c0_27] : memref<16x128xf32, #tpu.memory_space<vmem>>, vector<2x128xf32>
    %cst_28 = arith.constant dense<0.000000e+00> : vector<2x128xf32>
    %101 = tpu.matmul %99, %7, %cst_28 {dimension_numbers = #tpu.dot_dimension_numbers<[1], [0], [0], [1], [0, 0, 1, 1], [], []>} : vector<2x32xf32>, vector<32x128xf32>, vector<2x128xf32> -> vector<2x128xf32>
    %102 = arith.addf %100, %101 : vector<2x128xf32>
    %103 = arith.negf %102 : vector<2x128xf32>
    %104 = math.exp %103 : vector<2x128xf32>
    %cst_29 = arith.constant 1.000000e+00 : f32
    %105 = vector.broadcast %cst_29 : f32 to vector<2x128xf32>
    %106 = arith.addf %105, %104 : vector<2x128xf32>
    %107 = arith.divf %105, %106 : vector<2x128xf32>
    %108 = math.tanh %102 : vector<2x128xf32>
    %109 = vector.extract_strided_slice %107 {offsets = [0, 0], sizes = [2, 32], strides = [1, 1]} : vector<2x128xf32> to vector<2x32xf32>
    %110 = vector.extract_strided_slice %107 {offsets = [0, 32], sizes = [2, 32], strides = [1, 1]} : vector<2x128xf32> to vector<2x32xf32>
    %111 = vector.extract_strided_slice %108 {offsets = [0, 64], sizes = [2, 32], strides = [1, 1]} : vector<2x128xf32> to vector<2x32xf32>
    %112 = vector.extract_strided_slice %107 {offsets = [0, 96], sizes = [2, 32], strides = [1, 1]} : vector<2x128xf32> to vector<2x32xf32>
    %113 = arith.mulf %110, %97 : vector<2x32xf32>
    %114 = arith.mulf %109, %111 : vector<2x32xf32>
    %115 = arith.addf %113, %114 : vector<2x32xf32>
    %116 = math.tanh %115 : vector<2x32xf32>
    %117 = arith.mulf %112, %116 : vector<2x32xf32>
    %c12 = arith.constant 12 : index
    %c0_30 = arith.constant 0 : index
    %118 = vector.load %arg21[%c12, %c0_30] : memref<16x128xf32, #tpu.memory_space<vmem>>, vector<2x128xf32>
    %cst_31 = arith.constant dense<0.000000e+00> : vector<2x128xf32>
    %119 = tpu.matmul %117, %7, %cst_31 {dimension_numbers = #tpu.dot_dimension_numbers<[1], [0], [0], [1], [0, 0, 1, 1], [], []>} : vector<2x32xf32>, vector<32x128xf32>, vector<2x128xf32> -> vector<2x128xf32>
    %120 = arith.addf %118, %119 : vector<2x128xf32>
    %121 = arith.negf %120 : vector<2x128xf32>
    %122 = math.exp %121 : vector<2x128xf32>
    %cst_32 = arith.constant 1.000000e+00 : f32
    %123 = vector.broadcast %cst_32 : f32 to vector<2x128xf32>
    %124 = arith.addf %123, %122 : vector<2x128xf32>
    %125 = arith.divf %123, %124 : vector<2x128xf32>
    %126 = math.tanh %120 : vector<2x128xf32>
    %127 = vector.extract_strided_slice %125 {offsets = [0, 0], sizes = [2, 32], strides = [1, 1]} : vector<2x128xf32> to vector<2x32xf32>
    %128 = vector.extract_strided_slice %125 {offsets = [0, 32], sizes = [2, 32], strides = [1, 1]} : vector<2x128xf32> to vector<2x32xf32>
    %129 = vector.extract_strided_slice %126 {offsets = [0, 64], sizes = [2, 32], strides = [1, 1]} : vector<2x128xf32> to vector<2x32xf32>
    %130 = vector.extract_strided_slice %125 {offsets = [0, 96], sizes = [2, 32], strides = [1, 1]} : vector<2x128xf32> to vector<2x32xf32>
    %131 = arith.mulf %128, %115 : vector<2x32xf32>
    %132 = arith.mulf %127, %129 : vector<2x32xf32>
    %133 = arith.addf %131, %132 : vector<2x32xf32>
    %134 = math.tanh %133 : vector<2x32xf32>
    %135 = arith.mulf %130, %134 : vector<2x32xf32>
    %c14 = arith.constant 14 : index
    %c0_33 = arith.constant 0 : index
    %136 = vector.load %arg21[%c14, %c0_33] : memref<16x128xf32, #tpu.memory_space<vmem>>, vector<2x128xf32>
    %cst_34 = arith.constant dense<0.000000e+00> : vector<2x128xf32>
    %137 = tpu.matmul %135, %7, %cst_34 {dimension_numbers = #tpu.dot_dimension_numbers<[1], [0], [0], [1], [0, 0, 1, 1], [], []>} : vector<2x32xf32>, vector<32x128xf32>, vector<2x128xf32> -> vector<2x128xf32>
    %138 = arith.addf %136, %137 : vector<2x128xf32>
    %139 = arith.negf %138 : vector<2x128xf32>
    %140 = math.exp %139 : vector<2x128xf32>
    %cst_35 = arith.constant 1.000000e+00 : f32
    %141 = vector.broadcast %cst_35 : f32 to vector<2x128xf32>
    %142 = arith.addf %141, %140 : vector<2x128xf32>
    %143 = arith.divf %141, %142 : vector<2x128xf32>
    %144 = math.tanh %138 : vector<2x128xf32>
    %145 = vector.extract_strided_slice %143 {offsets = [0, 0], sizes = [2, 32], strides = [1, 1]} : vector<2x128xf32> to vector<2x32xf32>
    %146 = vector.extract_strided_slice %143 {offsets = [0, 32], sizes = [2, 32], strides = [1, 1]} : vector<2x128xf32> to vector<2x32xf32>
    %147 = vector.extract_strided_slice %144 {offsets = [0, 64], sizes = [2, 32], strides = [1, 1]} : vector<2x128xf32> to vector<2x32xf32>
    %148 = vector.extract_strided_slice %143 {offsets = [0, 96], sizes = [2, 32], strides = [1, 1]} : vector<2x128xf32> to vector<2x32xf32>
    %149 = arith.mulf %146, %133 : vector<2x32xf32>
    %150 = arith.mulf %145, %147 : vector<2x32xf32>
    %151 = arith.addf %149, %150 : vector<2x32xf32>
    %152 = math.tanh %151 : vector<2x32xf32>
    %153 = arith.mulf %148, %152 : vector<2x32xf32>
    %154 = tpu.concatenate %27, %45, %63, %81, %99, %117, %135, %153 in 0 : vector<2x32xf32>, vector<2x32xf32>, vector<2x32xf32>, vector<2x32xf32>, vector<2x32xf32>, vector<2x32xf32>, vector<2x32xf32>, vector<2x32xf32> -> vector<16x32xf32>
    %c0_36 = arith.constant 0 : index
    %c0_37 = arith.constant 0 : index
    %155 = vector.load %arg6[%c0_36, %c0_37] : memref<32x128xf32, #tpu.memory_space<vmem>>, vector<32x128xf32>
    %cst_38 = arith.constant dense<0.000000e+00> : vector<16x128xf32>
    %156 = tpu.matmul %154, %155, %cst_38 {dimension_numbers = #tpu.dot_dimension_numbers<[1], [0], [0], [1], [0, 0, 1, 1], [], []>} : vector<16x32xf32>, vector<32x128xf32>, vector<16x128xf32> -> vector<16x128xf32>
    %c0_39 = arith.constant 0 : index
    %c0_40 = arith.constant 0 : index
    %157 = vector.load %arg8[%c0_39, %c0_40] : memref<1x128xf32, #tpu.memory_space<vmem>>, vector<1x128xf32>
    %158 = vector.broadcast %157 : vector<1x128xf32> to vector<16x128xf32>
    %159 = arith.addf %156, %158 : vector<16x128xf32>
    %c0_41 = arith.constant 0 : index
    %c0_42 = arith.constant 0 : index
    %160 = vector.load %arg21[%c0_41, %c0_42] : memref<16x128xf32, #tpu.memory_space<vmem>>, vector<16x128xf32>
    tpu.vector_store %arg21[%c0_41, %c0_42], %159 {strides = array<i32>} : memref<16x128xf32, #tpu.memory_space<vmem>>, vector<16x128xf32>,
    %c0_43 = arith.constant 0 : index
    %c0_44 = arith.constant 0 : index
    %161 = vector.load %arg7[%c0_43, %c0_44] : memref<32x128xf32, #tpu.memory_space<vmem>>, vector<32x128xf32>
    %cst_45 = arith.constant 0.000000e+00 : f32
    %162 = vector.broadcast %cst_45 : f32 to vector<2x32xf32>
    %cst_46 = arith.constant 0.000000e+00 : f32
    %163 = vector.broadcast %cst_46 : f32 to vector<2x32xf32>
    %c0_47 = arith.constant 0 : index
    %c0_48 = arith.constant 0 : index
    %164 = vector.load %arg21[%c0_47, %c0_48] : memref<16x128xf32, #tpu.memory_space<vmem>>, vector<2x128xf32>
    %cst_49 = arith.constant dense<0.000000e+00> : vector<2x128xf32>
    %165 = tpu.matmul %162, %161, %cst_49 {dimension_numbers = #tpu.dot_dimension_numbers<[1], [0], [0], [1], [0, 0, 1, 1], [], []>} : vector<2x32xf32>, vector<32x128xf32>, vector<2x128xf32> -> vector<2x128xf32>
    %166 = arith.addf %164, %165 : vector<2x128xf32>
    %167 = arith.negf %166 : vector<2x128xf32>
    %168 = math.exp %167 : vector<2x128xf32>
    %cst_50 = arith.constant 1.000000e+00 : f32
    %169 = vector.broadcast %cst_50 : f32 to vector<2x128xf32>
    %170 = arith.addf %169, %168 : vector<2x128xf32>
    %171 = arith.divf %169, %170 : vector<2x128xf32>
    %172 = math.tanh %166 : vector<2x128xf32>
    %173 = vector.extract_strided_slice %171 {offsets = [0, 0], sizes = [2, 32], strides = [1, 1]} : vector<2x128xf32> to vector<2x32xf32>
    %174 = vector.extract_strided_slice %171 {offsets = [0, 32], sizes = [2, 32], strides = [1, 1]} : vector<2x128xf32> to vector<2x32xf32>
    %175 = vector.extract_strided_slice %172 {offsets = [0, 64], sizes = [2, 32], strides = [1, 1]} : vector<2x128xf32> to vector<2x32xf32>
    %176 = vector.extract_strided_slice %171 {offsets = [0, 96], sizes = [2, 32], strides = [1, 1]} : vector<2x128xf32> to vector<2x32xf32>
    %177 = arith.mulf %174, %163 : vector<2x32xf32>
    %178 = arith.mulf %173, %175 : vector<2x32xf32>
    %179 = arith.addf %177, %178 : vector<2x32xf32>
    %180 = math.tanh %179 : vector<2x32xf32>
    %181 = arith.mulf %176, %180 : vector<2x32xf32>
    %c2_51 = arith.constant 2 : index
    %c0_52 = arith.constant 0 : index
    %182 = vector.load %arg21[%c2_51, %c0_52] : memref<16x128xf32, #tpu.memory_space<vmem>>, vector<2x128xf32>
    %cst_53 = arith.constant dense<0.000000e+00> : vector<2x128xf32>
    %183 = tpu.matmul %181, %161, %cst_53 {dimension_numbers = #tpu.dot_dimension_numbers<[1], [0], [0], [1], [0, 0, 1, 1], [], []>} : vector<2x32xf32>, vector<32x128xf32>, vector<2x128xf32> -> vector<2x128xf32>
    %184 = arith.addf %182, %183 : vector<2x128xf32>
    %185 = arith.negf %184 : vector<2x128xf32>
    %186 = math.exp %185 : vector<2x128xf32>
    %cst_54 = arith.constant 1.000000e+00 : f32
    %187 = vector.broadcast %cst_54 : f32 to vector<2x128xf32>
    %188 = arith.addf %187, %186 : vector<2x128xf32>
    %189 = arith.divf %187, %188 : vector<2x128xf32>
    %190 = math.tanh %184 : vector<2x128xf32>
    %191 = vector.extract_strided_slice %189 {offsets = [0, 0], sizes = [2, 32], strides = [1, 1]} : vector<2x128xf32> to vector<2x32xf32>
    %192 = vector.extract_strided_slice %189 {offsets = [0, 32], sizes = [2, 32], strides = [1, 1]} : vector<2x128xf32> to vector<2x32xf32>
    %193 = vector.extract_strided_slice %190 {offsets = [0, 64], sizes = [2, 32], strides = [1, 1]} : vector<2x128xf32> to vector<2x32xf32>
    %194 = vector.extract_strided_slice %189 {offsets = [0, 96], sizes = [2, 32], strides = [1, 1]} : vector<2x128xf32> to vector<2x32xf32>
    %195 = arith.mulf %192, %179 : vector<2x32xf32>
    %196 = arith.mulf %191, %193 : vector<2x32xf32>
    %197 = arith.addf %195, %196 : vector<2x32xf32>
    %198 = math.tanh %197 : vector<2x32xf32>
    %199 = arith.mulf %194, %198 : vector<2x32xf32>
    %c4_55 = arith.constant 4 : index
    %c0_56 = arith.constant 0 : index
    %200 = vector.load %arg21[%c4_55, %c0_56] : memref<16x128xf32, #tpu.memory_space<vmem>>, vector<2x128xf32>
    %cst_57 = arith.constant dense<0.000000e+00> : vector<2x128xf32>
    %201 = tpu.matmul %199, %161, %cst_57 {dimension_numbers = #tpu.dot_dimension_numbers<[1], [0], [0], [1], [0, 0, 1, 1], [], []>} : vector<2x32xf32>, vector<32x128xf32>, vector<2x128xf32> -> vector<2x128xf32>
    %202 = arith.addf %200, %201 : vector<2x128xf32>
    %203 = arith.negf %202 : vector<2x128xf32>
    %204 = math.exp %203 : vector<2x128xf32>
    %cst_58 = arith.constant 1.000000e+00 : f32
    %205 = vector.broadcast %cst_58 : f32 to vector<2x128xf32>
    %206 = arith.addf %205, %204 : vector<2x128xf32>
    %207 = arith.divf %205, %206 : vector<2x128xf32>
    %208 = math.tanh %202 : vector<2x128xf32>
    %209 = vector.extract_strided_slice %207 {offsets = [0, 0], sizes = [2, 32], strides = [1, 1]} : vector<2x128xf32> to vector<2x32xf32>
    %210 = vector.extract_strided_slice %207 {offsets = [0, 32], sizes = [2, 32], strides = [1, 1]} : vector<2x128xf32> to vector<2x32xf32>
    %211 = vector.extract_strided_slice %208 {offsets = [0, 64], sizes = [2, 32], strides = [1, 1]} : vector<2x128xf32> to vector<2x32xf32>
    %212 = vector.extract_strided_slice %207 {offsets = [0, 96], sizes = [2, 32], strides = [1, 1]} : vector<2x128xf32> to vector<2x32xf32>
    %213 = arith.mulf %210, %197 : vector<2x32xf32>
    %214 = arith.mulf %209, %211 : vector<2x32xf32>
    %215 = arith.addf %213, %214 : vector<2x32xf32>
    %216 = math.tanh %215 : vector<2x32xf32>
    %217 = arith.mulf %212, %216 : vector<2x32xf32>
    %c6_59 = arith.constant 6 : index
    %c0_60 = arith.constant 0 : index
    %218 = vector.load %arg21[%c6_59, %c0_60] : memref<16x128xf32, #tpu.memory_space<vmem>>, vector<2x128xf32>
    %cst_61 = arith.constant dense<0.000000e+00> : vector<2x128xf32>
    %219 = tpu.matmul %217, %161, %cst_61 {dimension_numbers = #tpu.dot_dimension_numbers<[1], [0], [0], [1], [0, 0, 1, 1], [], []>} : vector<2x32xf32>, vector<32x128xf32>, vector<2x128xf32> -> vector<2x128xf32>
    %220 = arith.addf %218, %219 : vector<2x128xf32>
    %221 = arith.negf %220 : vector<2x128xf32>
    %222 = math.exp %221 : vector<2x128xf32>
    %cst_62 = arith.constant 1.000000e+00 : f32
    %223 = vector.broadcast %cst_62 : f32 to vector<2x128xf32>
    %224 = arith.addf %223, %222 : vector<2x128xf32>
    %225 = arith.divf %223, %224 : vector<2x128xf32>
    %226 = math.tanh %220 : vector<2x128xf32>
    %227 = vector.extract_strided_slice %225 {offsets = [0, 0], sizes = [2, 32], strides = [1, 1]} : vector<2x128xf32> to vector<2x32xf32>
    %228 = vector.extract_strided_slice %225 {offsets = [0, 32], sizes = [2, 32], strides = [1, 1]} : vector<2x128xf32> to vector<2x32xf32>
    %229 = vector.extract_strided_slice %226 {offsets = [0, 64], sizes = [2, 32], strides = [1, 1]} : vector<2x128xf32> to vector<2x32xf32>
    %230 = vector.extract_strided_slice %225 {offsets = [0, 96], sizes = [2, 32], strides = [1, 1]} : vector<2x128xf32> to vector<2x32xf32>
    %231 = arith.mulf %228, %215 : vector<2x32xf32>
    %232 = arith.mulf %227, %229 : vector<2x32xf32>
    %233 = arith.addf %231, %232 : vector<2x32xf32>
    %234 = math.tanh %233 : vector<2x32xf32>
    %235 = arith.mulf %230, %234 : vector<2x32xf32>
    %c8_63 = arith.constant 8 : index
    %c0_64 = arith.constant 0 : index
    %236 = vector.load %arg21[%c8_63, %c0_64] : memref<16x128xf32, #tpu.memory_space<vmem>>, vector<2x128xf32>
    %cst_65 = arith.constant dense<0.000000e+00> : vector<2x128xf32>
    %237 = tpu.matmul %235, %161, %cst_65 {dimension_numbers = #tpu.dot_dimension_numbers<[1], [0], [0], [1], [0, 0, 1, 1], [], []>} : vector<2x32xf32>, vector<32x128xf32>, vector<2x128xf32> -> vector<2x128xf32>
    %238 = arith.addf %236, %237 : vector<2x128xf32>
    %239 = arith.negf %238 : vector<2x128xf32>
    %240 = math.exp %239 : vector<2x128xf32>
    %cst_66 = arith.constant 1.000000e+00 : f32
    %241 = vector.broadcast %cst_66 : f32 to vector<2x128xf32>
    %242 = arith.addf %241, %240 : vector<2x128xf32>
    %243 = arith.divf %241, %242 : vector<2x128xf32>
    %244 = math.tanh %238 : vector<2x128xf32>
    %245 = vector.extract_strided_slice %243 {offsets = [0, 0], sizes = [2, 32], strides = [1, 1]} : vector<2x128xf32> to vector<2x32xf32>
    %246 = vector.extract_strided_slice %243 {offsets = [0, 32], sizes = [2, 32], strides = [1, 1]} : vector<2x128xf32> to vector<2x32xf32>
    %247 = vector.extract_strided_slice %244 {offsets = [0, 64], sizes = [2, 32], strides = [1, 1]} : vector<2x128xf32> to vector<2x32xf32>
    %248 = vector.extract_strided_slice %243 {offsets = [0, 96], sizes = [2, 32], strides = [1, 1]} : vector<2x128xf32> to vector<2x32xf32>
    %249 = arith.mulf %246, %233 : vector<2x32xf32>
    %250 = arith.mulf %245, %247 : vector<2x32xf32>
    %251 = arith.addf %249, %250 : vector<2x32xf32>
    %252 = math.tanh %251 : vector<2x32xf32>
    %253 = arith.mulf %248, %252 : vector<2x32xf32>
    %c10_67 = arith.constant 10 : index
    %c0_68 = arith.constant 0 : index
    %254 = vector.load %arg21[%c10_67, %c0_68] : memref<16x128xf32, #tpu.memory_space<vmem>>, vector<2x128xf32>
    %cst_69 = arith.constant dense<0.000000e+00> : vector<2x128xf32>
    %255 = tpu.matmul %253, %161, %cst_69 {dimension_numbers = #tpu.dot_dimension_numbers<[1], [0], [0], [1], [0, 0, 1, 1], [], []>} : vector<2x32xf32>, vector<32x128xf32>, vector<2x128xf32> -> vector<2x128xf32>
    %256 = arith.addf %254, %255 : vector<2x128xf32>
    %257 = arith.negf %256 : vector<2x128xf32>
    %258 = math.exp %257 : vector<2x128xf32>
    %cst_70 = arith.constant 1.000000e+00 : f32
    %259 = vector.broadcast %cst_70 : f32 to vector<2x128xf32>
    %260 = arith.addf %259, %258 : vector<2x128xf32>
    %261 = arith.divf %259, %260 : vector<2x128xf32>
    %262 = math.tanh %256 : vector<2x128xf32>
    %263 = vector.extract_strided_slice %261 {offsets = [0, 0], sizes = [2, 32], strides = [1, 1]} : vector<2x128xf32> to vector<2x32xf32>
    %264 = vector.extract_strided_slice %261 {offsets = [0, 32], sizes = [2, 32], strides = [1, 1]} : vector<2x128xf32> to vector<2x32xf32>
    %265 = vector.extract_strided_slice %262 {offsets = [0, 64], sizes = [2, 32], strides = [1, 1]} : vector<2x128xf32> to vector<2x32xf32>
    %266 = vector.extract_strided_slice %261 {offsets = [0, 96], sizes = [2, 32], strides = [1, 1]} : vector<2x128xf32> to vector<2x32xf32>
    %267 = arith.mulf %264, %251 : vector<2x32xf32>
    %268 = arith.mulf %263, %265 : vector<2x32xf32>
    %269 = arith.addf %267, %268 : vector<2x32xf32>
    %270 = math.tanh %269 : vector<2x32xf32>
    %271 = arith.mulf %266, %270 : vector<2x32xf32>
    %c12_71 = arith.constant 12 : index
    %c0_72 = arith.constant 0 : index
    %272 = vector.load %arg21[%c12_71, %c0_72] : memref<16x128xf32, #tpu.memory_space<vmem>>, vector<2x128xf32>
    %cst_73 = arith.constant dense<0.000000e+00> : vector<2x128xf32>
    %273 = tpu.matmul %271, %161, %cst_73 {dimension_numbers = #tpu.dot_dimension_numbers<[1], [0], [0], [1], [0, 0, 1, 1], [], []>} : vector<2x32xf32>, vector<32x128xf32>, vector<2x128xf32> -> vector<2x128xf32>
    %274 = arith.addf %272, %273 : vector<2x128xf32>
    %275 = arith.negf %274 : vector<2x128xf32>
    %276 = math.exp %275 : vector<2x128xf32>
    %cst_74 = arith.constant 1.000000e+00 : f32
    %277 = vector.broadcast %cst_74 : f32 to vector<2x128xf32>
    %278 = arith.addf %277, %276 : vector<2x128xf32>
    %279 = arith.divf %277, %278 : vector<2x128xf32>
    %280 = math.tanh %274 : vector<2x128xf32>
    %281 = vector.extract_strided_slice %279 {offsets = [0, 0], sizes = [2, 32], strides = [1, 1]} : vector<2x128xf32> to vector<2x32xf32>
    %282 = vector.extract_strided_slice %279 {offsets = [0, 32], sizes = [2, 32], strides = [1, 1]} : vector<2x128xf32> to vector<2x32xf32>
    %283 = vector.extract_strided_slice %280 {offsets = [0, 64], sizes = [2, 32], strides = [1, 1]} : vector<2x128xf32> to vector<2x32xf32>
    %284 = vector.extract_strided_slice %279 {offsets = [0, 96], sizes = [2, 32], strides = [1, 1]} : vector<2x128xf32> to vector<2x32xf32>
    %285 = arith.mulf %282, %269 : vector<2x32xf32>
    %286 = arith.mulf %281, %283 : vector<2x32xf32>
    %287 = arith.addf %285, %286 : vector<2x32xf32>
    %288 = math.tanh %287 : vector<2x32xf32>
    %289 = arith.mulf %284, %288 : vector<2x32xf32>
    %c14_75 = arith.constant 14 : index
    %c0_76 = arith.constant 0 : index
    %290 = vector.load %arg21[%c14_75, %c0_76] : memref<16x128xf32, #tpu.memory_space<vmem>>, vector<2x128xf32>
    %cst_77 = arith.constant dense<0.000000e+00> : vector<2x128xf32>
    %291 = tpu.matmul %289, %161, %cst_77 {dimension_numbers = #tpu.dot_dimension_numbers<[1], [0], [0], [1], [0, 0, 1, 1], [], []>} : vector<2x32xf32>, vector<32x128xf32>, vector<2x128xf32> -> vector<2x128xf32>
    %292 = arith.addf %290, %291 : vector<2x128xf32>
    %293 = arith.negf %292 : vector<2x128xf32>
    %294 = math.exp %293 : vector<2x128xf32>
    %cst_78 = arith.constant 1.000000e+00 : f32
    %295 = vector.broadcast %cst_78 : f32 to vector<2x128xf32>
    %296 = arith.addf %295, %294 : vector<2x128xf32>
    %297 = arith.divf %295, %296 : vector<2x128xf32>
    %298 = math.tanh %292 : vector<2x128xf32>
    %299 = vector.extract_strided_slice %297 {offsets = [0, 0], sizes = [2, 32], strides = [1, 1]} : vector<2x128xf32> to vector<2x32xf32>
    %300 = vector.extract_strided_slice %297 {offsets = [0, 32], sizes = [2, 32], strides = [1, 1]} : vector<2x128xf32> to vector<2x32xf32>
    %301 = vector.extract_strided_slice %298 {offsets = [0, 64], sizes = [2, 32], strides = [1, 1]} : vector<2x128xf32> to vector<2x32xf32>
    %302 = vector.extract_strided_slice %297 {offsets = [0, 96], sizes = [2, 32], strides = [1, 1]} : vector<2x128xf32> to vector<2x32xf32>
    %303 = arith.mulf %300, %287 : vector<2x32xf32>
    %304 = arith.mulf %299, %301 : vector<2x32xf32>
    %305 = arith.addf %303, %304 : vector<2x32xf32>
    %306 = math.tanh %305 : vector<2x32xf32>
    %307 = arith.mulf %302, %306 : vector<2x32xf32>
    %c0_79 = arith.constant 0 : index
    %c0_80 = arith.constant 0 : index
    %308 = vector.load %arg9[%c0_79, %c0_80] : memref<32x64xf32, #tpu.memory_space<vmem>>, vector<32x64xf32>
    %cst_81 = arith.constant dense<0.000000e+00> : vector<2x64xf32>
    %309 = tpu.matmul %307, %308, %cst_81 {dimension_numbers = #tpu.dot_dimension_numbers<[1], [0], [0], [1], [0, 0, 1, 1], [], []>} : vector<2x32xf32>, vector<32x64xf32>, vector<2x64xf32> -> vector<2x64xf32>
    %c0_82 = arith.constant 0 : index
    %c0_83 = arith.constant 0 : index
    %310 = vector.load %arg10[%c0_82, %c0_83] : memref<1x64xf32, #tpu.memory_space<vmem>>, vector<1x64xf32>
    %311 = vector.broadcast %310 : vector<1x64xf32> to vector<2x64xf32>
    %312 = arith.addf %309, %311 : vector<2x64xf32>
    %313 = vector.extract_strided_slice %312 {offsets = [0, 0], sizes = [2, 32], strides = [1, 1]} : vector<2x64xf32> to vector<2x32xf32>
    %314 = vector.extract_strided_slice %312 {offsets = [0, 32], sizes = [2, 32], strides = [1, 1]} : vector<2x64xf32> to vector<2x32xf32>
    %cst_84 = arith.constant 5.000000e-01 : f32
    %315 = vector.broadcast %cst_84 : f32 to vector<2x32xf32>
    %316 = arith.mulf %315, %314 : vector<2x32xf32>
    %317 = math.exp %316 : vector<2x32xf32>
    %c0_85 = arith.constant 0 : index
    %c0_86 = arith.constant 0 : index
    %318 = vector.load %arg2[%c0_85, %c0_86] : memref<2x32xf32, #tpu.memory_space<vmem>>, vector<2x32xf32>
    %319 = arith.mulf %318, %317 : vector<2x32xf32>
    %320 = arith.addf %319, %313 : vector<2x32xf32>
    %cst_87 = arith.constant 1.000000e+00 : f32
    %321 = vector.broadcast %cst_87 : f32 to vector<2x32xf32>
    %322 = arith.addf %321, %314 : vector<2x32xf32>
    %323 = arith.mulf %313, %313 : vector<2x32xf32>
    %324 = arith.subf %322, %323 : vector<2x32xf32>
    %325 = math.exp %314 : vector<2x32xf32>
    %326 = arith.subf %324, %325 : vector<2x32xf32>
    %cst_88 = arith.constant dense<0.000000e+00> : vector<2xf32>
    %327 = vector.multi_reduction <add>, %326, %cst_88 [1] : vector<2x32xf32> to vector<2xf32>
    %328 = vector.shape_cast %327 : vector<2xf32> to vector<2x1xf32>
    %cst_89 = arith.constant 0.000000e+00 : f32
    %329 = vector.broadcast %cst_89 : f32 to vector<2x1xf32>
    %330 = arith.subf %329, %328 : vector<2x1xf32>
    %331 = tpu.concatenate %320, %313, %314, %330 in 1 : vector<2x32xf32>, vector<2x32xf32>, vector<2x32xf32>, vector<2x1xf32> -> vector<2x97xf32>
    %c0_90 = arith.constant 0 : index
    %c0_91 = arith.constant 0 : index
    %332 = vector.load %arg19[%c0_90, %c0_91] : memref<2x97xf32, #tpu.memory_space<vmem>>, vector<2x97xf32>
    tpu.vector_store %arg19[%c0_90, %c0_91], %331 {strides = array<i32>} : memref<2x97xf32, #tpu.memory_space<vmem>>, vector<2x97xf32>,
    %c0_92 = arith.constant 0 : index
    %c0_93 = arith.constant 0 : index
    %333 = vector.load %arg11[%c0_92, %c0_93] : memref<32x32xf32, #tpu.memory_space<vmem>>, vector<32x32xf32>
    %cst_94 = arith.constant dense<0.000000e+00> : vector<2x32xf32>
    %334 = tpu.matmul %320, %333, %cst_94 {dimension_numbers = #tpu.dot_dimension_numbers<[1], [0], [0], [1], [0, 0, 1, 1], [], []>} : vector<2x32xf32>, vector<32x32xf32>, vector<2x32xf32> -> vector<2x32xf32>
    %c0_95 = arith.constant 0 : index
    %c0_96 = arith.constant 0 : index
    %335 = vector.load %arg12[%c0_95, %c0_96] : memref<1x32xf32, #tpu.memory_space<vmem>>, vector<1x32xf32>
    %336 = vector.broadcast %335 : vector<1x32xf32> to vector<2x32xf32>
    %337 = arith.addf %334, %336 : vector<2x32xf32>
    %cst_97 = arith.constant 0.000000e+00 : f32
    %338 = vector.broadcast %cst_97 : f32 to vector<2x32xf32>
    %339 = arith.cmpf oge, %337, %338 : vector<2x32xf32>
    %cst_98 = arith.constant 2.000000e-01 : f32
    %340 = vector.broadcast %cst_98 : f32 to vector<2x32xf32>
    %341 = arith.mulf %340, %337 : vector<2x32xf32>
    %342 = arith.select %339, %337, %341 : vector<2x32xi1>, vector<2x32xf32>
    %c0_99 = arith.constant 0 : index
    %c0_100 = arith.constant 0 : index
    %343 = vector.load %arg13[%c0_99, %c0_100] : memref<32x128xf32, #tpu.memory_space<vmem>>, vector<32x128xf32>
    %cst_101 = arith.constant dense<0.000000e+00> : vector<2x128xf32>
    %344 = tpu.matmul %342, %343, %cst_101 {dimension_numbers = #tpu.dot_dimension_numbers<[1], [0], [0], [1], [0, 0, 1, 1], [], []>} : vector<2x32xf32>, vector<32x128xf32>, vector<2x128xf32> -> vector<2x128xf32>
    %c0_102 = arith.constant 0 : index
    %c0_103 = arith.constant 0 : index
    %345 = vector.load %arg15[%c0_102, %c0_103] : memref<1x128xf32, #tpu.memory_space<vmem>>, vector<1x128xf32>
    %346 = vector.broadcast %345 : vector<1x128xf32> to vector<2x128xf32>
    %347 = arith.addf %344, %346 : vector<2x128xf32>
    %c0_104 = arith.constant 0 : index
    %c0_105 = arith.constant 0 : index
    %348 = vector.load %arg14[%c0_104, %c0_105] : memref<32x128xf32, #tpu.memory_space<vmem>>, vector<32x128xf32>
    %cst_106 = arith.constant 0.000000e+00 : f32
    %349 = vector.broadcast %cst_106 : f32 to vector<2x32xf32>
    %cst_107 = arith.constant 0.000000e+00 : f32
    %350 = vector.broadcast %cst_107 : f32 to vector<2x32xf32>
    %cst_108 = arith.constant dense<0.000000e+00> : vector<2x128xf32>
    %351 = tpu.matmul %349, %348, %cst_108 {dimension_numbers = #tpu.dot_dimension_numbers<[1], [0], [0], [1], [0, 0, 1, 1], [], []>} : vector<2x32xf32>, vector<32x128xf32>, vector<2x128xf32> -> vector<2x128xf32>
    %352 = arith.addf %347, %351 : vector<2x128xf32>
    %353 = arith.negf %352 : vector<2x128xf32>
    %354 = math.exp %353 : vector<2x128xf32>
    %cst_109 = arith.constant 1.000000e+00 : f32
    %355 = vector.broadcast %cst_109 : f32 to vector<2x128xf32>
    %356 = arith.addf %355, %354 : vector<2x128xf32>
    %357 = arith.divf %355, %356 : vector<2x128xf32>
    %358 = math.tanh %352 : vector<2x128xf32>
    %359 = vector.extract_strided_slice %357 {offsets = [0, 0], sizes = [2, 32], strides = [1, 1]} : vector<2x128xf32> to vector<2x32xf32>
    %360 = vector.extract_strided_slice %357 {offsets = [0, 32], sizes = [2, 32], strides = [1, 1]} : vector<2x128xf32> to vector<2x32xf32>
    %361 = vector.extract_strided_slice %358 {offsets = [0, 64], sizes = [2, 32], strides = [1, 1]} : vector<2x128xf32> to vector<2x32xf32>
    %362 = vector.extract_strided_slice %357 {offsets = [0, 96], sizes = [2, 32], strides = [1, 1]} : vector<2x128xf32> to vector<2x32xf32>
    %363 = arith.mulf %360, %350 : vector<2x32xf32>
    %364 = arith.mulf %359, %361 : vector<2x32xf32>
    %365 = arith.addf %363, %364 : vector<2x32xf32>
    %366 = math.tanh %365 : vector<2x32xf32>
    %367 = arith.mulf %362, %366 : vector<2x32xf32>
    %cst_110 = arith.constant dense<0.000000e+00> : vector<2x128xf32>
    %368 = tpu.matmul %367, %348, %cst_110 {dimension_numbers = #tpu.dot_dimension_numbers<[1], [0], [0], [1], [0, 0, 1, 1], [], []>} : vector<2x32xf32>, vector<32x128xf32>, vector<2x128xf32> -> vector<2x128xf32>
    %369 = arith.addf %347, %368 : vector<2x128xf32>
    %370 = arith.negf %369 : vector<2x128xf32>
    %371 = math.exp %370 : vector<2x128xf32>
    %cst_111 = arith.constant 1.000000e+00 : f32
    %372 = vector.broadcast %cst_111 : f32 to vector<2x128xf32>
    %373 = arith.addf %372, %371 : vector<2x128xf32>
    %374 = arith.divf %372, %373 : vector<2x128xf32>
    %375 = math.tanh %369 : vector<2x128xf32>
    %376 = vector.extract_strided_slice %374 {offsets = [0, 0], sizes = [2, 32], strides = [1, 1]} : vector<2x128xf32> to vector<2x32xf32>
    %377 = vector.extract_strided_slice %374 {offsets = [0, 32], sizes = [2, 32], strides = [1, 1]} : vector<2x128xf32> to vector<2x32xf32>
    %378 = vector.extract_strided_slice %375 {offsets = [0, 64], sizes = [2, 32], strides = [1, 1]} : vector<2x128xf32> to vector<2x32xf32>
    %379 = vector.extract_strided_slice %374 {offsets = [0, 96], sizes = [2, 32], strides = [1, 1]} : vector<2x128xf32> to vector<2x32xf32>
    %380 = arith.mulf %377, %365 : vector<2x32xf32>
    %381 = arith.mulf %376, %378 : vector<2x32xf32>
    %382 = arith.addf %380, %381 : vector<2x32xf32>
    %383 = math.tanh %382 : vector<2x32xf32>
    %384 = arith.mulf %379, %383 : vector<2x32xf32>
    %cst_112 = arith.constant dense<0.000000e+00> : vector<2x128xf32>
    %385 = tpu.matmul %384, %348, %cst_112 {dimension_numbers = #tpu.dot_dimension_numbers<[1], [0], [0], [1], [0, 0, 1, 1], [], []>} : vector<2x32xf32>, vector<32x128xf32>, vector<2x128xf32> -> vector<2x128xf32>
    %386 = arith.addf %347, %385 : vector<2x128xf32>
    %387 = arith.negf %386 : vector<2x128xf32>
    %388 = math.exp %387 : vector<2x128xf32>
    %cst_113 = arith.constant 1.000000e+00 : f32
    %389 = vector.broadcast %cst_113 : f32 to vector<2x128xf32>
    %390 = arith.addf %389, %388 : vector<2x128xf32>
    %391 = arith.divf %389, %390 : vector<2x128xf32>
    %392 = math.tanh %386 : vector<2x128xf32>
    %393 = vector.extract_strided_slice %391 {offsets = [0, 0], sizes = [2, 32], strides = [1, 1]} : vector<2x128xf32> to vector<2x32xf32>
    %394 = vector.extract_strided_slice %391 {offsets = [0, 32], sizes = [2, 32], strides = [1, 1]} : vector<2x128xf32> to vector<2x32xf32>
    %395 = vector.extract_strided_slice %392 {offsets = [0, 64], sizes = [2, 32], strides = [1, 1]} : vector<2x128xf32> to vector<2x32xf32>
    %396 = vector.extract_strided_slice %391 {offsets = [0, 96], sizes = [2, 32], strides = [1, 1]} : vector<2x128xf32> to vector<2x32xf32>
    %397 = arith.mulf %394, %382 : vector<2x32xf32>
    %398 = arith.mulf %393, %395 : vector<2x32xf32>
    %399 = arith.addf %397, %398 : vector<2x32xf32>
    %400 = math.tanh %399 : vector<2x32xf32>
    %401 = arith.mulf %396, %400 : vector<2x32xf32>
    %cst_114 = arith.constant dense<0.000000e+00> : vector<2x128xf32>
    %402 = tpu.matmul %401, %348, %cst_114 {dimension_numbers = #tpu.dot_dimension_numbers<[1], [0], [0], [1], [0, 0, 1, 1], [], []>} : vector<2x32xf32>, vector<32x128xf32>, vector<2x128xf32> -> vector<2x128xf32>
    %403 = arith.addf %347, %402 : vector<2x128xf32>
    %404 = arith.negf %403 : vector<2x128xf32>
    %405 = math.exp %404 : vector<2x128xf32>
    %cst_115 = arith.constant 1.000000e+00 : f32
    %406 = vector.broadcast %cst_115 : f32 to vector<2x128xf32>
    %407 = arith.addf %406, %405 : vector<2x128xf32>
    %408 = arith.divf %406, %407 : vector<2x128xf32>
    %409 = math.tanh %403 : vector<2x128xf32>
    %410 = vector.extract_strided_slice %408 {offsets = [0, 0], sizes = [2, 32], strides = [1, 1]} : vector<2x128xf32> to vector<2x32xf32>
    %411 = vector.extract_strided_slice %408 {offsets = [0, 32], sizes = [2, 32], strides = [1, 1]} : vector<2x128xf32> to vector<2x32xf32>
    %412 = vector.extract_strided_slice %409 {offsets = [0, 64], sizes = [2, 32], strides = [1, 1]} : vector<2x128xf32> to vector<2x32xf32>
    %413 = vector.extract_strided_slice %408 {offsets = [0, 96], sizes = [2, 32], strides = [1, 1]} : vector<2x128xf32> to vector<2x32xf32>
    %414 = arith.mulf %411, %399 : vector<2x32xf32>
    %415 = arith.mulf %410, %412 : vector<2x32xf32>
    %416 = arith.addf %414, %415 : vector<2x32xf32>
    %417 = math.tanh %416 : vector<2x32xf32>
    %418 = arith.mulf %413, %417 : vector<2x32xf32>
    %cst_116 = arith.constant dense<0.000000e+00> : vector<2x128xf32>
    %419 = tpu.matmul %418, %348, %cst_116 {dimension_numbers = #tpu.dot_dimension_numbers<[1], [0], [0], [1], [0, 0, 1, 1], [], []>} : vector<2x32xf32>, vector<32x128xf32>, vector<2x128xf32> -> vector<2x128xf32>
    %420 = arith.addf %347, %419 : vector<2x128xf32>
    %421 = arith.negf %420 : vector<2x128xf32>
    %422 = math.exp %421 : vector<2x128xf32>
    %cst_117 = arith.constant 1.000000e+00 : f32
    %423 = vector.broadcast %cst_117 : f32 to vector<2x128xf32>
    %424 = arith.addf %423, %422 : vector<2x128xf32>
    %425 = arith.divf %423, %424 : vector<2x128xf32>
    %426 = math.tanh %420 : vector<2x128xf32>
    %427 = vector.extract_strided_slice %425 {offsets = [0, 0], sizes = [2, 32], strides = [1, 1]} : vector<2x128xf32> to vector<2x32xf32>
    %428 = vector.extract_strided_slice %425 {offsets = [0, 32], sizes = [2, 32], strides = [1, 1]} : vector<2x128xf32> to vector<2x32xf32>
    %429 = vector.extract_strided_slice %426 {offsets = [0, 64], sizes = [2, 32], strides = [1, 1]} : vector<2x128xf32> to vector<2x32xf32>
    %430 = vector.extract_strided_slice %425 {offsets = [0, 96], sizes = [2, 32], strides = [1, 1]} : vector<2x128xf32> to vector<2x32xf32>
    %431 = arith.mulf %428, %416 : vector<2x32xf32>
    %432 = arith.mulf %427, %429 : vector<2x32xf32>
    %433 = arith.addf %431, %432 : vector<2x32xf32>
    %434 = math.tanh %433 : vector<2x32xf32>
    %435 = arith.mulf %430, %434 : vector<2x32xf32>
    %cst_118 = arith.constant dense<0.000000e+00> : vector<2x128xf32>
    %436 = tpu.matmul %435, %348, %cst_118 {dimension_numbers = #tpu.dot_dimension_numbers<[1], [0], [0], [1], [0, 0, 1, 1], [], []>} : vector<2x32xf32>, vector<32x128xf32>, vector<2x128xf32> -> vector<2x128xf32>
    %437 = arith.addf %347, %436 : vector<2x128xf32>
    %438 = arith.negf %437 : vector<2x128xf32>
    %439 = math.exp %438 : vector<2x128xf32>
    %cst_119 = arith.constant 1.000000e+00 : f32
    %440 = vector.broadcast %cst_119 : f32 to vector<2x128xf32>
    %441 = arith.addf %440, %439 : vector<2x128xf32>
    %442 = arith.divf %440, %441 : vector<2x128xf32>
    %443 = math.tanh %437 : vector<2x128xf32>
    %444 = vector.extract_strided_slice %442 {offsets = [0, 0], sizes = [2, 32], strides = [1, 1]} : vector<2x128xf32> to vector<2x32xf32>
    %445 = vector.extract_strided_slice %442 {offsets = [0, 32], sizes = [2, 32], strides = [1, 1]} : vector<2x128xf32> to vector<2x32xf32>
    %446 = vector.extract_strided_slice %443 {offsets = [0, 64], sizes = [2, 32], strides = [1, 1]} : vector<2x128xf32> to vector<2x32xf32>
    %447 = vector.extract_strided_slice %442 {offsets = [0, 96], sizes = [2, 32], strides = [1, 1]} : vector<2x128xf32> to vector<2x32xf32>
    %448 = arith.mulf %445, %433 : vector<2x32xf32>
    %449 = arith.mulf %444, %446 : vector<2x32xf32>
    %450 = arith.addf %448, %449 : vector<2x32xf32>
    %451 = math.tanh %450 : vector<2x32xf32>
    %452 = arith.mulf %447, %451 : vector<2x32xf32>
    %cst_120 = arith.constant dense<0.000000e+00> : vector<2x128xf32>
    %453 = tpu.matmul %452, %348, %cst_120 {dimension_numbers = #tpu.dot_dimension_numbers<[1], [0], [0], [1], [0, 0, 1, 1], [], []>} : vector<2x32xf32>, vector<32x128xf32>, vector<2x128xf32> -> vector<2x128xf32>
    %454 = arith.addf %347, %453 : vector<2x128xf32>
    %455 = arith.negf %454 : vector<2x128xf32>
    %456 = math.exp %455 : vector<2x128xf32>
    %cst_121 = arith.constant 1.000000e+00 : f32
    %457 = vector.broadcast %cst_121 : f32 to vector<2x128xf32>
    %458 = arith.addf %457, %456 : vector<2x128xf32>
    %459 = arith.divf %457, %458 : vector<2x128xf32>
    %460 = math.tanh %454 : vector<2x128xf32>
    %461 = vector.extract_strided_slice %459 {offsets = [0, 0], sizes = [2, 32], strides = [1, 1]} : vector<2x128xf32> to vector<2x32xf32>
    %462 = vector.extract_strided_slice %459 {offsets = [0, 32], sizes = [2, 32], strides = [1, 1]} : vector<2x128xf32> to vector<2x32xf32>
    %463 = vector.extract_strided_slice %460 {offsets = [0, 64], sizes = [2, 32], strides = [1, 1]} : vector<2x128xf32> to vector<2x32xf32>
    %464 = vector.extract_strided_slice %459 {offsets = [0, 96], sizes = [2, 32], strides = [1, 1]} : vector<2x128xf32> to vector<2x32xf32>
    %465 = arith.mulf %462, %450 : vector<2x32xf32>
    %466 = arith.mulf %461, %463 : vector<2x32xf32>
    %467 = arith.addf %465, %466 : vector<2x32xf32>
    %468 = math.tanh %467 : vector<2x32xf32>
    %469 = arith.mulf %464, %468 : vector<2x32xf32>
    %cst_122 = arith.constant dense<0.000000e+00> : vector<2x128xf32>
    %470 = tpu.matmul %469, %348, %cst_122 {dimension_numbers = #tpu.dot_dimension_numbers<[1], [0], [0], [1], [0, 0, 1, 1], [], []>} : vector<2x32xf32>, vector<32x128xf32>, vector<2x128xf32> -> vector<2x128xf32>
    %471 = arith.addf %347, %470 : vector<2x128xf32>
    %472 = arith.negf %471 : vector<2x128xf32>
    %473 = math.exp %472 : vector<2x128xf32>
    %cst_123 = arith.constant 1.000000e+00 : f32
    %474 = vector.broadcast %cst_123 : f32 to vector<2x128xf32>
    %475 = arith.addf %474, %473 : vector<2x128xf32>
    %476 = arith.divf %474, %475 : vector<2x128xf32>
    %477 = math.tanh %471 : vector<2x128xf32>
    %478 = vector.extract_strided_slice %476 {offsets = [0, 0], sizes = [2, 32], strides = [1, 1]} : vector<2x128xf32> to vector<2x32xf32>
    %479 = vector.extract_strided_slice %476 {offsets = [0, 32], sizes = [2, 32], strides = [1, 1]} : vector<2x128xf32> to vector<2x32xf32>
    %480 = vector.extract_strided_slice %477 {offsets = [0, 64], sizes = [2, 32], strides = [1, 1]} : vector<2x128xf32> to vector<2x32xf32>
    %481 = vector.extract_strided_slice %476 {offsets = [0, 96], sizes = [2, 32], strides = [1, 1]} : vector<2x128xf32> to vector<2x32xf32>
    %482 = arith.mulf %479, %467 : vector<2x32xf32>
    %483 = arith.mulf %478, %480 : vector<2x32xf32>
    %484 = arith.addf %482, %483 : vector<2x32xf32>
    %485 = math.tanh %484 : vector<2x32xf32>
    %486 = arith.mulf %481, %485 : vector<2x32xf32>
    %487 = tpu.concatenate %367, %384, %401, %418, %435, %452, %469, %486 in 0 : vector<2x32xf32>, vector<2x32xf32>, vector<2x32xf32>, vector<2x32xf32>, vector<2x32xf32>, vector<2x32xf32>, vector<2x32xf32>, vector<2x32xf32> -> vector<16x32xf32>
    %c0_124 = arith.constant 0 : index
    %c0_125 = arith.constant 0 : index
    %488 = vector.load %arg16[%c0_124, %c0_125] : memref<32x256xf32, #tpu.memory_space<vmem>>, vector<32x256xf32>
    %cst_126 = arith.constant dense<0.000000e+00> : vector<16x256xf32>
    %489 = tpu.matmul %487, %488, %cst_126 {dimension_numbers = #tpu.dot_dimension_numbers<[1], [0], [0], [1], [0, 0, 1, 1], [], []>} : vector<16x32xf32>, vector<32x256xf32>, vector<16x256xf32> -> vector<16x256xf32>
    %c0_127 = arith.constant 0 : index
    %c0_128 = arith.constant 0 : index
    %490 = vector.load %arg18[%c0_127, %c0_128] : memref<1x256xf32, #tpu.memory_space<vmem>>, vector<1x256xf32>
    %491 = vector.broadcast %490 : vector<1x256xf32> to vector<16x256xf32>
    %492 = arith.addf %489, %491 : vector<16x256xf32>
    %c0_129 = arith.constant 0 : index
    %c0_130 = arith.constant 0 : index
    %493 = vector.load %arg22[%c0_129, %c0_130] : memref<16x256xf32, #tpu.memory_space<vmem>>, vector<16x256xf32>
    tpu.vector_store %arg22[%c0_129, %c0_130], %492 {strides = array<i32>} : memref<16x256xf32, #tpu.memory_space<vmem>>, vector<16x256xf32>,
    %c0_131 = arith.constant 0 : index
    %c0_132 = arith.constant 0 : index
    %494 = vector.load %arg17[%c0_131, %c0_132] : memref<64x256xf32, #tpu.memory_space<vmem>>, vector<64x256xf32>
    %cst_133 = arith.constant 0.000000e+00 : f32
    %495 = vector.broadcast %cst_133 : f32 to vector<2x64xf32>
    %cst_134 = arith.constant 0.000000e+00 : f32
    %496 = vector.broadcast %cst_134 : f32 to vector<2x64xf32>
    %c0_135 = arith.constant 0 : index
    %c0_136 = arith.constant 0 : index
    %497 = vector.load %arg22[%c0_135, %c0_136] : memref<16x256xf32, #tpu.memory_space<vmem>>, vector<2x256xf32>
    %cst_137 = arith.constant dense<0.000000e+00> : vector<2x256xf32>
    %498 = tpu.matmul %495, %494, %cst_137 {dimension_numbers = #tpu.dot_dimension_numbers<[1], [0], [0], [1], [0, 0, 1, 1], [], []>} : vector<2x64xf32>, vector<64x256xf32>, vector<2x256xf32> -> vector<2x256xf32>
    %499 = arith.addf %497, %498 : vector<2x256xf32>
    %500 = arith.negf %499 : vector<2x256xf32>
    %501 = math.exp %500 : vector<2x256xf32>
    %cst_138 = arith.constant 1.000000e+00 : f32
    %502 = vector.broadcast %cst_138 : f32 to vector<2x256xf32>
    %503 = arith.addf %502, %501 : vector<2x256xf32>
    %504 = arith.divf %502, %503 : vector<2x256xf32>
    %505 = math.tanh %499 : vector<2x256xf32>
    %506 = vector.extract_strided_slice %504 {offsets = [0, 0], sizes = [2, 64], strides = [1, 1]} : vector<2x256xf32> to vector<2x64xf32>
    %507 = vector.extract_strided_slice %504 {offsets = [0, 64], sizes = [2, 64], strides = [1, 1]} : vector<2x256xf32> to vector<2x64xf32>
    %508 = vector.extract_strided_slice %505 {offsets = [0, 128], sizes = [2, 64], strides = [1, 1]} : vector<2x256xf32> to vector<2x64xf32>
    %509 = vector.extract_strided_slice %504 {offsets = [0, 192], sizes = [2, 64], strides = [1, 1]} : vector<2x256xf32> to vector<2x64xf32>
    %510 = arith.mulf %507, %496 : vector<2x64xf32>
    %511 = arith.mulf %506, %508 : vector<2x64xf32>
    %512 = arith.addf %510, %511 : vector<2x64xf32>
    %513 = math.tanh %512 : vector<2x64xf32>
    %514 = arith.mulf %509, %513 : vector<2x64xf32>
    %c2_139 = arith.constant 2 : index
    %c0_140 = arith.constant 0 : index
    %515 = vector.load %arg22[%c2_139, %c0_140] : memref<16x256xf32, #tpu.memory_space<vmem>>, vector<2x256xf32>
    %cst_141 = arith.constant dense<0.000000e+00> : vector<2x256xf32>
    %516 = tpu.matmul %514, %494, %cst_141 {dimension_numbers = #tpu.dot_dimension_numbers<[1], [0], [0], [1], [0, 0, 1, 1], [], []>} : vector<2x64xf32>, vector<64x256xf32>, vector<2x256xf32> -> vector<2x256xf32>
    %517 = arith.addf %515, %516 : vector<2x256xf32>
    %518 = arith.negf %517 : vector<2x256xf32>
    %519 = math.exp %518 : vector<2x256xf32>
    %cst_142 = arith.constant 1.000000e+00 : f32
    %520 = vector.broadcast %cst_142 : f32 to vector<2x256xf32>
    %521 = arith.addf %520, %519 : vector<2x256xf32>
    %522 = arith.divf %520, %521 : vector<2x256xf32>
    %523 = math.tanh %517 : vector<2x256xf32>
    %524 = vector.extract_strided_slice %522 {offsets = [0, 0], sizes = [2, 64], strides = [1, 1]} : vector<2x256xf32> to vector<2x64xf32>
    %525 = vector.extract_strided_slice %522 {offsets = [0, 64], sizes = [2, 64], strides = [1, 1]} : vector<2x256xf32> to vector<2x64xf32>
    %526 = vector.extract_strided_slice %523 {offsets = [0, 128], sizes = [2, 64], strides = [1, 1]} : vector<2x256xf32> to vector<2x64xf32>
    %527 = vector.extract_strided_slice %522 {offsets = [0, 192], sizes = [2, 64], strides = [1, 1]} : vector<2x256xf32> to vector<2x64xf32>
    %528 = arith.mulf %525, %512 : vector<2x64xf32>
    %529 = arith.mulf %524, %526 : vector<2x64xf32>
    %530 = arith.addf %528, %529 : vector<2x64xf32>
    %531 = math.tanh %530 : vector<2x64xf32>
    %532 = arith.mulf %527, %531 : vector<2x64xf32>
    %c4_143 = arith.constant 4 : index
    %c0_144 = arith.constant 0 : index
    %533 = vector.load %arg22[%c4_143, %c0_144] : memref<16x256xf32, #tpu.memory_space<vmem>>, vector<2x256xf32>
    %cst_145 = arith.constant dense<0.000000e+00> : vector<2x256xf32>
    %534 = tpu.matmul %532, %494, %cst_145 {dimension_numbers = #tpu.dot_dimension_numbers<[1], [0], [0], [1], [0, 0, 1, 1], [], []>} : vector<2x64xf32>, vector<64x256xf32>, vector<2x256xf32> -> vector<2x256xf32>
    %535 = arith.addf %533, %534 : vector<2x256xf32>
    %536 = arith.negf %535 : vector<2x256xf32>
    %537 = math.exp %536 : vector<2x256xf32>
    %cst_146 = arith.constant 1.000000e+00 : f32
    %538 = vector.broadcast %cst_146 : f32 to vector<2x256xf32>
    %539 = arith.addf %538, %537 : vector<2x256xf32>
    %540 = arith.divf %538, %539 : vector<2x256xf32>
    %541 = math.tanh %535 : vector<2x256xf32>
    %542 = vector.extract_strided_slice %540 {offsets = [0, 0], sizes = [2, 64], strides = [1, 1]} : vector<2x256xf32> to vector<2x64xf32>
    %543 = vector.extract_strided_slice %540 {offsets = [0, 64], sizes = [2, 64], strides = [1, 1]} : vector<2x256xf32> to vector<2x64xf32>
    %544 = vector.extract_strided_slice %541 {offsets = [0, 128], sizes = [2, 64], strides = [1, 1]} : vector<2x256xf32> to vector<2x64xf32>
    %545 = vector.extract_strided_slice %540 {offsets = [0, 192], sizes = [2, 64], strides = [1, 1]} : vector<2x256xf32> to vector<2x64xf32>
    %546 = arith.mulf %543, %530 : vector<2x64xf32>
    %547 = arith.mulf %542, %544 : vector<2x64xf32>
    %548 = arith.addf %546, %547 : vector<2x64xf32>
    %549 = math.tanh %548 : vector<2x64xf32>
    %550 = arith.mulf %545, %549 : vector<2x64xf32>
    %c6_147 = arith.constant 6 : index
    %c0_148 = arith.constant 0 : index
    %551 = vector.load %arg22[%c6_147, %c0_148] : memref<16x256xf32, #tpu.memory_space<vmem>>, vector<2x256xf32>
    %cst_149 = arith.constant dense<0.000000e+00> : vector<2x256xf32>
    %552 = tpu.matmul %550, %494, %cst_149 {dimension_numbers = #tpu.dot_dimension_numbers<[1], [0], [0], [1], [0, 0, 1, 1], [], []>} : vector<2x64xf32>, vector<64x256xf32>, vector<2x256xf32> -> vector<2x256xf32>
    %553 = arith.addf %551, %552 : vector<2x256xf32>
    %554 = arith.negf %553 : vector<2x256xf32>
    %555 = math.exp %554 : vector<2x256xf32>
    %cst_150 = arith.constant 1.000000e+00 : f32
    %556 = vector.broadcast %cst_150 : f32 to vector<2x256xf32>
    %557 = arith.addf %556, %555 : vector<2x256xf32>
    %558 = arith.divf %556, %557 : vector<2x256xf32>
    %559 = math.tanh %553 : vector<2x256xf32>
    %560 = vector.extract_strided_slice %558 {offsets = [0, 0], sizes = [2, 64], strides = [1, 1]} : vector<2x256xf32> to vector<2x64xf32>
    %561 = vector.extract_strided_slice %558 {offsets = [0, 64], sizes = [2, 64], strides = [1, 1]} : vector<2x256xf32> to vector<2x64xf32>
    %562 = vector.extract_strided_slice %559 {offsets = [0, 128], sizes = [2, 64], strides = [1, 1]} : vector<2x256xf32> to vector<2x64xf32>
    %563 = vector.extract_strided_slice %558 {offsets = [0, 192], sizes = [2, 64], strides = [1, 1]} : vector<2x256xf32> to vector<2x64xf32>
    %564 = arith.mulf %561, %548 : vector<2x64xf32>
    %565 = arith.mulf %560, %562 : vector<2x64xf32>
    %566 = arith.addf %564, %565 : vector<2x64xf32>
    %567 = math.tanh %566 : vector<2x64xf32>
    %568 = arith.mulf %563, %567 : vector<2x64xf32>
    %c8_151 = arith.constant 8 : index
    %c0_152 = arith.constant 0 : index
    %569 = vector.load %arg22[%c8_151, %c0_152] : memref<16x256xf32, #tpu.memory_space<vmem>>, vector<2x256xf32>
    %cst_153 = arith.constant dense<0.000000e+00> : vector<2x256xf32>
    %570 = tpu.matmul %568, %494, %cst_153 {dimension_numbers = #tpu.dot_dimension_numbers<[1], [0], [0], [1], [0, 0, 1, 1], [], []>} : vector<2x64xf32>, vector<64x256xf32>, vector<2x256xf32> -> vector<2x256xf32>
    %571 = arith.addf %569, %570 : vector<2x256xf32>
    %572 = arith.negf %571 : vector<2x256xf32>
    %573 = math.exp %572 : vector<2x256xf32>
    %cst_154 = arith.constant 1.000000e+00 : f32
    %574 = vector.broadcast %cst_154 : f32 to vector<2x256xf32>
    %575 = arith.addf %574, %573 : vector<2x256xf32>
    %576 = arith.divf %574, %575 : vector<2x256xf32>
    %577 = math.tanh %571 : vector<2x256xf32>
    %578 = vector.extract_strided_slice %576 {offsets = [0, 0], sizes = [2, 64], strides = [1, 1]} : vector<2x256xf32> to vector<2x64xf32>
    %579 = vector.extract_strided_slice %576 {offsets = [0, 64], sizes = [2, 64], strides = [1, 1]} : vector<2x256xf32> to vector<2x64xf32>
    %580 = vector.extract_strided_slice %577 {offsets = [0, 128], sizes = [2, 64], strides = [1, 1]} : vector<2x256xf32> to vector<2x64xf32>
    %581 = vector.extract_strided_slice %576 {offsets = [0, 192], sizes = [2, 64], strides = [1, 1]} : vector<2x256xf32> to vector<2x64xf32>
    %582 = arith.mulf %579, %566 : vector<2x64xf32>
    %583 = arith.mulf %578, %580 : vector<2x64xf32>
    %584 = arith.addf %582, %583 : vector<2x64xf32>
    %585 = math.tanh %584 : vector<2x64xf32>
    %586 = arith.mulf %581, %585 : vector<2x64xf32>
    %c10_155 = arith.constant 10 : index
    %c0_156 = arith.constant 0 : index
    %587 = vector.load %arg22[%c10_155, %c0_156] : memref<16x256xf32, #tpu.memory_space<vmem>>, vector<2x256xf32>
    %cst_157 = arith.constant dense<0.000000e+00> : vector<2x256xf32>
    %588 = tpu.matmul %586, %494, %cst_157 {dimension_numbers = #tpu.dot_dimension_numbers<[1], [0], [0], [1], [0, 0, 1, 1], [], []>} : vector<2x64xf32>, vector<64x256xf32>, vector<2x256xf32> -> vector<2x256xf32>
    %589 = arith.addf %587, %588 : vector<2x256xf32>
    %590 = arith.negf %589 : vector<2x256xf32>
    %591 = math.exp %590 : vector<2x256xf32>
    %cst_158 = arith.constant 1.000000e+00 : f32
    %592 = vector.broadcast %cst_158 : f32 to vector<2x256xf32>
    %593 = arith.addf %592, %591 : vector<2x256xf32>
    %594 = arith.divf %592, %593 : vector<2x256xf32>
    %595 = math.tanh %589 : vector<2x256xf32>
    %596 = vector.extract_strided_slice %594 {offsets = [0, 0], sizes = [2, 64], strides = [1, 1]} : vector<2x256xf32> to vector<2x64xf32>
    %597 = vector.extract_strided_slice %594 {offsets = [0, 64], sizes = [2, 64], strides = [1, 1]} : vector<2x256xf32> to vector<2x64xf32>
    %598 = vector.extract_strided_slice %595 {offsets = [0, 128], sizes = [2, 64], strides = [1, 1]} : vector<2x256xf32> to vector<2x64xf32>
    %599 = vector.extract_strided_slice %594 {offsets = [0, 192], sizes = [2, 64], strides = [1, 1]} : vector<2x256xf32> to vector<2x64xf32>
    %600 = arith.mulf %597, %584 : vector<2x64xf32>
    %601 = arith.mulf %596, %598 : vector<2x64xf32>
    %602 = arith.addf %600, %601 : vector<2x64xf32>
    %603 = math.tanh %602 : vector<2x64xf32>
    %604 = arith.mulf %599, %603 : vector<2x64xf32>
    %c12_159 = arith.constant 12 : index
    %c0_160 = arith.constant 0 : index
    %605 = vector.load %arg22[%c12_159, %c0_160] : memref<16x256xf32, #tpu.memory_space<vmem>>, vector<2x256xf32>
    %cst_161 = arith.constant dense<0.000000e+00> : vector<2x256xf32>
    %606 = tpu.matmul %604, %494, %cst_161 {dimension_numbers = #tpu.dot_dimension_numbers<[1], [0], [0], [1], [0, 0, 1, 1], [], []>} : vector<2x64xf32>, vector<64x256xf32>, vector<2x256xf32> -> vector<2x256xf32>
    %607 = arith.addf %605, %606 : vector<2x256xf32>
    %608 = arith.negf %607 : vector<2x256xf32>
    %609 = math.exp %608 : vector<2x256xf32>
    %cst_162 = arith.constant 1.000000e+00 : f32
    %610 = vector.broadcast %cst_162 : f32 to vector<2x256xf32>
    %611 = arith.addf %610, %609 : vector<2x256xf32>
    %612 = arith.divf %610, %611 : vector<2x256xf32>
    %613 = math.tanh %607 : vector<2x256xf32>
    %614 = vector.extract_strided_slice %612 {offsets = [0, 0], sizes = [2, 64], strides = [1, 1]} : vector<2x256xf32> to vector<2x64xf32>
    %615 = vector.extract_strided_slice %612 {offsets = [0, 64], sizes = [2, 64], strides = [1, 1]} : vector<2x256xf32> to vector<2x64xf32>
    %616 = vector.extract_strided_slice %613 {offsets = [0, 128], sizes = [2, 64], strides = [1, 1]} : vector<2x256xf32> to vector<2x64xf32>
    %617 = vector.extract_strided_slice %612 {offsets = [0, 192], sizes = [2, 64], strides = [1, 1]} : vector<2x256xf32> to vector<2x64xf32>
    %618 = arith.mulf %615, %602 : vector<2x64xf32>
    %619 = arith.mulf %614, %616 : vector<2x64xf32>
    %620 = arith.addf %618, %619 : vector<2x64xf32>
    %621 = math.tanh %620 : vector<2x64xf32>
    %622 = arith.mulf %617, %621 : vector<2x64xf32>
    %c14_163 = arith.constant 14 : index
    %c0_164 = arith.constant 0 : index
    %623 = vector.load %arg22[%c14_163, %c0_164] : memref<16x256xf32, #tpu.memory_space<vmem>>, vector<2x256xf32>
    %cst_165 = arith.constant dense<0.000000e+00> : vector<2x256xf32>
    %624 = tpu.matmul %622, %494, %cst_165 {dimension_numbers = #tpu.dot_dimension_numbers<[1], [0], [0], [1], [0, 0, 1, 1], [], []>} : vector<2x64xf32>, vector<64x256xf32>, vector<2x256xf32> -> vector<2x256xf32>
    %625 = arith.addf %623, %624 : vector<2x256xf32>
    %626 = arith.negf %625 : vector<2x256xf32>
    %627 = math.exp %626 : vector<2x256xf32>
    %cst_166 = arith.constant 1.000000e+00 : f32
    %628 = vector.broadcast %cst_166 : f32 to vector<2x256xf32>
    %629 = arith.addf %628, %627 : vector<2x256xf32>
    %630 = arith.divf %628, %629 : vector<2x256xf32>
    %631 = math.tanh %625 : vector<2x256xf32>
    %632 = vector.extract_strided_slice %630 {offsets = [0, 0], sizes = [2, 64], strides = [1, 1]} : vector<2x256xf32> to vector<2x64xf32>
    %633 = vector.extract_strided_slice %630 {offsets = [0, 64], sizes = [2, 64], strides = [1, 1]} : vector<2x256xf32> to vector<2x64xf32>
    %634 = vector.extract_strided_slice %631 {offsets = [0, 128], sizes = [2, 64], strides = [1, 1]} : vector<2x256xf32> to vector<2x64xf32>
    %635 = vector.extract_strided_slice %630 {offsets = [0, 192], sizes = [2, 64], strides = [1, 1]} : vector<2x256xf32> to vector<2x64xf32>
    %636 = arith.mulf %633, %620 : vector<2x64xf32>
    %637 = arith.mulf %632, %634 : vector<2x64xf32>
    %638 = arith.addf %636, %637 : vector<2x64xf32>
    %639 = math.tanh %638 : vector<2x64xf32>
    %640 = arith.mulf %635, %639 : vector<2x64xf32>
    %641 = vector.extract_strided_slice %514 {offsets = [0, 0], sizes = [2, 48], strides = [1, 1]} : vector<2x64xf32> to vector<2x48xf32>
    %642 = vector.extract_strided_slice %532 {offsets = [0, 0], sizes = [2, 48], strides = [1, 1]} : vector<2x64xf32> to vector<2x48xf32>
    %643 = vector.extract_strided_slice %550 {offsets = [0, 0], sizes = [2, 48], strides = [1, 1]} : vector<2x64xf32> to vector<2x48xf32>
    %644 = vector.extract_strided_slice %568 {offsets = [0, 0], sizes = [2, 48], strides = [1, 1]} : vector<2x64xf32> to vector<2x48xf32>
    %645 = vector.extract_strided_slice %586 {offsets = [0, 0], sizes = [2, 48], strides = [1, 1]} : vector<2x64xf32> to vector<2x48xf32>
    %646 = vector.extract_strided_slice %604 {offsets = [0, 0], sizes = [2, 48], strides = [1, 1]} : vector<2x64xf32> to vector<2x48xf32>
    %647 = vector.extract_strided_slice %622 {offsets = [0, 0], sizes = [2, 48], strides = [1, 1]} : vector<2x64xf32> to vector<2x48xf32>
    %648 = vector.extract_strided_slice %640 {offsets = [0, 0], sizes = [2, 48], strides = [1, 1]} : vector<2x64xf32> to vector<2x48xf32>
    %649 = tpu.concatenate %641, %642, %643, %644, %645, %646, %647, %648 in 1 : vector<2x48xf32>, vector<2x48xf32>, vector<2x48xf32>, vector<2x48xf32>, vector<2x48xf32>, vector<2x48xf32>, vector<2x48xf32>, vector<2x48xf32> -> vector<2x384xf32>
    %c0_167 = arith.constant 0 : index
    %c0_168 = arith.constant 0 : index
    %650 = vector.load %arg20[%c0_167, %c0_168] : memref<2x384xf32, #tpu.memory_space<vmem>>, vector<2x384xf32>
    tpu.vector_store %arg20[%c0_167, %c0_168], %649 {strides = array<i32>} : memref<2x384xf32, #tpu.memory_space<vmem>>, vector<2x384xf32>,
    return
  }
  func.func @transform_0(%arg0: i32) -> (i32, i32) {
    %c0_i32 = arith.constant 0 : i32
    %c0_i32_0 = arith.constant 0 : i32
    %c0_i32_1 = arith.constant 0 : i32
    return %c0_i32, %c0_i32_0 : i32, i32
  }
  func.func @transform_1(%arg0: i32) -> (i32, i32) {
    %c0_i32 = arith.constant 0 : i32
    %c0_i32_0 = arith.constant 0 : i32
    %c0_i32_1 = arith.constant 0 : i32
    return %c0_i32, %c0_i32_0 : i32, i32
  }
  func.func @transform_2(%arg0: i32) -> (i32, i32) {
    %c0_i32 = arith.constant 0 : i32
    %c0_i32_0 = arith.constant 0 : i32
    %c0_i32_1 = arith.constant 0 : i32
    return %c0_i32, %c0_i32_0 : i32, i32
  }
  func.func @transform_3(%arg0: i32) -> (i32, i32) {
    %c0_i32 = arith.constant 0 : i32
    %c0_i32_0 = arith.constant 0 : i32
    %c0_i32_1 = arith.constant 0 : i32
    return %c0_i32, %c0_i32_0 : i32, i32
  }
  func.func @transform_4(%arg0: i32) -> (i32, i32) {
    %c0_i32 = arith.constant 0 : i32
    %c0_i32_0 = arith.constant 0 : i32
    %c0_i32_1 = arith.constant 0 : i32
    return %c0_i32, %c0_i32_0 : i32, i32
  }
  func.func @transform_5(%arg0: i32) -> (i32, i32) {
    %c0_i32 = arith.constant 0 : i32
    %c0_i32_0 = arith.constant 0 : i32
    %c0_i32_1 = arith.constant 0 : i32
    return %c0_i32, %c0_i32_0 : i32, i32
  }
  func.func @transform_6(%arg0: i32) -> (i32, i32) {
    %c0_i32 = arith.constant 0 : i32
    %c0_i32_0 = arith.constant 0 : i32
    %c0_i32_1 = arith.constant 0 : i32
    return %c0_i32, %c0_i32_0 : i32, i32
  }
  func.func @transform_7(%arg0: i32) -> (i32, i32) {
    %c0_i32 = arith.constant 0 : i32
    %c0_i32_0 = arith.constant 0 : i32
    %c0_i32_1 = arith.constant 0 : i32
    return %c0_i32, %c0_i32_0 : i32, i32
  }
  func.func @transform_8(%arg0: i32) -> (i32, i32) {
    %c0_i32 = arith.constant 0 : i32
    %c0_i32_0 = arith.constant 0 : i32
    %c0_i32_1 = arith.constant 0 : i32
    return %c0_i32, %c0_i32_0 : i32, i32
  }
  func.func @transform_9(%arg0: i32) -> (i32, i32) {
    %c0_i32 = arith.constant 0 : i32
    %c0_i32_0 = arith.constant 0 : i32
    %c0_i32_1 = arith.constant 0 : i32
    return %c0_i32, %c0_i32_0 : i32, i32
  }
  func.func @transform_10(%arg0: i32) -> (i32, i32) {
    %c0_i32 = arith.constant 0 : i32
    %c0_i32_0 = arith.constant 0 : i32
    %c0_i32_1 = arith.constant 0 : i32
    return %c0_i32, %c0_i32_0 : i32, i32
  }
  func.func @transform_11(%arg0: i32) -> (i32, i32) {
    %c0_i32 = arith.constant 0 : i32
    %c0_i32_0 = arith.constant 0 : i32
    %c0_i32_1 = arith.constant 0 : i32
    return %c0_i32, %c0_i32_0 : i32, i32
  }
  func.func @transform_12(%arg0: i32) -> (i32, i32) {
    %c0_i32 = arith.constant 0 : i32
    %c0_i32_0 = arith.constant 0 : i32
    %c0_i32_1 = arith.constant 0 : i32
    return %c0_i32, %c0_i32_0 : i32, i32
  }
  func.func @transform_13(%arg0: i32) -> (i32, i32) {
    %c0_i32 = arith.constant 0 : i32
    %c0_i32_0 = arith.constant 0 : i32
    %c0_i32_1 = arith.constant 0 : i32
    return %c0_i32, %c0_i32_0 : i32, i32
  }
  func.func @transform_14(%arg0: i32) -> (i32, i32) {
    %c0_i32 = arith.constant 0 : i32
    %c0_i32_0 = arith.constant 0 : i32
    %c0_i32_1 = arith.constant 0 : i32
    return %c0_i32, %c0_i32_0 : i32, i32
  }
  func.func @transform_15(%arg0: i32) -> (i32, i32) {
    %c0_i32 = arith.constant 0 : i32
    %c0_i32_0 = arith.constant 0 : i32
    %c0_i32_1 = arith.constant 0 : i32
    return %c0_i32, %c0_i32_0 : i32, i32
  }
  func.func @transform_16(%arg0: i32) -> (i32, i32) {
    %c0_i32 = arith.constant 0 : i32
    %c0_i32_0 = arith.constant 0 : i32
    %c0_i32_1 = arith.constant 0 : i32
    return %c0_i32, %c0_i32_0 : i32, i32
  }
  func.func @transform_17(%arg0: i32) -> (i32, i32) {
    %c0_i32 = arith.constant 0 : i32
    %c0_i32_0 = arith.constant 0 : i32
    %c0_i32_1 = arith.constant 0 : i32
    return %c0_i32, %c0_i32_0 : i32, i32
  }
  func.func @transform_18(%arg0: i32) -> (i32, i32) {
    %c0_i32 = arith.constant 0 : i32
    %c0_i32_0 = arith.constant 0 : i32
    %c0_i32_1 = arith.constant 0 : i32
    return %c0_i32, %c0_i32_0 : i32, i32
  }
  func.func @transform_19(%arg0: i32) -> (i32, i32) {
    %c0_i32 = arith.constant 0 : i32
    %c0_i32_0 = arith.constant 0 : i32
    %c0_i32_1 = arith.constant 0 : i32
    return %c0_i32, %c0_i32_0 : i32, i32
  }
}

</mosaic_0001>

<llo_original>
// kernel: lstm_vae_forward.1
$region0: #{lstm_vae_forward.1}
  #allocation0 [shape = 'u32[]', space=smem, size = 0x4, offset = 0x4, fixed_abs, tag = 'smem constant byte address 0x4 - core index']
  #allocation1 [shape = 'u32[72,128]{1,0:T(1,128)}', space=vmem, size = 0x9000, scoped, tag = 'internal scratch']
  #allocation2 [shape = 'f32[16,128]{1,0:T(8,128)}', space=vmem, size = 0x2000, scoped, tag = 'scratch operand']
  #allocation3 [shape = 'f32[16,256]{1,0:T(8,128)}', space=vmem, size = 0x4000, scoped, tag = 'scratch operand']
  %s0 = inlined_call_operand.vmem [shape: f32[16,48], index: 0, kind: input, shape index: {}]
  %s1 = inlined_call_operand.vmem [shape: f32[2,32], index: 1, kind: input, shape index: {}]
  %s2 = inlined_call_operand.vmem [shape: f32[48,128], index: 2, kind: input, shape index: {}]
  %s3 = inlined_call_operand.vmem [shape: f32[32,128], index: 3, kind: input, shape index: {}]
  %s4 = inlined_call_operand.vmem [shape: f32[1,128], index: 4, kind: input, shape index: {}]
  %s5 = inlined_call_operand.vmem [shape: f32[32,128], index: 5, kind: input, shape index: {}]
  %s6 = inlined_call_operand.vmem [shape: f32[32,128], index: 6, kind: input, shape index: {}]
  %s7 = inlined_call_operand.vmem [shape: f32[1,128], index: 7, kind: input, shape index: {}]
  %s8 = inlined_call_operand.vmem [shape: f32[32,64], index: 8, kind: input, shape index: {}]
  %s9 = inlined_call_operand.vmem [shape: f32[1,64], index: 9, kind: input, shape index: {}]
  %s10 = inlined_call_operand.vmem [shape: f32[32,32], index: 10, kind: input, shape index: {}]
  %s11 = inlined_call_operand.vmem [shape: f32[1,32], index: 11, kind: input, shape index: {}]
  %s12 = inlined_call_operand.vmem [shape: f32[32,128], index: 12, kind: input, shape index: {}]
  %s13 = inlined_call_operand.vmem [shape: f32[32,128], index: 13, kind: input, shape index: {}]
  %s14 = inlined_call_operand.vmem [shape: f32[1,128], index: 14, kind: input, shape index: {}]
  %s15 = inlined_call_operand.vmem [shape: f32[32,256], index: 15, kind: input, shape index: {}]
  %s16 = inlined_call_operand.vmem [shape: f32[64,256], index: 16, kind: input, shape index: {}]
  %s17 = inlined_call_operand.vmem [shape: f32[1,256], index: 17, kind: input, shape index: {}]
  %s18 = inlined_call_operand.vmem [shape: f32[2,97], index: 18, kind: output, shape index: {0}]
  %s19 = inlined_call_operand.vmem [shape: f32[2,384], index: 19, kind: output, shape index: {1}]
  %20 = xla_tuple %s18, %s19
  %s21 = sld [smem:[#allocation0]]
  $region90: #{lstm_vae_forward.1} parent=0
    _
  %s23 = ssub.s32 1, %s21
  %s24 = scalar_select 0, %s23, %s21
  // Predicated region
  $region2: #{lstm_vae_forward.1} parent=0 // pred_check
    _
  $region3: #{lstm_vae_forward.1} parent=0 // pred_check_branch
    %26 = sbr.rel (0) target = $region5
  $region4: #{lstm_vae_forward.1} parent=0 // pred_region
    _
  $region5: #{lstm_vae_forward.1} parent=0 // pred_fallthru
    _
  // Predicated region
  $region6: #{lstm_vae_forward.1} parent=0 // pred_check
    _
  $region7: #{lstm_vae_forward.1} parent=0 // pred_check_branch
    %28 = sbr.rel (0) target = $region9
  $region8: #{lstm_vae_forward.1} parent=0 // pred_region
    _
  $region9: #{lstm_vae_forward.1} parent=0 // pred_fallthru
    _
  // Predicated region
  $region10: #{lstm_vae_forward.1} parent=0 // pred_check
    _
  $region11: #{lstm_vae_forward.1} parent=0 // pred_check_branch
    %30 = sbr.rel (0) target = $region13
  $region12: #{lstm_vae_forward.1} parent=0 // pred_region
    _
  $region13: #{lstm_vae_forward.1} parent=0 // pred_fallthru
    _
  // Predicated region
  $region14: #{lstm_vae_forward.1} parent=0 // pred_check
    _
  $region15: #{lstm_vae_forward.1} parent=0 // pred_check_branch
    %32 = sbr.rel (0) target = $region17
  $region16: #{lstm_vae_forward.1} parent=0 // pred_region
    _
  $region17: #{lstm_vae_forward.1} parent=0 // pred_fallthru
    _
  // Predicated region
  $region18: #{lstm_vae_forward.1} parent=0 // pred_check
    _
  $region19: #{lstm_vae_forward.1} parent=0 // pred_check_branch
    %34 = sbr.rel (0) target = $region21
  $region20: #{lstm_vae_forward.1} parent=0 // pred_region
    _
  $region21: #{lstm_vae_forward.1} parent=0 // pred_fallthru
    _
  // Predicated region
  $region22: #{lstm_vae_forward.1} parent=0 // pred_check
    _
  $region23: #{lstm_vae_forward.1} parent=0 // pred_check_branch
    %36 = sbr.rel (0) target = $region25
  $region24: #{lstm_vae_forward.1} parent=0 // pred_region
    _
  $region25: #{lstm_vae_forward.1} parent=0 // pred_fallthru
    _
  // Predicated region
  $region26: #{lstm_vae_forward.1} parent=0 // pred_check
    _
  $region27: #{lstm_vae_forward.1} parent=0 // pred_check_branch
    %38 = sbr.rel (0) target = $region29
  $region28: #{lstm_vae_forward.1} parent=0 // pred_region
    _
  $region29: #{lstm_vae_forward.1} parent=0 // pred_fallthru
    _
  // Predicated region
  $region30: #{lstm_vae_forward.1} parent=0 // pred_check
    _
  $region31: #{lstm_vae_forward.1} parent=0 // pred_check_branch
    %40 = sbr.rel (0) target = $region33
  $region32: #{lstm_vae_forward.1} parent=0 // pred_region
    _
  $region33: #{lstm_vae_forward.1} parent=0 // pred_fallthru
    _
  // Predicated region
  $region34: #{lstm_vae_forward.1} parent=0 // pred_check
    _
  $region35: #{lstm_vae_forward.1} parent=0 // pred_check_branch
    %42 = sbr.rel (0) target = $region37
  $region36: #{lstm_vae_forward.1} parent=0 // pred_region
    _
  $region37: #{lstm_vae_forward.1} parent=0 // pred_fallthru
    _
  // Predicated region
  $region38: #{lstm_vae_forward.1} parent=0 // pred_check
    _
  $region39: #{lstm_vae_forward.1} parent=0 // pred_check_branch
    %44 = sbr.rel (0) target = $region41
  $region40: #{lstm_vae_forward.1} parent=0 // pred_region
    _
  $region41: #{lstm_vae_forward.1} parent=0 // pred_fallthru
    _
  // Predicated region
  $region42: #{lstm_vae_forward.1} parent=0 // pred_check
    _
  $region43: #{lstm_vae_forward.1} parent=0 // pred_check_branch
    %46 = sbr.rel (0) target = $region45
  $region44: #{lstm_vae_forward.1} parent=0 // pred_region
    _
  $region45: #{lstm_vae_forward.1} parent=0 // pred_fallthru
    _
  // Predicated region
  $region46: #{lstm_vae_forward.1} parent=0 // pred_check
    _
  $region47: #{lstm_vae_forward.1} parent=0 // pred_check_branch
    %48 = sbr.rel (0) target = $region49
  $region48: #{lstm_vae_forward.1} parent=0 // pred_region
    _
  $region49: #{lstm_vae_forward.1} parent=0 // pred_fallthru
    _
  // Predicated region
  $region50: #{lstm_vae_forward.1} parent=0 // pred_check
    _
  $region51: #{lstm_vae_forward.1} parent=0 // pred_check_branch
    %50 = sbr.rel (0) target = $region53
  $region52: #{lstm_vae_forward.1} parent=0 // pred_region
    _
  $region53: #{lstm_vae_forward.1} parent=0 // pred_fallthru
    _
  // Predicated region
  $region54: #{lstm_vae_forward.1} parent=0 // pred_check
    _
  $region55: #{lstm_vae_forward.1} parent=0 // pred_check_branch
    %52 = sbr.rel (0) target = $region57
  $region56: #{lstm_vae_forward.1} parent=0 // pred_region
    _
  $region57: #{lstm_vae_forward.1} parent=0 // pred_fallthru
    _
  // Predicated region
  $region58: #{lstm_vae_forward.1} parent=0 // pred_check
    _
  $region59: #{lstm_vae_forward.1} parent=0 // pred_check_branch
    %54 = sbr.rel (0) target = $region61
  $region60: #{lstm_vae_forward.1} parent=0 // pred_region
    _
  $region61: #{lstm_vae_forward.1} parent=0 // pred_fallthru
    _
  // Predicated region
  $region62: #{lstm_vae_forward.1} parent=0 // pred_check
    _
  $region63: #{lstm_vae_forward.1} parent=0 // pred_check_branch
    %56 = sbr.rel (0) target = $region65
  $region64: #{lstm_vae_forward.1} parent=0 // pred_region
    _
  $region65: #{lstm_vae_forward.1} parent=0 // pred_fallthru
    _
  // Predicated region
  $region66: #{lstm_vae_forward.1} parent=0 // pred_check
    _
  $region67: #{lstm_vae_forward.1} parent=0 // pred_check_branch
    %58 = sbr.rel (0) target = $region69
  $region68: #{lstm_vae_forward.1} parent=0 // pred_region
    _
  $region69: #{lstm_vae_forward.1} parent=0 // pred_fallthru
    _
  // Predicated region
  $region70: #{lstm_vae_forward.1} parent=0 // pred_check
    _
  $region71: #{lstm_vae_forward.1} parent=0 // pred_check_branch
    %60 = sbr.rel (0) target = $region73
  $region72: #{lstm_vae_forward.1} parent=0 // pred_region
    _
  $region73: #{lstm_vae_forward.1} parent=0 // pred_fallthru
    _
  %v61 = vld [vmem:[%s0] sm:$0xff]
  %v62 = vld [vmem:[%s0 + $0x8] sm:$0xff]
  %v63 = vld [vmem:[%s2] sm:$0xff]
  %v64 = vld [vmem:[%s2 + $0x8] sm:$0xff]
  %v65 = vld [vmem:[%s2 + $0x10] sm:$0xff]
  %v66 = vld [vmem:[%s2 + $0x18] sm:$0xff]
  %v67 = vld [vmem:[%s2 + $0x20] sm:$0xff]
  %v68 = vld [vmem:[%s2 + $0x28] sm:$0xff]
  %v69 = vld [vmem:[%s4] sm:$0x1]
  %v71 = vperm.slane %v69, 0
  %vm73 = vcmask 392192
  %v75 = vsel %vm73, %v61, 0
  %v78 = vsel %vm73, %v62, 0
  %80 = vmatpush.msra.mxu0 0.0
  %81 = vmatpush.msra.mxu0 0.0
  %82 = vmatpush.msra.mxu0 0.0
  %83 = vmatpush.msra.mxu0 0.0
  %84 = vmatpush.msra.mxu0 0.0
  %85 = vmatpush.msra.mxu0 0.0
  %86 = vmatpush.msra.mxu0 0.0
  %87 = vmatpush.msra.mxu0 0.0
  %88 = vmatpush.msra.mxu0 0.0
  %89 = vmatpush.msra.mxu0 0.0
  %90 = vmatpush.msra.mxu0 %v68
  %91 = vmatpush.msra.mxu0 %v67
  %92 = vmatpush.msra.mxu0 %v66
  %93 = vmatpush.msra.mxu0 %v65
  %94 = vmatpush.msra.mxu0 %v64
  %95 = vmatpush.msra.mxu0 %v63
  %96 = vmatmul.f32.gmra.mxu0 %v75
  %v97 = vpop.f32.mrf.mxu0
  %v98 = vadd.f32 %v71, %v97
  %99 = vmatmul.f32.gmra.mxu0 %v78
  %v100 = vpop.f32.mrf.mxu0
  %v101 = vadd.f32 %v71, %v100
  %102 = vdwg.mxu0
  %103 = vst [vmem:[#allocation2] sm:$0xff] %v98
  %104 = vst [vmem:[#allocation2 + $0x8] sm:$0xff] %v101
  %v105 = vld [vmem:[%s3] sm:$0xff]
  %v106 = vld [vmem:[%s3 + $0x8] sm:$0xff]
  %v107 = vld [vmem:[%s3 + $0x10] sm:$0xff]
  %v108 = vld [vmem:[%s3 + $0x18] sm:$0xff]
  %v109 = vld [vmem:[#allocation2] sm:$0x3]
  %vm110 = vcmask 261120
  %v112 = vsel %vm110, 0.0, 0
  %114 = vmatpush.msra.mxu0 0.0
  %115 = vmatpush.msra.mxu0 0.0
  %116 = vmatpush.msra.mxu0 0.0
  %117 = vmatpush.msra.mxu0 0.0
  %118 = vmatpush.msra.mxu0 0.0
  %119 = vmatpush.msra.mxu0 0.0
  %120 = vmatpush.msra.mxu0 0.0
  %121 = vmatpush.msra.mxu0 0.0
  %122 = vmatpush.msra.mxu0 0.0
  %123 = vmatpush.msra.mxu0 0.0
  %124 = vmatpush.msra.mxu0 0.0
  %125 = vmatpush.msra.mxu0 0.0
  %126 = vmatpush.msra.mxu0 %v108
  %127 = vmatpush.msra.mxu0 %v107
  %128 = vmatpush.msra.mxu0 %v106
  %129 = vmatpush.msra.mxu0 %v105
  %130 = vmatmul.f32.gmra.mxu0 %v112
  %v131 = vpop.f32.mrf.mxu0
  %v132 = vadd.f32 0.0, %v131
  %133 = vdwg.mxu0
  %v134 = vadd.f32 %v109, %v132
  %v135 = vxor.u32 %v134, 2147483648
  %v136 = vmul.f32 %v135, 1.442695
  %v137 = vpow.pop %v136
  %v138 = vadd.f32 %v137, 1.0
  %v139 = vrcp.pop %v138
  %v140 = vmul.f32 %v138, %v139
  %v141 = vsub.f32 1.0, %v140
  %v142 = vmul.f32 %v139, %v141
  %v143 = vadd.f32 %v139, %v142
  %vm144 = vweird.f32 %v138
  %vm145 = vweird.f32 %v139
  %vm146 = vmor %vm144, %vm145
  %v147 = vsel %vm146, %v139, %v143
  %v148 = vand.u32 2147483647, %v138
  %vm149 = vcmp.eq.f32.partialorder %v148, 8.507059e+37
  %v150 = vand.u32 %v138, 2147483648
  %v151 = vor.u32 1.1754944e-38, %v150
  %v152 = vsel %vm149, %v151, %v147
  %v153 = vmul.f32 1.0, %v152
  %v154 = vtanh.pop %v134
  %v155 = vmul.f32 %v153, 0.0
  %157 = vrot.lane.b32.xlu0 %v154, 64
  %v158 = vpop.permute.xlu0 %157
  %v160 = vmul.f32 %v153, %v158
  %162 = vrot.lane.b32.xlu0 %v160, 32
  %v163 = vpop.permute.xlu0 %162
  %v165 = vadd.f32 %v155, %v163
  %v166 = vtanh.pop %v165
  %168 = vrot.lane.b32.xlu0 %v166, 64
  %v169 = vpop.permute.xlu0 %168
  %v171 = vmul.f32 %v153, %v169
  %v172 = vld [vmem:[#allocation2 + $0x2] sm:$0x3]
  %174 = vrot.lane.b32.xlu0 %v171, 32
  %v175 = vpop.permute.xlu0 %174
  %v176 = vsel %vm110, %v175, 0
  %178 = vmatpush.msra.mxu0 0.0
  %179 = vmatpush.msra.mxu0 0.0
  %180 = vmatpush.msra.mxu0 0.0
  %181 = vmatpush.msra.mxu0 0.0
  %182 = vmatpush.msra.mxu0 0.0
  %183 = vmatpush.msra.mxu0 0.0
  %184 = vmatpush.msra.mxu0 0.0
  %185 = vmatpush.msra.mxu0 0.0
  %186 = vmatpush.msra.mxu0 0.0
  %187 = vmatpush.msra.mxu0 0.0
  %188 = vmatpush.msra.mxu0 0.0
  %189 = vmatpush.msra.mxu0 0.0
  %190 = vmatpush.msra.mxu0 %v108
  %191 = vmatpush.msra.mxu0 %v107
  %192 = vmatpush.msra.mxu0 %v106
  %193 = vmatpush.msra.mxu0 %v105
  %194 = vmatmul.f32.gmra.mxu0 %v176
  %v195 = vpop.f32.mrf.mxu0
  %v196 = vadd.f32 0.0, %v195
  %197 = vdwg.mxu0
  %v198 = vadd.f32 %v172, %v196
  %v199 = vxor.u32 %v198, 2147483648
  %v200 = vmul.f32 %v199, 1.442695
  %v201 = vpow.pop %v200
  %v202 = vadd.f32 %v201, 1.0
  %v203 = vrcp.pop %v202
  %v204 = vmul.f32 %v202, %v203
  %v205 = vsub.f32 1.0, %v204
  %v206 = vmul.f32 %v203, %v205
  %v207 = vadd.f32 %v203, %v206
  %vm208 = vweird.f32 %v202
  %vm209 = vweird.f32 %v203
  %vm210 = vmor %vm208, %vm209
  %v211 = vsel %vm210, %v203, %v207
  %v212 = vand.u32 2147483647, %v202
  %vm213 = vcmp.eq.f32.partialorder %v212, 8.507059e+37
  %v214 = vand.u32 %v202, 2147483648
  %v215 = vor.u32 1.1754944e-38, %v214
  %v216 = vsel %vm213, %v215, %v211
  %v217 = vmul.f32 1.0, %v216
  %v218 = vtanh.pop %v198
  %v219 = vmul.f32 %v217, %v165
  %221 = vrot.lane.b32.xlu0 %v218, 64
  %v222 = vpop.permute.xlu0 %221
  %v224 = vmul.f32 %v217, %v222
  %226 = vrot.lane.b32.xlu0 %v224, 32
  %v227 = vpop.permute.xlu0 %226
  %v229 = vadd.f32 %v219, %v227
  %v230 = vtanh.pop %v229
  %232 = vrot.lane.b32.xlu0 %v230, 64
  %v233 = vpop.permute.xlu0 %232
  %v235 = vmul.f32 %v217, %v233
  %v236 = vld [vmem:[#allocation2 + $0x4] sm:$0x3]
  %238 = vrot.lane.b32.xlu0 %v235, 32
  %v239 = vpop.permute.xlu0 %238
  %v240 = vsel %vm110, %v239, 0
  %242 = vmatpush.msra.mxu0 0.0
  %243 = vmatpush.msra.mxu0 0.0
  %244 = vmatpush.msra.mxu0 0.0
  %245 = vmatpush.msra.mxu0 0.0
  %246 = vmatpush.msra.mxu0 0.0
  %247 = vmatpush.msra.mxu0 0.0
  %248 = vmatpush.msra.mxu0 0.0
  %249 = vmatpush.msra.mxu0 0.0
  %250 = vmatpush.msra.mxu0 0.0
  %251 = vmatpush.msra.mxu0 0.0
  %252 = vmatpush.msra.mxu0 0.0
  %253 = vmatpush.msra.mxu0 0.0
  %254 = vmatpush.msra.mxu0 %v108
  %255 = vmatpush.msra.mxu0 %v107
  %256 = vmatpush.msra.mxu0 %v106
  %257 = vmatpush.msra.mxu0 %v105
  %258 = vmatmul.f32.gmra.mxu0 %v240
  %v259 = vpop.f32.mrf.mxu0
  %v260 = vadd.f32 0.0, %v259
  %261 = vdwg.mxu0
  %v262 = vadd.f32 %v236, %v260
  %v263 = vxor.u32 %v262, 2147483648
  %v264 = vmul.f32 %v263, 1.442695
  %v265 = vpow.pop %v264
  %v266 = vadd.f32 %v265, 1.0
  %v267 = vrcp.pop %v266
  %v268 = vmul.f32 %v266, %v267
  %v269 = vsub.f32 1.0, %v268
  %v270 = vmul.f32 %v267, %v269
  %v271 = vadd.f32 %v267, %v270
  %vm272 = vweird.f32 %v266
  %vm273 = vweird.f32 %v267
  %vm274 = vmor %vm272, %vm273
  %v275 = vsel %vm274, %v267, %v271
  %v276 = vand.u32 2147483647, %v266
  %vm277 = vcmp.eq.f32.partialorder %v276, 8.507059e+37
  %v278 = vand.u32 %v266, 2147483648
  %v279 = vor.u32 1.1754944e-38, %v278
  %v280 = vsel %vm277, %v279, %v275
  %v281 = vmul.f32 1.0, %v280
  %v282 = vtanh.pop %v262
  %v283 = vmul.f32 %v281, %v229
  %285 = vrot.lane.b32.xlu0 %v282, 64
  %v286 = vpop.permute.xlu0 %285
  %v288 = vmul.f32 %v281, %v286
  %290 = vrot.lane.b32.xlu0 %v288, 32
  %v291 = vpop.permute.xlu0 %290
  %v293 = vadd.f32 %v283, %v291
  %v294 = vtanh.pop %v293
  %296 = vrot.lane.b32.xlu0 %v294, 64
  %v297 = vpop.permute.xlu0 %296
  %v299 = vmul.f32 %v281, %v297
  %v300 = vld [vmem:[#allocation2 + $0x6] sm:$0x3]
  %302 = vrot.lane.b32.xlu0 %v299, 32
  %v303 = vpop.permute.xlu0 %302
  %v304 = vsel %vm110, %v303, 0
  %306 = vmatpush.msra.mxu0 0.0
  %307 = vmatpush.msra.mxu0 0.0
  %308 = vmatpush.msra.mxu0 0.0
  %309 = vmatpush.msra.mxu0 0.0
  %310 = vmatpush.msra.mxu0 0.0
  %311 = vmatpush.msra.mxu0 0.0
  %312 = vmatpush.msra.mxu0 0.0
  %313 = vmatpush.msra.mxu0 0.0
  %314 = vmatpush.msra.mxu0 0.0
  %315 = vmatpush.msra.mxu0 0.0
  %316 = vmatpush.msra.mxu0 0.0
  %317 = vmatpush.msra.mxu0 0.0
  %318 = vmatpush.msra.mxu0 %v108
  %319 = vmatpush.msra.mxu0 %v107
  %320 = vmatpush.msra.mxu0 %v106
  %321 = vmatpush.msra.mxu0 %v105
  %322 = vmatmul.f32.gmra.mxu0 %v304
  %v323 = vpop.f32.mrf.mxu0
  %v324 = vadd.f32 0.0, %v323
  %325 = vdwg.mxu0
  %v326 = vadd.f32 %v300, %v324
  %v327 = vxor.u32 %v326, 2147483648
  %v328 = vmul.f32 %v327, 1.442695
  %v329 = vpow.pop %v328
  %v330 = vadd.f32 %v329, 1.0
  %v331 = vrcp.pop %v330
  %v332 = vmul.f32 %v330, %v331
  %v333 = vsub.f32 1.0, %v332
  %v334 = vmul.f32 %v331, %v333
  %v335 = vadd.f32 %v331, %v334
  %vm336 = vweird.f32 %v330
  %vm337 = vweird.f32 %v331
  %vm338 = vmor %vm336, %vm337
  %v339 = vsel %vm338, %v331, %v335
  %v340 = vand.u32 2147483647, %v330
  %vm341 = vcmp.eq.f32.partialorder %v340, 8.507059e+37
  %v342 = vand.u32 %v330, 2147483648
  %v343 = vor.u32 1.1754944e-38, %v342
  %v344 = vsel %vm341, %v343, %v339
  %v345 = vmul.f32 1.0, %v344
  %v346 = vtanh.pop %v326
  %v347 = vmul.f32 %v345, %v293
  %349 = vrot.lane.b32.xlu0 %v346, 64
  %v350 = vpop.permute.xlu0 %349
  %v352 = vmul.f32 %v345, %v350
  %354 = vrot.lane.b32.xlu0 %v352, 32
  %v355 = vpop.permute.xlu0 %354
  %v357 = vadd.f32 %v347, %v355
  %v358 = vtanh.pop %v357
  %360 = vrot.lane.b32.xlu0 %v358, 64
  %v361 = vpop.permute.xlu0 %360
  %v363 = vmul.f32 %v345, %v361
  %v364 = vld [vmem:[#allocation2 + $0x8] sm:$0x3]
  %366 = vrot.lane.b32.xlu0 %v363, 32
  %v367 = vpop.permute.xlu0 %366
  %v368 = vsel %vm110, %v367, 0
  %370 = vmatpush.msra.mxu0 0.0
  %371 = vmatpush.msra.mxu0 0.0
  %372 = vmatpush.msra.mxu0 0.0
  %373 = vmatpush.msra.mxu0 0.0
  %374 = vmatpush.msra.mxu0 0.0
  %375 = vmatpush.msra.mxu0 0.0
  %376 = vmatpush.msra.mxu0 0.0
  %377 = vmatpush.msra.mxu0 0.0
  %378 = vmatpush.msra.mxu0 0.0
  %379 = vmatpush.msra.mxu0 0.0
  %380 = vmatpush.msra.mxu0 0.0
  %381 = vmatpush.msra.mxu0 0.0
  %382 = vmatpush.msra.mxu0 %v108
  %383 = vmatpush.msra.mxu0 %v107
  %384 = vmatpush.msra.mxu0 %v106
  %385 = vmatpush.msra.mxu0 %v105
  %386 = vmatmul.f32.gmra.mxu0 %v368
  %v387 = vpop.f32.mrf.mxu0
  %v388 = vadd.f32 0.0, %v387
  %389 = vdwg.mxu0
  %v390 = vadd.f32 %v364, %v388
  %v391 = vxor.u32 %v390, 2147483648
  %v392 = vmul.f32 %v391, 1.442695
  %v393 = vpow.pop %v392
  %v394 = vadd.f32 %v393, 1.0
  %v395 = vrcp.pop %v394
  %v396 = vmul.f32 %v394, %v395
  %v397 = vsub.f32 1.0, %v396
  %v398 = vmul.f32 %v395, %v397
  %v399 = vadd.f32 %v395, %v398
  %vm400 = vweird.f32 %v394
  %vm401 = vweird.f32 %v395
  %vm402 = vmor %vm400, %vm401
  %v403 = vsel %vm402, %v395, %v399
  %v404 = vand.u32 2147483647, %v394
  %vm405 = vcmp.eq.f32.partialorder %v404, 8.507059e+37
  %v406 = vand.u32 %v394, 2147483648
  %v407 = vor.u32 1.1754944e-38, %v406
  %v408 = vsel %vm405, %v407, %v403
  %v409 = vmul.f32 1.0, %v408
  %v410 = vtanh.pop %v390
  %v411 = vmul.f32 %v409, %v357
  %413 = vrot.lane.b32.xlu0 %v410, 64
  %v414 = vpop.permute.xlu0 %413
  %v416 = vmul.f32 %v409, %v414
  %418 = vrot.lane.b32.xlu0 %v416, 32
  %v419 = vpop.permute.xlu0 %418
  %v421 = vadd.f32 %v411, %v419
  %v422 = vtanh.pop %v421
  %424 = vrot.lane.b32.xlu0 %v422, 64
  %v425 = vpop.permute.xlu0 %424
  %v427 = vmul.f32 %v409, %v425
  %v428 = vld [vmem:[#allocation2 + $0xa] sm:$0x3]
  %430 = vrot.lane.b32.xlu0 %v427, 32
  %v431 = vpop.permute.xlu0 %430
  %v432 = vsel %vm110, %v431, 0
  %434 = vmatpush.msra.mxu0 0.0
  %435 = vmatpush.msra.mxu0 0.0
  %436 = vmatpush.msra.mxu0 0.0
  %437 = vmatpush.msra.mxu0 0.0
  %438 = vmatpush.msra.mxu0 0.0
  %439 = vmatpush.msra.mxu0 0.0
  %440 = vmatpush.msra.mxu0 0.0
  %441 = vmatpush.msra.mxu0 0.0
  %442 = vmatpush.msra.mxu0 0.0
  %443 = vmatpush.msra.mxu0 0.0
  %444 = vmatpush.msra.mxu0 0.0
  %445 = vmatpush.msra.mxu0 0.0
  %446 = vmatpush.msra.mxu0 %v108
  %447 = vmatpush.msra.mxu0 %v107
  %448 = vmatpush.msra.mxu0 %v106
  %449 = vmatpush.msra.mxu0 %v105
  %450 = vmatmul.f32.gmra.mxu0 %v432
  %v451 = vpop.f32.mrf.mxu0
  %v452 = vadd.f32 0.0, %v451
  %453 = vdwg.mxu0
  %v454 = vadd.f32 %v428, %v452
  %v455 = vxor.u32 %v454, 2147483648
  %v456 = vmul.f32 %v455, 1.442695
  %v457 = vpow.pop %v456
  %v458 = vadd.f32 %v457, 1.0
  %v459 = vrcp.pop %v458
  %v460 = vmul.f32 %v458, %v459
  %v461 = vsub.f32 1.0, %v460
  %v462 = vmul.f32 %v459, %v461
  %v463 = vadd.f32 %v459, %v462
  %vm464 = vweird.f32 %v458
  %vm465 = vweird.f32 %v459
  %vm466 = vmor %vm464, %vm465
  %v467 = vsel %vm466, %v459, %v463
  %v468 = vand.u32 2147483647, %v458
  %vm469 = vcmp.eq.f32.partialorder %v468, 8.507059e+37
  %v470 = vand.u32 %v458, 2147483648
  %v471 = vor.u32 1.1754944e-38, %v470
  %v472 = vsel %vm469, %v471, %v467
  %v473 = vmul.f32 1.0, %v472
  %v474 = vtanh.pop %v454
  %v475 = vmul.f32 %v473, %v421
  %477 = vrot.lane.b32.xlu0 %v474, 64
  %v478 = vpop.permute.xlu0 %477
  %v480 = vmul.f32 %v473, %v478
  %482 = vrot.lane.b32.xlu0 %v480, 32
  %v483 = vpop.permute.xlu0 %482
  %v485 = vadd.f32 %v475, %v483
  %v486 = vtanh.pop %v485
  %488 = vrot.lane.b32.xlu0 %v486, 64
  %v489 = vpop.permute.xlu0 %488
  %v491 = vmul.f32 %v473, %v489
  %v492 = vld [vmem:[#allocation2 + $0xc] sm:$0x3]
  %494 = vrot.lane.b32.xlu0 %v491, 32
  %v495 = vpop.permute.xlu0 %494
  %v496 = vsel %vm110, %v495, 0
  %498 = vmatpush.msra.mxu0 0.0
  %499 = vmatpush.msra.mxu0 0.0
  %500 = vmatpush.msra.mxu0 0.0
  %501 = vmatpush.msra.mxu0 0.0
  %502 = vmatpush.msra.mxu0 0.0
  %503 = vmatpush.msra.mxu0 0.0
  %504 = vmatpush.msra.mxu0 0.0
  %505 = vmatpush.msra.mxu0 0.0
  %506 = vmatpush.msra.mxu0 0.0
  %507 = vmatpush.msra.mxu0 0.0
  %508 = vmatpush.msra.mxu0 0.0
  %509 = vmatpush.msra.mxu0 0.0
  %510 = vmatpush.msra.mxu0 %v108
  %511 = vmatpush.msra.mxu0 %v107
  %512 = vmatpush.msra.mxu0 %v106
  %513 = vmatpush.msra.mxu0 %v105
  %514 = vmatmul.f32.gmra.mxu0 %v496
  %v515 = vpop.f32.mrf.mxu0
  %v516 = vadd.f32 0.0, %v515
  %517 = vdwg.mxu0
  %v518 = vadd.f32 %v492, %v516
  %v519 = vxor.u32 %v518, 2147483648
  %v520 = vmul.f32 %v519, 1.442695
  %v521 = vpow.pop %v520
  %v522 = vadd.f32 %v521, 1.0
  %v523 = vrcp.pop %v522
  %v524 = vmul.f32 %v522, %v523
  %v525 = vsub.f32 1.0, %v524
  %v526 = vmul.f32 %v523, %v525
  %v527 = vadd.f32 %v523, %v526
  %vm528 = vweird.f32 %v522
  %vm529 = vweird.f32 %v523
  %vm530 = vmor %vm528, %vm529
  %v531 = vsel %vm530, %v523, %v527
  %v532 = vand.u32 2147483647, %v522
  %vm533 = vcmp.eq.f32.partialorder %v532, 8.507059e+37
  %v534 = vand.u32 %v522, 2147483648
  %v535 = vor.u32 1.1754944e-38, %v534
  %v536 = vsel %vm533, %v535, %v531
  %v537 = vmul.f32 1.0, %v536
  %v538 = vtanh.pop %v518
  %v539 = vmul.f32 %v537, %v485
  %541 = vrot.lane.b32.xlu0 %v538, 64
  %v542 = vpop.permute.xlu0 %541
  %v544 = vmul.f32 %v537, %v542
  %546 = vrot.lane.b32.xlu0 %v544, 32
  %v547 = vpop.permute.xlu0 %546
  %v549 = vadd.f32 %v539, %v547
  %v550 = vtanh.pop %v549
  %552 = vrot.lane.b32.xlu0 %v550, 64
  %v553 = vpop.permute.xlu0 %552
  %v555 = vmul.f32 %v537, %v553
  %v556 = vld [vmem:[#allocation2 + $0xe] sm:$0x3]
  %558 = vrot.lane.b32.xlu0 %v555, 32
  %v559 = vpop.permute.xlu0 %558
  %v560 = vsel %vm110, %v559, 0
  %562 = vmatpush.msra.mxu0 0.0
  %563 = vmatpush.msra.mxu0 0.0
  %564 = vmatpush.msra.mxu0 0.0
  %565 = vmatpush.msra.mxu0 0.0
  %566 = vmatpush.msra.mxu0 0.0
  %567 = vmatpush.msra.mxu0 0.0
  %568 = vmatpush.msra.mxu0 0.0
  %569 = vmatpush.msra.mxu0 0.0
  %570 = vmatpush.msra.mxu0 0.0
  %571 = vmatpush.msra.mxu0 0.0
  %572 = vmatpush.msra.mxu0 0.0
  %573 = vmatpush.msra.mxu0 0.0
  %574 = vmatpush.msra.mxu0 %v108
  %575 = vmatpush.msra.mxu0 %v107
  %576 = vmatpush.msra.mxu0 %v106
  %577 = vmatpush.msra.mxu0 %v105
  %578 = vmatmul.f32.gmra.mxu0 %v560
  %v579 = vpop.f32.mrf.mxu0
  %v580 = vadd.f32 0.0, %v579
  %581 = vdwg.mxu0
  %v582 = vadd.f32 %v556, %v580
  %v583 = vxor.u32 %v582, 2147483648
  %v584 = vmul.f32 %v583, 1.442695
  %v585 = vpow.pop %v584
  %v586 = vadd.f32 %v585, 1.0
  %v587 = vrcp.pop %v586
  %v588 = vmul.f32 %v586, %v587
  %v589 = vsub.f32 1.0, %v588
  %v590 = vmul.f32 %v587, %v589
  %v591 = vadd.f32 %v587, %v590
  %vm592 = vweird.f32 %v586
  %vm593 = vweird.f32 %v587
  %vm594 = vmor %vm592, %vm593
  %v595 = vsel %vm594, %v587, %v591
  %v596 = vand.u32 2147483647, %v586
  %vm597 = vcmp.eq.f32.partialorder %v596, 8.507059e+37
  %v598 = vand.u32 %v586, 2147483648
  %v599 = vor.u32 1.1754944e-38, %v598
  %v600 = vsel %vm597, %v599, %v595
  %v601 = vmul.f32 1.0, %v600
  %v602 = vtanh.pop %v582
  %v603 = vmul.f32 %v601, %v549
  %605 = vrot.lane.b32.xlu0 %v602, 64
  %v606 = vpop.permute.xlu0 %605
  %v608 = vmul.f32 %v601, %v606
  %610 = vrot.lane.b32.xlu0 %v608, 32
  %v611 = vpop.permute.xlu0 %610
  %v613 = vadd.f32 %v603, %v611
  %v614 = vtanh.pop %v613
  %616 = vrot.lane.b32.xlu0 %v614, 64
  %v617 = vpop.permute.xlu0 %616
  %v619 = vmul.f32 %v601, %v617
  %v620 = vrot.slane %v235, 6
  %v622 = vrot.slane %v299, 4
  %v624 = vrot.slane %v363, 2
  %v626 = vrot.slane %v491, 6
  %v628 = vrot.slane %v555, 4
  %v631 = vrot.slane %v619, 2
  %vm633 = vcmask 1041408
  %v634 = vsel %vm633, %v171, %v620
  %vm635 = vcmask 1043456
  %v636 = vsel %vm635, %v634, %v622
  %vm637 = vcmask 1045504
  %v638 = vsel %vm637, %v636, %v624
  %v639 = vsel %vm633, %v427, %v626
  %v640 = vsel %vm635, %v639, %v628
  %v641 = vsel %vm637, %v640, %v631
  %v642 = vld [vmem:[%s5] sm:$0xff]
  %v643 = vld [vmem:[%s5 + $0x8] sm:$0xff]
  %v644 = vld [vmem:[%s5 + $0x10] sm:$0xff]
  %v645 = vld [vmem:[%s5 + $0x18] sm:$0xff]
  %v646 = vld [vmem:[%s7] sm:$0x1]
  %v648 = vperm.slane %v646, 0
  %652 = vrot.lane.b32.xlu0 %v638, 32
  %v653 = vpop.permute.xlu0 %652
  %654 = vrot.lane.b32.xlu0 %v641, 32
  %v655 = vpop.permute.xlu0 %654
  %v656 = vsel %vm110, %v653, 0
  %v658 = vsel %vm110, %v655, 0
  %660 = vmatpush.msra.mxu0 0.0
  %661 = vmatpush.msra.mxu0 0.0
  %662 = vmatpush.msra.mxu0 0.0
  %663 = vmatpush.msra.mxu0 0.0
  %664 = vmatpush.msra.mxu0 0.0
  %665 = vmatpush.msra.mxu0 0.0
  %666 = vmatpush.msra.mxu0 0.0
  %667 = vmatpush.msra.mxu0 0.0
  %668 = vmatpush.msra.mxu0 0.0
  %669 = vmatpush.msra.mxu0 0.0
  %670 = vmatpush.msra.mxu0 0.0
  %671 = vmatpush.msra.mxu0 0.0
  %672 = vmatpush.msra.mxu0 %v645
  %673 = vmatpush.msra.mxu0 %v644
  %674 = vmatpush.msra.mxu0 %v643
  %675 = vmatpush.msra.mxu0 %v642
  %676 = vmatmul.f32.gmra.mxu0 %v656
  %v677 = vpop.f32.mrf.mxu0
  %v678 = vadd.f32 %v648, %v677
  %679 = vmatmul.f32.gmra.mxu0 %v658
  %v680 = vpop.f32.mrf.mxu0
  %v681 = vadd.f32 %v648, %v680
  %682 = vdwg.mxu0
  %683 = vst [vmem:[#allocation2] sm:$0xff] %v678
  %684 = vst [vmem:[#allocation2 + $0x8] sm:$0xff] %v681
  %v685 = vld [vmem:[%s6] sm:$0xff]
  %v686 = vld [vmem:[%s6 + $0x8] sm:$0xff]
  %v687 = vld [vmem:[%s6 + $0x10] sm:$0xff]
  %v688 = vld [vmem:[%s6 + $0x18] sm:$0xff]
  %v689 = vld [vmem:[#allocation2] sm:$0x3]
  %690 = vmatpush.msra.mxu0 0.0
  %691 = vmatpush.msra.mxu0 0.0
  %692 = vmatpush.msra.mxu0 0.0
  %693 = vmatpush.msra.mxu0 0.0
  %694 = vmatpush.msra.mxu0 0.0
  %695 = vmatpush.msra.mxu0 0.0
  %696 = vmatpush.msra.mxu0 0.0
  %697 = vmatpush.msra.mxu0 0.0
  %698 = vmatpush.msra.mxu0 0.0
  %699 = vmatpush.msra.mxu0 0.0
  %700 = vmatpush.msra.mxu0 0.0
  %701 = vmatpush.msra.mxu0 0.0
  %702 = vmatpush.msra.mxu0 %v688
  %703 = vmatpush.msra.mxu0 %v687
  %704 = vmatpush.msra.mxu0 %v686
  %705 = vmatpush.msra.mxu0 %v685
  %706 = vmatmul.f32.gmra.mxu0 %v112
  %v707 = vpop.f32.mrf.mxu0
  %v708 = vadd.f32 0.0, %v707
  %709 = vdwg.mxu0
  %v710 = vadd.f32 %v689, %v708
  %v711 = vxor.u32 %v710, 2147483648
  %v712 = vmul.f32 %v711, 1.442695
  %v713 = vpow.pop %v712
  %v714 = vadd.f32 %v713, 1.0
  %v715 = vrcp.pop %v714
  %v716 = vmul.f32 %v714, %v715
  %v717 = vsub.f32 1.0, %v716
  %v718 = vmul.f32 %v715, %v717
  %v719 = vadd.f32 %v715, %v718
  %vm720 = vweird.f32 %v714
  %vm721 = vweird.f32 %v715
  %vm722 = vmor %vm720, %vm721
  %v723 = vsel %vm722, %v715, %v719
  %v724 = vand.u32 2147483647, %v714
  %vm725 = vcmp.eq.f32.partialorder %v724, 8.507059e+37
  %v726 = vand.u32 %v714, 2147483648
  %v727 = vor.u32 1.1754944e-38, %v726
  %v728 = vsel %vm725, %v727, %v723
  %v729 = vmul.f32 1.0, %v728
  %v730 = vtanh.pop %v710
  %v731 = vmul.f32 %v729, 0.0
  %733 = vrot.lane.b32.xlu0 %v730, 64
  %v734 = vpop.permute.xlu0 %733
  %v736 = vmul.f32 %v729, %v734
  %738 = vrot.lane.b32.xlu0 %v736, 32
  %v739 = vpop.permute.xlu0 %738
  %v741 = vadd.f32 %v731, %v739
  %v742 = vtanh.pop %v741
  %744 = vrot.lane.b32.xlu0 %v742, 64
  %v745 = vpop.permute.xlu0 %744
  %v747 = vmul.f32 %v729, %v745
  %v748 = vld [vmem:[#allocation2 + $0x2] sm:$0x3]
  %750 = vrot.lane.b32.xlu0 %v747, 32
  %v751 = vpop.permute.xlu0 %750
  %v752 = vsel %vm110, %v751, 0
  %754 = vmatpush.msra.mxu0 0.0
  %755 = vmatpush.msra.mxu0 0.0
  %756 = vmatpush.msra.mxu0 0.0
  %757 = vmatpush.msra.mxu0 0.0
  %758 = vmatpush.msra.mxu0 0.0
  %759 = vmatpush.msra.mxu0 0.0
  %760 = vmatpush.msra.mxu0 0.0
  %761 = vmatpush.msra.mxu0 0.0
  %762 = vmatpush.msra.mxu0 0.0
  %763 = vmatpush.msra.mxu0 0.0
  %764 = vmatpush.msra.mxu0 0.0
  %765 = vmatpush.msra.mxu0 0.0
  %766 = vmatpush.msra.mxu0 %v688
  %767 = vmatpush.msra.mxu0 %v687
  %768 = vmatpush.msra.mxu0 %v686
  %769 = vmatpush.msra.mxu0 %v685
  %770 = vmatmul.f32.gmra.mxu0 %v752
  %v771 = vpop.f32.mrf.mxu0
  %v772 = vadd.f32 0.0, %v771
  %773 = vdwg.mxu0
  %v774 = vadd.f32 %v748, %v772
  %v775 = vxor.u32 %v774, 2147483648
  %v776 = vmul.f32 %v775, 1.442695
  %v777 = vpow.pop %v776
  %v778 = vadd.f32 %v777, 1.0
  %v779 = vrcp.pop %v778
  %v780 = vmul.f32 %v778, %v779
  %v781 = vsub.f32 1.0, %v780
  %v782 = vmul.f32 %v779, %v781
  %v783 = vadd.f32 %v779, %v782
  %vm784 = vweird.f32 %v778
  %vm785 = vweird.f32 %v779
  %vm786 = vmor %vm784, %vm785
  %v787 = vsel %vm786, %v779, %v783
  %v788 = vand.u32 2147483647, %v778
  %vm789 = vcmp.eq.f32.partialorder %v788, 8.507059e+37
  %v790 = vand.u32 %v778, 2147483648
  %v791 = vor.u32 1.1754944e-38, %v790
  %v792 = vsel %vm789, %v791, %v787
  %v793 = vmul.f32 1.0, %v792
  %v794 = vtanh.pop %v774
  %v795 = vmul.f32 %v793, %v741
  %797 = vrot.lane.b32.xlu0 %v794, 64
  %v798 = vpop.permute.xlu0 %797
  %v800 = vmul.f32 %v793, %v798
  %802 = vrot.lane.b32.xlu0 %v800, 32
  %v803 = vpop.permute.xlu0 %802
  %v805 = vadd.f32 %v795, %v803
  %v806 = vtanh.pop %v805
  %808 = vrot.lane.b32.xlu0 %v806, 64
  %v809 = vpop.permute.xlu0 %808
  %v811 = vmul.f32 %v793, %v809
  %v812 = vld [vmem:[#allocation2 + $0x4] sm:$0x3]
  %814 = vrot.lane.b32.xlu0 %v811, 32
  %v815 = vpop.permute.xlu0 %814
  %v816 = vsel %vm110, %v815, 0
  %818 = vmatpush.msra.mxu0 0.0
  %819 = vmatpush.msra.mxu0 0.0
  %820 = vmatpush.msra.mxu0 0.0
  %821 = vmatpush.msra.mxu0 0.0
  %822 = vmatpush.msra.mxu0 0.0
  %823 = vmatpush.msra.mxu0 0.0
  %824 = vmatpush.msra.mxu0 0.0
  %825 = vmatpush.msra.mxu0 0.0
  %826 = vmatpush.msra.mxu0 0.0
  %827 = vmatpush.msra.mxu0 0.0
  %828 = vmatpush.msra.mxu0 0.0
  %829 = vmatpush.msra.mxu0 0.0
  %830 = vmatpush.msra.mxu0 %v688
  %831 = vmatpush.msra.mxu0 %v687
  %832 = vmatpush.msra.mxu0 %v686
  %833 = vmatpush.msra.mxu0 %v685
  %834 = vmatmul.f32.gmra.mxu0 %v816
  %v835 = vpop.f32.mrf.mxu0
  %v836 = vadd.f32 0.0, %v835
  %837 = vdwg.mxu0
  %v838 = vadd.f32 %v812, %v836
  %v839 = vxor.u32 %v838, 2147483648
  %v840 = vmul.f32 %v839, 1.442695
  %v841 = vpow.pop %v840
  %v842 = vadd.f32 %v841, 1.0
  %v843 = vrcp.pop %v842
  %v844 = vmul.f32 %v842, %v843
  %v845 = vsub.f32 1.0, %v844
  %v846 = vmul.f32 %v843, %v845
  %v847 = vadd.f32 %v843, %v846
  %vm848 = vweird.f32 %v842
  %vm849 = vweird.f32 %v843
  %vm850 = vmor %vm848, %vm849
  %v851 = vsel %vm850, %v843, %v847
  %v852 = vand.u32 2147483647, %v842
  %vm853 = vcmp.eq.f32.partialorder %v852, 8.507059e+37
  %v854 = vand.u32 %v842, 2147483648
  %v855 = vor.u32 1.1754944e-38, %v854
  %v856 = vsel %vm853, %v855, %v851
  %v857 = vmul.f32 1.0, %v856
  %v858 = vtanh.pop %v838
  %v859 = vmul.f32 %v857, %v805
  %861 = vrot.lane.b32.xlu0 %v858, 64
  %v862 = vpop.permute.xlu0 %861
  %v864 = vmul.f32 %v857, %v862
  %866 = vrot.lane.b32.xlu0 %v864, 32
  %v867 = vpop.permute.xlu0 %866
  %v869 = vadd.f32 %v859, %v867
  %v870 = vtanh.pop %v869
  %872 = vrot.lane.b32.xlu0 %v870, 64
  %v873 = vpop.permute.xlu0 %872
  %v875 = vmul.f32 %v857, %v873
  %v876 = vld [vmem:[#allocation2 + $0x6] sm:$0x3]
  %878 = vrot.lane.b32.xlu0 %v875, 32
  %v879 = vpop.permute.xlu0 %878
  %v880 = vsel %vm110, %v879, 0
  %882 = vmatpush.msra.mxu0 0.0
  %883 = vmatpush.msra.mxu0 0.0
  %884 = vmatpush.msra.mxu0 0.0
  %885 = vmatpush.msra.mxu0 0.0
  %886 = vmatpush.msra.mxu0 0.0
  %887 = vmatpush.msra.mxu0 0.0
  %888 = vmatpush.msra.mxu0 0.0
  %889 = vmatpush.msra.mxu0 0.0
  %890 = vmatpush.msra.mxu0 0.0
  %891 = vmatpush.msra.mxu0 0.0
  %892 = vmatpush.msra.mxu0 0.0
  %893 = vmatpush.msra.mxu0 0.0
  %894 = vmatpush.msra.mxu0 %v688
  %895 = vmatpush.msra.mxu0 %v687
  %896 = vmatpush.msra.mxu0 %v686
  %897 = vmatpush.msra.mxu0 %v685
  %898 = vmatmul.f32.gmra.mxu0 %v880
  %v899 = vpop.f32.mrf.mxu0
  %v900 = vadd.f32 0.0, %v899
  %901 = vdwg.mxu0
  %v902 = vadd.f32 %v876, %v900
  %v903 = vxor.u32 %v902, 2147483648
  %v904 = vmul.f32 %v903, 1.442695
  %v905 = vpow.pop %v904
  %v906 = vadd.f32 %v905, 1.0
  %v907 = vrcp.pop %v906
  %v908 = vmul.f32 %v906, %v907
  %v909 = vsub.f32 1.0, %v908
  %v910 = vmul.f32 %v907, %v909
  %v911 = vadd.f32 %v907, %v910
  %vm912 = vweird.f32 %v906
  %vm913 = vweird.f32 %v907
  %vm914 = vmor %vm912, %vm913
  %v915 = vsel %vm914, %v907, %v911
  %v916 = vand.u32 2147483647, %v906
  %vm917 = vcmp.eq.f32.partialorder %v916, 8.507059e+37
  %v918 = vand.u32 %v906, 2147483648
  %v919 = vor.u32 1.1754944e-38, %v918
  %v920 = vsel %vm917, %v919, %v915
  %v921 = vmul.f32 1.0, %v920
  %v922 = vtanh.pop %v902
  %v923 = vmul.f32 %v921, %v869
  %925 = vrot.lane.b32.xlu0 %v922, 64
  %v926 = vpop.permute.xlu0 %925
  %v928 = vmul.f32 %v921, %v926
  %930 = vrot.lane.b32.xlu0 %v928, 32
  %v931 = vpop.permute.xlu0 %930
  %v933 = vadd.f32 %v923, %v931
  %v934 = vtanh.pop %v933
  %936 = vrot.lane.b32.xlu0 %v934, 64
  %v937 = vpop.permute.xlu0 %936
  %v939 = vmul.f32 %v921, %v937
  %v940 = vld [vmem:[#allocation2 + $0x8] sm:$0x3]
  %942 = vrot.lane.b32.xlu0 %v939, 32
  %v943 = vpop.permute.xlu0 %942
  %v944 = vsel %vm110, %v943, 0
  %946 = vmatpush.msra.mxu0 0.0
  %947 = vmatpush.msra.mxu0 0.0
  %948 = vmatpush.msra.mxu0 0.0
  %949 = vmatpush.msra.mxu0 0.0
  %950 = vmatpush.msra.mxu0 0.0
  %951 = vmatpush.msra.mxu0 0.0
  %952 = vmatpush.msra.mxu0 0.0
  %953 = vmatpush.msra.mxu0 0.0
  %954 = vmatpush.msra.mxu0 0.0
  %955 = vmatpush.msra.mxu0 0.0
  %956 = vmatpush.msra.mxu0 0.0
  %957 = vmatpush.msra.mxu0 0.0
  %958 = vmatpush.msra.mxu0 %v688
  %959 = vmatpush.msra.mxu0 %v687
  %960 = vmatpush.msra.mxu0 %v686
  %961 = vmatpush.msra.mxu0 %v685
  %962 = vmatmul.f32.gmra.mxu0 %v944
  %v963 = vpop.f32.mrf.mxu0
  %v964 = vadd.f32 0.0, %v963
  %965 = vdwg.mxu0
  %v966 = vadd.f32 %v940, %v964
  %v967 = vxor.u32 %v966, 2147483648
  %v968 = vmul.f32 %v967, 1.442695
  %v969 = vpow.pop %v968
  %v970 = vadd.f32 %v969, 1.0
  %v971 = vrcp.pop %v970
  %v972 = vmul.f32 %v970, %v971
  %v973 = vsub.f32 1.0, %v972
  %v974 = vmul.f32 %v971, %v973
  %v975 = vadd.f32 %v971, %v974
  %vm976 = vweird.f32 %v970
  %vm977 = vweird.f32 %v971
  %vm978 = vmor %vm976, %vm977
  %v979 = vsel %vm978, %v971, %v975
  %v980 = vand.u32 2147483647, %v970
  %vm981 = vcmp.eq.f32.partialorder %v980, 8.507059e+37
  %v982 = vand.u32 %v970, 2147483648
  %v983 = vor.u32 1.1754944e-38, %v982
  %v984 = vsel %vm981, %v983, %v979
  %v985 = vmul.f32 1.0, %v984
  %v986 = vtanh.pop %v966
  %v987 = vmul.f32 %v985, %v933
  %989 = vrot.lane.b32.xlu0 %v986, 64
  %v990 = vpop.permute.xlu0 %989
  %v992 = vmul.f32 %v985, %v990
  %994 = vrot.lane.b32.xlu0 %v992, 32
  %v995 = vpop.permute.xlu0 %994
  %v997 = vadd.f32 %v987, %v995
  %v998 = vtanh.pop %v997
  %1000 = vrot.lane.b32.xlu0 %v998, 64
  %v1001 = vpop.permute.xlu0 %1000
  %v1003 = vmul.f32 %v985, %v1001
  %v1004 = vld [vmem:[#allocation2 + $0xa] sm:$0x3]
  %1006 = vrot.lane.b32.xlu0 %v1003, 32
  %v1007 = vpop.permute.xlu0 %1006
  %v1008 = vsel %vm110, %v1007, 0
  %1010 = vmatpush.msra.mxu0 0.0
  %1011 = vmatpush.msra.mxu0 0.0
  %1012 = vmatpush.msra.mxu0 0.0
  %1013 = vmatpush.msra.mxu0 0.0
  %1014 = vmatpush.msra.mxu0 0.0
  %1015 = vmatpush.msra.mxu0 0.0
  %1016 = vmatpush.msra.mxu0 0.0
  %1017 = vmatpush.msra.mxu0 0.0
  %1018 = vmatpush.msra.mxu0 0.0
  %1019 = vmatpush.msra.mxu0 0.0
  %1020 = vmatpush.msra.mxu0 0.0
  %1021 = vmatpush.msra.mxu0 0.0
  %1022 = vmatpush.msra.mxu0 %v688
  %1023 = vmatpush.msra.mxu0 %v687
  %1024 = vmatpush.msra.mxu0 %v686
  %1025 = vmatpush.msra.mxu0 %v685
  %1026 = vmatmul.f32.gmra.mxu0 %v1008
  %v1027 = vpop.f32.mrf.mxu0
  %v1028 = vadd.f32 0.0, %v1027
  %1029 = vdwg.mxu0
  %v1030 = vadd.f32 %v1004, %v1028
  %v1031 = vxor.u32 %v1030, 2147483648
  %v1032 = vmul.f32 %v1031, 1.442695
  %v1033 = vpow.pop %v1032
  %v1034 = vadd.f32 %v1033, 1.0
  %v1035 = vrcp.pop %v1034
  %v1036 = vmul.f32 %v1034, %v1035
  %v1037 = vsub.f32 1.0, %v1036
  %v1038 = vmul.f32 %v1035, %v1037
  %v1039 = vadd.f32 %v1035, %v1038
  %vm1040 = vweird.f32 %v1034
  %vm1041 = vweird.f32 %v1035
  %vm1042 = vmor %vm1040, %vm1041
  %v1043 = vsel %vm1042, %v1035, %v1039
  %v1044 = vand.u32 2147483647, %v1034
  %vm1045 = vcmp.eq.f32.partialorder %v1044, 8.507059e+37
  %v1046 = vand.u32 %v1034, 2147483648
  %v1047 = vor.u32 1.1754944e-38, %v1046
  %v1048 = vsel %vm1045, %v1047, %v1043
  %v1049 = vmul.f32 1.0, %v1048
  %v1050 = vtanh.pop %v1030
  %v1051 = vmul.f32 %v1049, %v997
  %1053 = vrot.lane.b32.xlu0 %v1050, 64
  %v1054 = vpop.permute.xlu0 %1053
  %v1056 = vmul.f32 %v1049, %v1054
  %1058 = vrot.lane.b32.xlu0 %v1056, 32
  %v1059 = vpop.permute.xlu0 %1058
  %v1061 = vadd.f32 %v1051, %v1059
  %v1062 = vtanh.pop %v1061
  %1064 = vrot.lane.b32.xlu0 %v1062, 64
  %v1065 = vpop.permute.xlu0 %1064
  %v1067 = vmul.f32 %v1049, %v1065
  %v1068 = vld [vmem:[#allocation2 + $0xc] sm:$0x3]
  %1070 = vrot.lane.b32.xlu0 %v1067, 32
  %v1071 = vpop.permute.xlu0 %1070
  %v1072 = vsel %vm110, %v1071, 0
  %1074 = vmatpush.msra.mxu0 0.0
  %1075 = vmatpush.msra.mxu0 0.0
  %1076 = vmatpush.msra.mxu0 0.0
  %1077 = vmatpush.msra.mxu0 0.0
  %1078 = vmatpush.msra.mxu0 0.0
  %1079 = vmatpush.msra.mxu0 0.0
  %1080 = vmatpush.msra.mxu0 0.0
  %1081 = vmatpush.msra.mxu0 0.0
  %1082 = vmatpush.msra.mxu0 0.0
  %1083 = vmatpush.msra.mxu0 0.0
  %1084 = vmatpush.msra.mxu0 0.0
  %1085 = vmatpush.msra.mxu0 0.0
  %1086 = vmatpush.msra.mxu0 %v688
  %1087 = vmatpush.msra.mxu0 %v687
  %1088 = vmatpush.msra.mxu0 %v686
  %1089 = vmatpush.msra.mxu0 %v685
  %1090 = vmatmul.f32.gmra.mxu0 %v1072
  %v1091 = vpop.f32.mrf.mxu0
  %v1092 = vadd.f32 0.0, %v1091
  %1093 = vdwg.mxu0
  %v1094 = vadd.f32 %v1068, %v1092
  %v1095 = vxor.u32 %v1094, 2147483648
  %v1096 = vmul.f32 %v1095, 1.442695
  %v1097 = vpow.pop %v1096
  %v1098 = vadd.f32 %v1097, 1.0
  %v1099 = vrcp.pop %v1098
  %v1100 = vmul.f32 %v1098, %v1099
  %v1101 = vsub.f32 1.0, %v1100
  %v1102 = vmul.f32 %v1099, %v1101
  %v1103 = vadd.f32 %v1099, %v1102
  %vm1104 = vweird.f32 %v1098
  %vm1105 = vweird.f32 %v1099
  %vm1106 = vmor %vm1104, %vm1105
  %v1107 = vsel %vm1106, %v1099, %v1103
  %v1108 = vand.u32 2147483647, %v1098
  %vm1109 = vcmp.eq.f32.partialorder %v1108, 8.507059e+37
  %v1110 = vand.u32 %v1098, 2147483648
  %v1111 = vor.u32 1.1754944e-38, %v1110
  %v1112 = vsel %vm1109, %v1111, %v1107
  %v1113 = vmul.f32 1.0, %v1112
  %v1114 = vtanh.pop %v1094
  %v1115 = vmul.f32 %v1113, %v1061
  %1117 = vrot.lane.b32.xlu0 %v1114, 64
  %v1118 = vpop.permute.xlu0 %1117
  %v1120 = vmul.f32 %v1113, %v1118
  %1122 = vrot.lane.b32.xlu0 %v1120, 32
  %v1123 = vpop.permute.xlu0 %1122
  %v1125 = vadd.f32 %v1115, %v1123
  %v1126 = vtanh.pop %v1125
  %1128 = vrot.lane.b32.xlu0 %v1126, 64
  %v1129 = vpop.permute.xlu0 %1128
  %v1131 = vmul.f32 %v1113, %v1129
  %v1132 = vld [vmem:[#allocation2 + $0xe] sm:$0x3]
  %1134 = vrot.lane.b32.xlu0 %v1131, 32
  %v1135 = vpop.permute.xlu0 %1134
  %v1136 = vsel %vm110, %v1135, 0
  %1138 = vmatpush.msra.mxu0 0.0
  %1139 = vmatpush.msra.mxu0 0.0
  %1140 = vmatpush.msra.mxu0 0.0
  %1141 = vmatpush.msra.mxu0 0.0
  %1142 = vmatpush.msra.mxu0 0.0
  %1143 = vmatpush.msra.mxu0 0.0
  %1144 = vmatpush.msra.mxu0 0.0
  %1145 = vmatpush.msra.mxu0 0.0
  %1146 = vmatpush.msra.mxu0 0.0
  %1147 = vmatpush.msra.mxu0 0.0
  %1148 = vmatpush.msra.mxu0 0.0
  %1149 = vmatpush.msra.mxu0 0.0
  %1150 = vmatpush.msra.mxu0 %v688
  %1151 = vmatpush.msra.mxu0 %v687
  %1152 = vmatpush.msra.mxu0 %v686
  %1153 = vmatpush.msra.mxu0 %v685
  %1154 = vmatmul.f32.gmra.mxu0 %v1136
  %v1155 = vpop.f32.mrf.mxu0
  %v1156 = vadd.f32 0.0, %v1155
  %1157 = vdwg.mxu0
  %v1158 = vadd.f32 %v1132, %v1156
  %v1159 = vxor.u32 %v1158, 2147483648
  %v1160 = vmul.f32 %v1159, 1.442695
  %v1161 = vpow.pop %v1160
  %v1162 = vadd.f32 %v1161, 1.0
  %v1163 = vrcp.pop %v1162
  %v1164 = vmul.f32 %v1162, %v1163
  %v1165 = vsub.f32 1.0, %v1164
  %v1166 = vmul.f32 %v1163, %v1165
  %v1167 = vadd.f32 %v1163, %v1166
  %vm1168 = vweird.f32 %v1162
  %vm1169 = vweird.f32 %v1163
  %vm1170 = vmor %vm1168, %vm1169
  %v1171 = vsel %vm1170, %v1163, %v1167
  %v1172 = vand.u32 2147483647, %v1162
  %vm1173 = vcmp.eq.f32.partialorder %v1172, 8.507059e+37
  %v1174 = vand.u32 %v1162, 2147483648
  %v1175 = vor.u32 1.1754944e-38, %v1174
  %v1176 = vsel %vm1173, %v1175, %v1171
  %v1177 = vmul.f32 1.0, %v1176
  %v1178 = vtanh.pop %v1158
  %v1179 = vmul.f32 %v1177, %v1125
  %1181 = vrot.lane.b32.xlu0 %v1178, 64
  %v1182 = vpop.permute.xlu0 %1181
  %v1184 = vmul.f32 %v1177, %v1182
  %1186 = vrot.lane.b32.xlu0 %v1184, 32
  %v1187 = vpop.permute.xlu0 %1186
  %v1189 = vadd.f32 %v1179, %v1187
  %v1190 = vtanh.pop %v1189
  %1192 = vrot.lane.b32.xlu0 %v1190, 64
  %v1193 = vpop.permute.xlu0 %1192
  %v1195 = vmul.f32 %v1177, %v1193
  %v1196 = vld [vmem:[%s8] sm:$0xff]
  %v1197 = vld [vmem:[%s8 + $0x8] sm:$0xff]
  %v1198 = vld [vmem:[%s8 + $0x10] sm:$0xff]
  %v1199 = vld [vmem:[%s8 + $0x18] sm:$0xff]
  %v1200 = vld [vmem:[%s9] sm:$0x1]
  %v1202 = vperm.slane %v1200, 0
  %1205 = vrot.lane.b32.xlu0 %v1195, 32
  %v1206 = vpop.permute.xlu0 %1205
  %v1207 = vsel %vm110, %v1206, 0
  %1209 = vmatpush.msra.mxu0 0.0
  %1210 = vmatpush.msra.mxu0 0.0
  %1211 = vmatpush.msra.mxu0 0.0
  %1212 = vmatpush.msra.mxu0 0.0
  %1213 = vmatpush.msra.mxu0 0.0
  %1214 = vmatpush.msra.mxu0 0.0
  %1215 = vmatpush.msra.mxu0 0.0
  %1216 = vmatpush.msra.mxu0 0.0
  %1217 = vmatpush.msra.mxu0 0.0
  %1218 = vmatpush.msra.mxu0 0.0
  %1219 = vmatpush.msra.mxu0 0.0
  %1220 = vmatpush.msra.mxu0 0.0
  %1221 = vmatpush.msra.mxu0 %v1199
  %1222 = vmatpush.msra.mxu0 %v1198
  %1223 = vmatpush.msra.mxu0 %v1197
  %1224 = vmatpush.msra.mxu0 %v1196
  %1225 = vmatmul.f32.gmra.mxu0 %v1207
  %v1226 = vpop.f32.mrf.mxu0
  %v1227 = vadd.f32 %v1202, %v1226
  %1228 = vdwg.mxu0
  %v1229 = vmul.f32 %v1227, 0.5
  %v1230 = vmul.f32 %v1229, 1.442695
  %v1231 = vpow.pop %v1230
  %v1232 = vld [vmem:[%s1] sm:$0x3]
  %1234 = vrot.lane.b32.xlu0 %v1231, 96
  %v1235 = vpop.permute.xlu0 %1234
  %v1237 = vmul.f32 %v1232, %v1235
  %v1238 = vadd.f32 %v1237, %v1227
  %v1239 = vadd.f32 %v1227, 1.0
  %v1240 = vmul.f32 %v1227, %v1227
  %1242 = vrot.lane.b32.xlu0 %v1240, 32
  %v1243 = vpop.permute.xlu0 %1242
  %v1245 = vsub.f32 %v1239, %v1243
  %v1246 = vmul.f32 %v1227, 1.442695
  %v1247 = vpow.pop %v1246
  %v1248 = vsub.f32 %v1245, %v1247
  %1250 = vrot.lane.b32.xlu0 %v1248, 96
  %v1251 = vpop.permute.xlu0 %1250
  %vm1253 = vcmask 254976
  %v1254 = vsel %vm1253, %v1251, 0.0
  %1255 = vadd.xlane.f32.xlu0 %v1254
  %v1256 = vpop.xlane.xlu0 %1255
  %v1257 = vsub.f32 0.0, %v1256
  %1259 = vrot.lane.b32.xlu0 %v1227, 32
  %v1260 = vpop.permute.xlu0 %1259
  %v1262 = vsel %vm110, %v1238, %v1260
  %vm1263 = vcmask 523264
  %v1264 = vsel %vm1263, %v1262, %v1260
  %vm1265 = vcmask 785408
  %v1266 = vsel %vm1265, %v1264, %v1257
  %vm1267 = vcmask 787456
  %1268 = vst.msk [vmem:[%s18] sm:$0x3] %vm1267, %v1266
  %v1269 = vld [vmem:[%s10] sm:$0xff]
  %v1270 = vld [vmem:[%s10 + $0x8] sm:$0xff]
  %v1271 = vld [vmem:[%s10 + $0x10] sm:$0xff]
  %v1272 = vld [vmem:[%s10 + $0x18] sm:$0xff]
  %v1273 = vld [vmem:[%s11] sm:$0x1]
  %v1275 = vperm.slane %v1273, 0
  %v1278 = vsel %vm110, %v1238, 0
  %1280 = vmatpush.msra.mxu0 0.0
  %1281 = vmatpush.msra.mxu0 0.0
  %1282 = vmatpush.msra.mxu0 0.0
  %1283 = vmatpush.msra.mxu0 0.0
  %1284 = vmatpush.msra.mxu0 0.0
  %1285 = vmatpush.msra.mxu0 0.0
  %1286 = vmatpush.msra.mxu0 0.0
  %1287 = vmatpush.msra.mxu0 0.0
  %1288 = vmatpush.msra.mxu0 0.0
  %1289 = vmatpush.msra.mxu0 0.0
  %1290 = vmatpush.msra.mxu0 0.0
  %1291 = vmatpush.msra.mxu0 0.0
  %1292 = vmatpush.msra.mxu0 %v1272
  %1293 = vmatpush.msra.mxu0 %v1271
  %1294 = vmatpush.msra.mxu0 %v1270
  %1295 = vmatpush.msra.mxu0 %v1269
  %1296 = vmatmul.f32.gmra.mxu0 %v1278
  %v1297 = vpop.f32.mrf.mxu0
  %v1298 = vadd.f32 %v1275, %v1297
  %1299 = vdwg.mxu0
  %vm1300 = vcmp.ge.f32.partialorder %v1298, 0.0
  %v1301 = vmul.f32 %v1298, 0.2
  %v1302 = vsel %vm1300, %v1298, %v1301
  %v1303 = vld [vmem:[%s12] sm:$0xff]
  %v1304 = vld [vmem:[%s12 + $0x8] sm:$0xff]
  %v1305 = vld [vmem:[%s12 + $0x10] sm:$0xff]
  %v1306 = vld [vmem:[%s12 + $0x18] sm:$0xff]
  %v1307 = vld [vmem:[%s14] sm:$0x1]
  %v1309 = vperm.slane %v1307, 0
  %v1312 = vsel %vm110, %v1302, 0
  %1314 = vmatpush.msra.mxu0 0.0
  %1315 = vmatpush.msra.mxu0 0.0
  %1316 = vmatpush.msra.mxu0 0.0
  %1317 = vmatpush.msra.mxu0 0.0
  %1318 = vmatpush.msra.mxu0 0.0
  %1319 = vmatpush.msra.mxu0 0.0
  %1320 = vmatpush.msra.mxu0 0.0
  %1321 = vmatpush.msra.mxu0 0.0
  %1322 = vmatpush.msra.mxu0 0.0
  %1323 = vmatpush.msra.mxu0 0.0
  %1324 = vmatpush.msra.mxu0 0.0
  %1325 = vmatpush.msra.mxu0 0.0
  %1326 = vmatpush.msra.mxu0 %v1306
  %1327 = vmatpush.msra.mxu0 %v1305
  %1328 = vmatpush.msra.mxu0 %v1304
  %1329 = vmatpush.msra.mxu0 %v1303
  %1330 = vmatmul.f32.gmra.mxu0 %v1312
  %v1331 = vpop.f32.mrf.mxu0
  %v1332 = vadd.f32 %v1309, %v1331
  %1333 = vdwg.mxu0
  %v1334 = vld [vmem:[%s13] sm:$0xff]
  %v1335 = vld [vmem:[%s13 + $0x8] sm:$0xff]
  %v1336 = vld [vmem:[%s13 + $0x10] sm:$0xff]
  %v1337 = vld [vmem:[%s13 + $0x18] sm:$0xff]
  %1338 = vmatpush.msra.mxu0 0.0
  %1339 = vmatpush.msra.mxu0 0.0
  %1340 = vmatpush.msra.mxu0 0.0
  %1341 = vmatpush.msra.mxu0 0.0
  %1342 = vmatpush.msra.mxu0 0.0
  %1343 = vmatpush.msra.mxu0 0.0
  %1344 = vmatpush.msra.mxu0 0.0
  %1345 = vmatpush.msra.mxu0 0.0
  %1346 = vmatpush.msra.mxu0 0.0
  %1347 = vmatpush.msra.mxu0 0.0
  %1348 = vmatpush.msra.mxu0 0.0
  %1349 = vmatpush.msra.mxu0 0.0
  %1350 = vmatpush.msra.mxu0 %v1337
  %1351 = vmatpush.msra.mxu0 %v1336
  %1352 = vmatpush.msra.mxu0 %v1335
  %1353 = vmatpush.msra.mxu0 %v1334
  %1354 = vmatmul.f32.gmra.mxu0 %v112
  %v1355 = vpop.f32.mrf.mxu0
  %v1356 = vadd.f32 0.0, %v1355
  %1357 = vdwg.mxu0
  %v1358 = vadd.f32 %v1332, %v1356
  %v1359 = vxor.u32 %v1358, 2147483648
  %v1360 = vmul.f32 %v1359, 1.442695
  %v1361 = vpow.pop %v1360
  %v1362 = vadd.f32 %v1361, 1.0
  %v1363 = vrcp.pop %v1362
  %v1364 = vmul.f32 %v1362, %v1363
  %v1365 = vsub.f32 1.0, %v1364
  %v1366 = vmul.f32 %v1363, %v1365
  %v1367 = vadd.f32 %v1363, %v1366
  %vm1368 = vweird.f32 %v1362
  %vm1369 = vweird.f32 %v1363
  %vm1370 = vmor %vm1368, %vm1369
  %v1371 = vsel %vm1370, %v1363, %v1367
  %v1372 = vand.u32 2147483647, %v1362
  %vm1373 = vcmp.eq.f32.partialorder %v1372, 8.507059e+37
  %v1374 = vand.u32 %v1362, 2147483648
  %v1375 = vor.u32 1.1754944e-38, %v1374
  %v1376 = vsel %vm1373, %v1375, %v1371
  %v1377 = vmul.f32 1.0, %v1376
  %v1378 = vtanh.pop %v1358
  %v1379 = vmul.f32 %v1377, 0.0
  %1381 = vrot.lane.b32.xlu0 %v1378, 64
  %v1382 = vpop.permute.xlu0 %1381
  %v1384 = vmul.f32 %v1377, %v1382
  %1386 = vrot.lane.b32.xlu0 %v1384, 32
  %v1387 = vpop.permute.xlu0 %1386
  %v1389 = vadd.f32 %v1379, %v1387
  %v1390 = vtanh.pop %v1389
  %1392 = vrot.lane.b32.xlu0 %v1390, 64
  %v1393 = vpop.permute.xlu0 %1392
  %v1395 = vmul.f32 %v1377, %v1393
  %1397 = vrot.lane.b32.xlu0 %v1395, 32
  %v1398 = vpop.permute.xlu0 %1397
  %v1399 = vsel %vm110, %v1398, 0
  %1401 = vmatpush.msra.mxu0 0.0
  %1402 = vmatpush.msra.mxu0 0.0
  %1403 = vmatpush.msra.mxu0 0.0
  %1404 = vmatpush.msra.mxu0 0.0
  %1405 = vmatpush.msra.mxu0 0.0
  %1406 = vmatpush.msra.mxu0 0.0
  %1407 = vmatpush.msra.mxu0 0.0
  %1408 = vmatpush.msra.mxu0 0.0
  %1409 = vmatpush.msra.mxu0 0.0
  %1410 = vmatpush.msra.mxu0 0.0
  %1411 = vmatpush.msra.mxu0 0.0
  %1412 = vmatpush.msra.mxu0 0.0
  %1413 = vmatpush.msra.mxu0 %v1337
  %1414 = vmatpush.msra.mxu0 %v1336
  %1415 = vmatpush.msra.mxu0 %v1335
  %1416 = vmatpush.msra.mxu0 %v1334
  %1417 = vmatmul.f32.gmra.mxu0 %v1399
  %v1418 = vpop.f32.mrf.mxu0
  %v1419 = vadd.f32 0.0, %v1418
  %1420 = vdwg.mxu0
  %v1421 = vadd.f32 %v1332, %v1419
  %v1422 = vxor.u32 %v1421, 2147483648
  %v1423 = vmul.f32 %v1422, 1.442695
  %v1424 = vpow.pop %v1423
  %v1425 = vadd.f32 %v1424, 1.0
  %v1426 = vrcp.pop %v1425
  %v1427 = vmul.f32 %v1425, %v1426
  %v1428 = vsub.f32 1.0, %v1427
  %v1429 = vmul.f32 %v1426, %v1428
  %v1430 = vadd.f32 %v1426, %v1429
  %vm1431 = vweird.f32 %v1425
  %vm1432 = vweird.f32 %v1426
  %vm1433 = vmor %vm1431, %vm1432
  %v1434 = vsel %vm1433, %v1426, %v1430
  %v1435 = vand.u32 2147483647, %v1425
  %vm1436 = vcmp.eq.f32.partialorder %v1435, 8.507059e+37
  %v1437 = vand.u32 %v1425, 2147483648
  %v1438 = vor.u32 1.1754944e-38, %v1437
  %v1439 = vsel %vm1436, %v1438, %v1434
  %v1440 = vmul.f32 1.0, %v1439
  %v1441 = vtanh.pop %v1421
  %v1442 = vmul.f32 %v1440, %v1389
  %1444 = vrot.lane.b32.xlu0 %v1441, 64
  %v1445 = vpop.permute.xlu0 %1444
  %v1447 = vmul.f32 %v1440, %v1445
  %1449 = vrot.lane.b32.xlu0 %v1447, 32
  %v1450 = vpop.permute.xlu0 %1449
  %v1452 = vadd.f32 %v1442, %v1450
  %v1453 = vtanh.pop %v1452
  %1455 = vrot.lane.b32.xlu0 %v1453, 64
  %v1456 = vpop.permute.xlu0 %1455
  %v1458 = vmul.f32 %v1440, %v1456
  %1460 = vrot.lane.b32.xlu0 %v1458, 32
  %v1461 = vpop.permute.xlu0 %1460
  %v1462 = vsel %vm110, %v1461, 0
  %1464 = vmatpush.msra.mxu0 0.0
  %1465 = vmatpush.msra.mxu0 0.0
  %1466 = vmatpush.msra.mxu0 0.0
  %1467 = vmatpush.msra.mxu0 0.0
  %1468 = vmatpush.msra.mxu0 0.0
  %1469 = vmatpush.msra.mxu0 0.0
  %1470 = vmatpush.msra.mxu0 0.0
  %1471 = vmatpush.msra.mxu0 0.0
  %1472 = vmatpush.msra.mxu0 0.0
  %1473 = vmatpush.msra.mxu0 0.0
  %1474 = vmatpush.msra.mxu0 0.0
  %1475 = vmatpush.msra.mxu0 0.0
  %1476 = vmatpush.msra.mxu0 %v1337
  %1477 = vmatpush.msra.mxu0 %v1336
  %1478 = vmatpush.msra.mxu0 %v1335
  %1479 = vmatpush.msra.mxu0 %v1334
  %1480 = vmatmul.f32.gmra.mxu0 %v1462
  %v1481 = vpop.f32.mrf.mxu0
  %v1482 = vadd.f32 0.0, %v1481
  %1483 = vdwg.mxu0
  %v1484 = vadd.f32 %v1332, %v1482
  %v1485 = vxor.u32 %v1484, 2147483648
  %v1486 = vmul.f32 %v1485, 1.442695
  %v1487 = vpow.pop %v1486
  %v1488 = vadd.f32 %v1487, 1.0
  %v1489 = vrcp.pop %v1488
  %v1490 = vmul.f32 %v1488, %v1489
  %v1491 = vsub.f32 1.0, %v1490
  %v1492 = vmul.f32 %v1489, %v1491
  %v1493 = vadd.f32 %v1489, %v1492
  %vm1494 = vweird.f32 %v1488
  %vm1495 = vweird.f32 %v1489
  %vm1496 = vmor %vm1494, %vm1495
  %v1497 = vsel %vm1496, %v1489, %v1493
  %v1498 = vand.u32 2147483647, %v1488
  %vm1499 = vcmp.eq.f32.partialorder %v1498, 8.507059e+37
  %v1500 = vand.u32 %v1488, 2147483648
  %v1501 = vor.u32 1.1754944e-38, %v1500
  %v1502 = vsel %vm1499, %v1501, %v1497
  %v1503 = vmul.f32 1.0, %v1502
  %v1504 = vtanh.pop %v1484
  %v1505 = vmul.f32 %v1503, %v1452
  %1507 = vrot.lane.b32.xlu0 %v1504, 64
  %v1508 = vpop.permute.xlu0 %1507
  %v1510 = vmul.f32 %v1503, %v1508
  %1512 = vrot.lane.b32.xlu0 %v1510, 32
  %v1513 = vpop.permute.xlu0 %1512
  %v1515 = vadd.f32 %v1505, %v1513
  %v1516 = vtanh.pop %v1515
  %1518 = vrot.lane.b32.xlu0 %v1516, 64
  %v1519 = vpop.permute.xlu0 %1518
  %v1521 = vmul.f32 %v1503, %v1519
  %1523 = vrot.lane.b32.xlu0 %v1521, 32
  %v1524 = vpop.permute.xlu0 %1523
  %v1525 = vsel %vm110, %v1524, 0
  %1527 = vmatpush.msra.mxu0 0.0
  %1528 = vmatpush.msra.mxu0 0.0
  %1529 = vmatpush.msra.mxu0 0.0
  %1530 = vmatpush.msra.mxu0 0.0
  %1531 = vmatpush.msra.mxu0 0.0
  %1532 = vmatpush.msra.mxu0 0.0
  %1533 = vmatpush.msra.mxu0 0.0
  %1534 = vmatpush.msra.mxu0 0.0
  %1535 = vmatpush.msra.mxu0 0.0
  %1536 = vmatpush.msra.mxu0 0.0
  %1537 = vmatpush.msra.mxu0 0.0
  %1538 = vmatpush.msra.mxu0 0.0
  %1539 = vmatpush.msra.mxu0 %v1337
  %1540 = vmatpush.msra.mxu0 %v1336
  %1541 = vmatpush.msra.mxu0 %v1335
  %1542 = vmatpush.msra.mxu0 %v1334
  %1543 = vmatmul.f32.gmra.mxu0 %v1525
  %v1544 = vpop.f32.mrf.mxu0
  %v1545 = vadd.f32 0.0, %v1544
  %1546 = vdwg.mxu0
  %v1547 = vadd.f32 %v1332, %v1545
  %v1548 = vxor.u32 %v1547, 2147483648
  %v1549 = vmul.f32 %v1548, 1.442695
  %v1550 = vpow.pop %v1549
  %v1551 = vadd.f32 %v1550, 1.0
  %v1552 = vrcp.pop %v1551
  %v1553 = vmul.f32 %v1551, %v1552
  %v1554 = vsub.f32 1.0, %v1553
  %v1555 = vmul.f32 %v1552, %v1554
  %v1556 = vadd.f32 %v1552, %v1555
  %vm1557 = vweird.f32 %v1551
  %vm1558 = vweird.f32 %v1552
  %vm1559 = vmor %vm1557, %vm1558
  %v1560 = vsel %vm1559, %v1552, %v1556
  %v1561 = vand.u32 2147483647, %v1551
  %vm1562 = vcmp.eq.f32.partialorder %v1561, 8.507059e+37
  %v1563 = vand.u32 %v1551, 2147483648
  %v1564 = vor.u32 1.1754944e-38, %v1563
  %v1565 = vsel %vm1562, %v1564, %v1560
  %v1566 = vmul.f32 1.0, %v1565
  %v1567 = vtanh.pop %v1547
  %v1568 = vmul.f32 %v1566, %v1515
  %1570 = vrot.lane.b32.xlu0 %v1567, 64
  %v1571 = vpop.permute.xlu0 %1570
  %v1573 = vmul.f32 %v1566, %v1571
  %1575 = vrot.lane.b32.xlu0 %v1573, 32
  %v1576 = vpop.permute.xlu0 %1575
  %v1578 = vadd.f32 %v1568, %v1576
  %v1579 = vtanh.pop %v1578
  %1581 = vrot.lane.b32.xlu0 %v1579, 64
  %v1582 = vpop.permute.xlu0 %1581
  %v1584 = vmul.f32 %v1566, %v1582
  %1586 = vrot.lane.b32.xlu0 %v1584, 32
  %v1587 = vpop.permute.xlu0 %1586
  %v1588 = vsel %vm110, %v1587, 0
  %1590 = vmatpush.msra.mxu0 0.0
  %1591 = vmatpush.msra.mxu0 0.0
  %1592 = vmatpush.msra.mxu0 0.0
  %1593 = vmatpush.msra.mxu0 0.0
  %1594 = vmatpush.msra.mxu0 0.0
  %1595 = vmatpush.msra.mxu0 0.0
  %1596 = vmatpush.msra.mxu0 0.0
  %1597 = vmatpush.msra.mxu0 0.0
  %1598 = vmatpush.msra.mxu0 0.0
  %1599 = vmatpush.msra.mxu0 0.0
  %1600 = vmatpush.msra.mxu0 0.0
  %1601 = vmatpush.msra.mxu0 0.0
  %1602 = vmatpush.msra.mxu0 %v1337
  %1603 = vmatpush.msra.mxu0 %v1336
  %1604 = vmatpush.msra.mxu0 %v1335
  %1605 = vmatpush.msra.mxu0 %v1334
  %1606 = vmatmul.f32.gmra.mxu0 %v1588
  %v1607 = vpop.f32.mrf.mxu0
  %v1608 = vadd.f32 0.0, %v1607
  %1609 = vdwg.mxu0
  %v1610 = vadd.f32 %v1332, %v1608
  %v1611 = vxor.u32 %v1610, 2147483648
  %v1612 = vmul.f32 %v1611, 1.442695
  %v1613 = vpow.pop %v1612
  %v1614 = vadd.f32 %v1613, 1.0
  %v1615 = vrcp.pop %v1614
  %v1616 = vmul.f32 %v1614, %v1615
  %v1617 = vsub.f32 1.0, %v1616
  %v1618 = vmul.f32 %v1615, %v1617
  %v1619 = vadd.f32 %v1615, %v1618
  %vm1620 = vweird.f32 %v1614
  %vm1621 = vweird.f32 %v1615
  %vm1622 = vmor %vm1620, %vm1621
  %v1623 = vsel %vm1622, %v1615, %v1619
  %v1624 = vand.u32 2147483647, %v1614
  %vm1625 = vcmp.eq.f32.partialorder %v1624, 8.507059e+37
  %v1626 = vand.u32 %v1614, 2147483648
  %v1627 = vor.u32 1.1754944e-38, %v1626
  %v1628 = vsel %vm1625, %v1627, %v1623
  %v1629 = vmul.f32 1.0, %v1628
  %v1630 = vtanh.pop %v1610
  %v1631 = vmul.f32 %v1629, %v1578
  %1633 = vrot.lane.b32.xlu0 %v1630, 64
  %v1634 = vpop.permute.xlu0 %1633
  %v1636 = vmul.f32 %v1629, %v1634
  %1638 = vrot.lane.b32.xlu0 %v1636, 32
  %v1639 = vpop.permute.xlu0 %1638
  %v1641 = vadd.f32 %v1631, %v1639
  %v1642 = vtanh.pop %v1641
  %1644 = vrot.lane.b32.xlu0 %v1642, 64
  %v1645 = vpop.permute.xlu0 %1644
  %v1647 = vmul.f32 %v1629, %v1645
  %1649 = vrot.lane.b32.xlu0 %v1647, 32
  %v1650 = vpop.permute.xlu0 %1649
  %v1651 = vsel %vm110, %v1650, 0
  %1653 = vmatpush.msra.mxu0 0.0
  %1654 = vmatpush.msra.mxu0 0.0
  %1655 = vmatpush.msra.mxu0 0.0
  %1656 = vmatpush.msra.mxu0 0.0
  %1657 = vmatpush.msra.mxu0 0.0
  %1658 = vmatpush.msra.mxu0 0.0
  %1659 = vmatpush.msra.mxu0 0.0
  %1660 = vmatpush.msra.mxu0 0.0
  %1661 = vmatpush.msra.mxu0 0.0
  %1662 = vmatpush.msra.mxu0 0.0
  %1663 = vmatpush.msra.mxu0 0.0
  %1664 = vmatpush.msra.mxu0 0.0
  %1665 = vmatpush.msra.mxu0 %v1337
  %1666 = vmatpush.msra.mxu0 %v1336
  %1667 = vmatpush.msra.mxu0 %v1335
  %1668 = vmatpush.msra.mxu0 %v1334
  %1669 = vmatmul.f32.gmra.mxu0 %v1651
  %v1670 = vpop.f32.mrf.mxu0
  %v1671 = vadd.f32 0.0, %v1670
  %1672 = vdwg.mxu0
  %v1673 = vadd.f32 %v1332, %v1671
  %v1674 = vxor.u32 %v1673, 2147483648
  %v1675 = vmul.f32 %v1674, 1.442695
  %v1676 = vpow.pop %v1675
  %v1677 = vadd.f32 %v1676, 1.0
  %v1678 = vrcp.pop %v1677
  %v1679 = vmul.f32 %v1677, %v1678
  %v1680 = vsub.f32 1.0, %v1679
  %v1681 = vmul.f32 %v1678, %v1680
  %v1682 = vadd.f32 %v1678, %v1681
  %vm1683 = vweird.f32 %v1677
  %vm1684 = vweird.f32 %v1678
  %vm1685 = vmor %vm1683, %vm1684
  %v1686 = vsel %vm1685, %v1678, %v1682
  %v1687 = vand.u32 2147483647, %v1677
  %vm1688 = vcmp.eq.f32.partialorder %v1687, 8.507059e+37
  %v1689 = vand.u32 %v1677, 2147483648
  %v1690 = vor.u32 1.1754944e-38, %v1689
  %v1691 = vsel %vm1688, %v1690, %v1686
  %v1692 = vmul.f32 1.0, %v1691
  %v1693 = vtanh.pop %v1673
  %v1694 = vmul.f32 %v1692, %v1641
  %1696 = vrot.lane.b32.xlu0 %v1693, 64
  %v1697 = vpop.permute.xlu0 %1696
  %v1699 = vmul.f32 %v1692, %v1697
  %1701 = vrot.lane.b32.xlu0 %v1699, 32
  %v1702 = vpop.permute.xlu0 %1701
  %v1704 = vadd.f32 %v1694, %v1702
  %v1705 = vtanh.pop %v1704
  %1707 = vrot.lane.b32.xlu0 %v1705, 64
  %v1708 = vpop.permute.xlu0 %1707
  %v1710 = vmul.f32 %v1692, %v1708
  %1712 = vrot.lane.b32.xlu0 %v1710, 32
  %v1713 = vpop.permute.xlu0 %1712
  %v1714 = vsel %vm110, %v1713, 0
  %1716 = vmatpush.msra.mxu0 0.0
  %1717 = vmatpush.msra.mxu0 0.0
  %1718 = vmatpush.msra.mxu0 0.0
  %1719 = vmatpush.msra.mxu0 0.0
  %1720 = vmatpush.msra.mxu0 0.0
  %1721 = vmatpush.msra.mxu0 0.0
  %1722 = vmatpush.msra.mxu0 0.0
  %1723 = vmatpush.msra.mxu0 0.0
  %1724 = vmatpush.msra.mxu0 0.0
  %1725 = vmatpush.msra.mxu0 0.0
  %1726 = vmatpush.msra.mxu0 0.0
  %1727 = vmatpush.msra.mxu0 0.0
  %1728 = vmatpush.msra.mxu0 %v1337
  %1729 = vmatpush.msra.mxu0 %v1336
  %1730 = vmatpush.msra.mxu0 %v1335
  %1731 = vmatpush.msra.mxu0 %v1334
  %1732 = vmatmul.f32.gmra.mxu0 %v1714
  %v1733 = vpop.f32.mrf.mxu0
  %v1734 = vadd.f32 0.0, %v1733
  %1735 = vdwg.mxu0
  %v1736 = vadd.f32 %v1332, %v1734
  %v1737 = vxor.u32 %v1736, 2147483648
  %v1738 = vmul.f32 %v1737, 1.442695
  %v1739 = vpow.pop %v1738
  %v1740 = vadd.f32 %v1739, 1.0
  %v1741 = vrcp.pop %v1740
  %v1742 = vmul.f32 %v1740, %v1741
  %v1743 = vsub.f32 1.0, %v1742
  %v1744 = vmul.f32 %v1741, %v1743
  %v1745 = vadd.f32 %v1741, %v1744
  %vm1746 = vweird.f32 %v1740
  %vm1747 = vweird.f32 %v1741
  %vm1748 = vmor %vm1746, %vm1747
  %v1749 = vsel %vm1748, %v1741, %v1745
  %v1750 = vand.u32 2147483647, %v1740
  %vm1751 = vcmp.eq.f32.partialorder %v1750, 8.507059e+37
  %v1752 = vand.u32 %v1740, 2147483648
  %v1753 = vor.u32 1.1754944e-38, %v1752
  %v1754 = vsel %vm1751, %v1753, %v1749
  %v1755 = vmul.f32 1.0, %v1754
  %v1756 = vtanh.pop %v1736
  %v1757 = vmul.f32 %v1755, %v1704
  %1759 = vrot.lane.b32.xlu0 %v1756, 64
  %v1760 = vpop.permute.xlu0 %1759
  %v1762 = vmul.f32 %v1755, %v1760
  %1764 = vrot.lane.b32.xlu0 %v1762, 32
  %v1765 = vpop.permute.xlu0 %1764
  %v1767 = vadd.f32 %v1757, %v1765
  %v1768 = vtanh.pop %v1767
  %1770 = vrot.lane.b32.xlu0 %v1768, 64
  %v1771 = vpop.permute.xlu0 %1770
  %v1773 = vmul.f32 %v1755, %v1771
  %1775 = vrot.lane.b32.xlu0 %v1773, 32
  %v1776 = vpop.permute.xlu0 %1775
  %v1777 = vsel %vm110, %v1776, 0
  %1779 = vmatpush.msra.mxu0 0.0
  %1780 = vmatpush.msra.mxu0 0.0
  %1781 = vmatpush.msra.mxu0 0.0
  %1782 = vmatpush.msra.mxu0 0.0
  %1783 = vmatpush.msra.mxu0 0.0
  %1784 = vmatpush.msra.mxu0 0.0
  %1785 = vmatpush.msra.mxu0 0.0
  %1786 = vmatpush.msra.mxu0 0.0
  %1787 = vmatpush.msra.mxu0 0.0
  %1788 = vmatpush.msra.mxu0 0.0
  %1789 = vmatpush.msra.mxu0 0.0
  %1790 = vmatpush.msra.mxu0 0.0
  %1791 = vmatpush.msra.mxu0 %v1337
  %1792 = vmatpush.msra.mxu0 %v1336
  %1793 = vmatpush.msra.mxu0 %v1335
  %1794 = vmatpush.msra.mxu0 %v1334
  %1795 = vmatmul.f32.gmra.mxu0 %v1777
  %v1796 = vpop.f32.mrf.mxu0
  %v1797 = vadd.f32 0.0, %v1796
  %1798 = vdwg.mxu0
  %v1799 = vadd.f32 %v1332, %v1797
  %v1800 = vxor.u32 %v1799, 2147483648
  %v1801 = vmul.f32 %v1800, 1.442695
  %v1802 = vpow.pop %v1801
  %v1803 = vadd.f32 %v1802, 1.0
  %v1804 = vrcp.pop %v1803
  %v1805 = vmul.f32 %v1803, %v1804
  %v1806 = vsub.f32 1.0, %v1805
  %v1807 = vmul.f32 %v1804, %v1806
  %v1808 = vadd.f32 %v1804, %v1807
  %vm1809 = vweird.f32 %v1803
  %vm1810 = vweird.f32 %v1804
  %vm1811 = vmor %vm1809, %vm1810
  %v1812 = vsel %vm1811, %v1804, %v1808
  %v1813 = vand.u32 2147483647, %v1803
  %vm1814 = vcmp.eq.f32.partialorder %v1813, 8.507059e+37
  %v1815 = vand.u32 %v1803, 2147483648
  %v1816 = vor.u32 1.1754944e-38, %v1815
  %v1817 = vsel %vm1814, %v1816, %v1812
  %v1818 = vmul.f32 1.0, %v1817
  %v1819 = vtanh.pop %v1799
  %v1820 = vmul.f32 %v1818, %v1767
  %1822 = vrot.lane.b32.xlu0 %v1819, 64
  %v1823 = vpop.permute.xlu0 %1822
  %v1825 = vmul.f32 %v1818, %v1823
  %1827 = vrot.lane.b32.xlu0 %v1825, 32
  %v1828 = vpop.permute.xlu0 %1827
  %v1830 = vadd.f32 %v1820, %v1828
  %v1831 = vtanh.pop %v1830
  %1833 = vrot.lane.b32.xlu0 %v1831, 64
  %v1834 = vpop.permute.xlu0 %1833
  %v1836 = vmul.f32 %v1818, %v1834
  %v1837 = vrot.slane %v1458, 6
  %v1839 = vrot.slane %v1521, 4
  %v1841 = vrot.slane %v1584, 2
  %v1843 = vrot.slane %v1710, 6
  %v1845 = vrot.slane %v1773, 4
  %v1848 = vrot.slane %v1836, 2
  %v1850 = vsel %vm633, %v1395, %v1837
  %v1851 = vsel %vm635, %v1850, %v1839
  %v1852 = vsel %vm637, %v1851, %v1841
  %v1853 = vsel %vm633, %v1647, %v1843
  %v1854 = vsel %vm635, %v1853, %v1845
  %v1855 = vsel %vm637, %v1854, %v1848
  %v1856 = vld [vmem:[%s15] sm:$0xff]
  %v1857 = vld [vmem:[%s15 + $0x8] sm:$0xff]
  %v1858 = vld [vmem:[%s15 + $0x10] sm:$0xff]
  %v1859 = vld [vmem:[%s15 + $0x18] sm:$0xff]
  %v1860 = vld [vmem:[%s15 + $0x20] sm:$0xff]
  %v1861 = vld [vmem:[%s15 + $0x28] sm:$0xff]
  %v1862 = vld [vmem:[%s15 + $0x30] sm:$0xff]
  %v1863 = vld [vmem:[%s15 + $0x38] sm:$0xff]
  %v1864 = vld [vmem:[%s17] sm:$0x3]
  %v1866 = vperm.slane %v1864, 0
  %v1867 = vperm.slane %v1864, 1
  %1872 = vrot.lane.b32.xlu0 %v1852, 32
  %v1873 = vpop.permute.xlu0 %1872
  %1874 = vrot.lane.b32.xlu0 %v1855, 32
  %v1875 = vpop.permute.xlu0 %1874
  %v1876 = vsel %vm110, %v1873, 0
  %v1878 = vsel %vm110, %v1875, 0
  %1880 = vmatpush.msra.mxu0 0.0
  %1881 = vmatpush.msra.mxu0 0.0
  %1882 = vmatpush.msra.mxu0 0.0
  %1883 = vmatpush.msra.mxu0 0.0
  %1884 = vmatpush.msra.mxu0 0.0
  %1885 = vmatpush.msra.mxu0 0.0
  %1886 = vmatpush.msra.mxu0 0.0
  %1887 = vmatpush.msra.mxu0 0.0
  %1888 = vmatpush.msra.mxu0 0.0
  %1889 = vmatpush.msra.mxu0 0.0
  %1890 = vmatpush.msra.mxu0 0.0
  %1891 = vmatpush.msra.mxu0 0.0
  %1892 = vmatpush.msra.mxu0 %v1862
  %1893 = vmatpush.msra.mxu0 %v1860
  %1894 = vmatpush.msra.mxu0 %v1858
  %1895 = vmatpush.msra.mxu0 %v1856
  %1896 = vmatmul.f32.gmra.mxu0 %v1876
  %v1897 = vpop.f32.mrf.mxu0
  %v1898 = vadd.f32 %v1866, %v1897
  %1899 = vmatmul.f32.gmra.mxu0 %v1878
  %v1900 = vpop.f32.mrf.mxu0
  %v1901 = vadd.f32 %v1866, %v1900
  %1902 = vdwg.mxu0
  %1903 = vmatpush.msra.mxu0 0.0
  %1904 = vmatpush.msra.mxu0 0.0
  %1905 = vmatpush.msra.mxu0 0.0
  %1906 = vmatpush.msra.mxu0 0.0
  %1907 = vmatpush.msra.mxu0 0.0
  %1908 = vmatpush.msra.mxu0 0.0
  %1909 = vmatpush.msra.mxu0 0.0
  %1910 = vmatpush.msra.mxu0 0.0
  %1911 = vmatpush.msra.mxu0 0.0
  %1912 = vmatpush.msra.mxu0 0.0
  %1913 = vmatpush.msra.mxu0 0.0
  %1914 = vmatpush.msra.mxu0 0.0
  %1915 = vmatpush.msra.mxu0 %v1863
  %1916 = vmatpush.msra.mxu0 %v1861
  %1917 = vmatpush.msra.mxu0 %v1859
  %1918 = vmatpush.msra.mxu0 %v1857
  %1919 = vmatmul.f32.gmra.mxu0 %v1876
  %v1920 = vpop.f32.mrf.mxu0
  %v1921 = vadd.f32 %v1867, %v1920
  %1922 = vmatmul.f32.gmra.mxu0 %v1878
  %v1923 = vpop.f32.mrf.mxu0
  %v1924 = vadd.f32 %v1867, %v1923
  %1925 = vdwg.mxu0
  %1926 = vst [vmem:[#allocation3] sm:$0xff] %v1898
  %1927 = vst [vmem:[#allocation3 + $0x8] sm:$0xff] %v1921
  %1928 = vst [vmem:[#allocation3 + $0x10] sm:$0xff] %v1901
  %1929 = vst [vmem:[#allocation3 + $0x18] sm:$0xff] %v1924
  %v1930 = vld [vmem:[%s16] sm:$0xff]
  %v1931 = vld [vmem:[%s16 + $0x8] sm:$0xff]
  %v1932 = vld [vmem:[%s16 + $0x10] sm:$0xff]
  %v1933 = vld [vmem:[%s16 + $0x18] sm:$0xff]
  %v1934 = vld [vmem:[%s16 + $0x20] sm:$0xff]
  %v1935 = vld [vmem:[%s16 + $0x28] sm:$0xff]
  %v1936 = vld [vmem:[%s16 + $0x30] sm:$0xff]
  %v1937 = vld [vmem:[%s16 + $0x38] sm:$0xff]
  %v1938 = vld [vmem:[%s16 + $0x40] sm:$0xff]
  %v1939 = vld [vmem:[%s16 + $0x48] sm:$0xff]
  %v1940 = vld [vmem:[%s16 + $0x50] sm:$0xff]
  %v1941 = vld [vmem:[%s16 + $0x58] sm:$0xff]
  %v1942 = vld [vmem:[%s16 + $0x60] sm:$0xff]
  %v1943 = vld [vmem:[%s16 + $0x68] sm:$0xff]
  %v1944 = vld [vmem:[%s16 + $0x70] sm:$0xff]
  %v1945 = vld [vmem:[%s16 + $0x78] sm:$0xff]
  %v1946 = vld [vmem:[#allocation3] sm:$0x3]
  %v1947 = vld [vmem:[#allocation3 + $0x8] sm:$0x3]
  %v1948 = vsel %vm1263, 0.0, 0
  %1950 = vmatpush.msra.mxu0 0.0
  %1951 = vmatpush.msra.mxu0 0.0
  %1952 = vmatpush.msra.mxu0 0.0
  %1953 = vmatpush.msra.mxu0 0.0
  %1954 = vmatpush.msra.mxu0 0.0
  %1955 = vmatpush.msra.mxu0 0.0
  %1956 = vmatpush.msra.mxu0 0.0
  %1957 = vmatpush.msra.mxu0 0.0
  %1958 = vmatpush.msra.mxu0 %v1944
  %1959 = vmatpush.msra.mxu0 %v1942
  %1960 = vmatpush.msra.mxu0 %v1940
  %1961 = vmatpush.msra.mxu0 %v1938
  %1962 = vmatpush.msra.mxu0 %v1936
  %1963 = vmatpush.msra.mxu0 %v1934
  %1964 = vmatpush.msra.mxu0 %v1932
  %1965 = vmatpush.msra.mxu0 %v1930
  %1966 = vmatmul.f32.gmra.mxu0 %v1948
  %v1967 = vpop.f32.mrf.mxu0
  %v1968 = vadd.f32 0.0, %v1967
  %1969 = vdwg.mxu0
  %1970 = vmatpush.msra.mxu0 0.0
  %1971 = vmatpush.msra.mxu0 0.0
  %1972 = vmatpush.msra.mxu0 0.0
  %1973 = vmatpush.msra.mxu0 0.0
  %1974 = vmatpush.msra.mxu0 0.0
  %1975 = vmatpush.msra.mxu0 0.0
  %1976 = vmatpush.msra.mxu0 0.0
  %1977 = vmatpush.msra.mxu0 0.0
  %1978 = vmatpush.msra.mxu0 %v1945
  %1979 = vmatpush.msra.mxu0 %v1943
  %1980 = vmatpush.msra.mxu0 %v1941
  %1981 = vmatpush.msra.mxu0 %v1939
  %1982 = vmatpush.msra.mxu0 %v1937
  %1983 = vmatpush.msra.mxu0 %v1935
  %1984 = vmatpush.msra.mxu0 %v1933
  %1985 = vmatpush.msra.mxu0 %v1931
  %1986 = vmatmul.f32.gmra.mxu0 %v1948
  %v1987 = vpop.f32.mrf.mxu0
  %v1988 = vadd.f32 0.0, %v1987
  %1989 = vdwg.mxu0
  %v1990 = vadd.f32 %v1946, %v1968
  %v1991 = vadd.f32 %v1947, %v1988
  %v1992 = vxor.u32 %v1990, 2147483648
  %v1993 = vxor.u32 %v1991, 2147483648
  %v1994 = vmul.f32 %v1992, 1.442695
  %v1995 = vpow.pop %v1994
  %v1996 = vmul.f32 %v1993, 1.442695
  %v1997 = vpow.pop %v1996
  %v1998 = vadd.f32 %v1995, 1.0
  %v1999 = vadd.f32 %v1997, 1.0
  %v2000 = vrcp.pop %v1998
  %v2001 = vmul.f32 %v1998, %v2000
  %v2002 = vsub.f32 1.0, %v2001
  %v2003 = vmul.f32 %v2000, %v2002
  %v2004 = vadd.f32 %v2000, %v2003
  %vm2005 = vweird.f32 %v1998
  %vm2006 = vweird.f32 %v2000
  %vm2007 = vmor %vm2005, %vm2006
  %v2008 = vsel %vm2007, %v2000, %v2004
  %v2009 = vand.u32 2147483647, %v1998
  %vm2010 = vcmp.eq.f32.partialorder %v2009, 8.507059e+37
  %v2011 = vand.u32 %v1998, 2147483648
  %v2012 = vor.u32 1.1754944e-38, %v2011
  %v2013 = vsel %vm2010, %v2012, %v2008
  %v2014 = vmul.f32 1.0, %v2013
  %v2015 = vrcp.pop %v1999
  %v2016 = vmul.f32 %v1999, %v2015
  %v2017 = vsub.f32 1.0, %v2016
  %v2018 = vmul.f32 %v2015, %v2017
  %v2019 = vadd.f32 %v2015, %v2018
  %vm2020 = vweird.f32 %v1999
  %vm2021 = vweird.f32 %v2015
  %vm2022 = vmor %vm2020, %vm2021
  %v2023 = vsel %vm2022, %v2015, %v2019
  %v2024 = vand.u32 2147483647, %v1999
  %vm2025 = vcmp.eq.f32.partialorder %v2024, 8.507059e+37
  %v2026 = vand.u32 %v1999, 2147483648
  %v2027 = vor.u32 1.1754944e-38, %v2026
  %v2028 = vsel %vm2025, %v2027, %v2023
  %v2029 = vmul.f32 1.0, %v2028
  %v2030 = vtanh.pop %v1991
  %v2031 = vmul.f32 %v2014, 0.0
  %v2032 = vmul.f32 %v2014, %v2030
  %2034 = vrot.lane.b32.xlu0 %v2032, 64
  %v2035 = vpop.permute.xlu0 %2034
  %v2037 = vadd.f32 %v2031, %v2035
  %v2038 = vtanh.pop %v2037
  %v2039 = vmul.f32 %v2029, %v2038
  %v2040 = vld [vmem:[#allocation3] sm:$0xc]
  %v2041 = vld [vmem:[#allocation3 + $0x8] sm:$0xc]
  %2043 = vrot.lane.b32.xlu0 %v2039, 64
  %v2044 = vpop.permute.xlu0 %2043
  %v2045 = vsel %vm1263, %v2044, 0
  %2047 = vmatpush.msra.mxu0 0.0
  %2048 = vmatpush.msra.mxu0 0.0
  %2049 = vmatpush.msra.mxu0 0.0
  %2050 = vmatpush.msra.mxu0 0.0
  %2051 = vmatpush.msra.mxu0 0.0
  %2052 = vmatpush.msra.mxu0 0.0
  %2053 = vmatpush.msra.mxu0 0.0
  %2054 = vmatpush.msra.mxu0 0.0
  %2055 = vmatpush.msra.mxu0 %v1944
  %2056 = vmatpush.msra.mxu0 %v1942
  %2057 = vmatpush.msra.mxu0 %v1940
  %2058 = vmatpush.msra.mxu0 %v1938
  %2059 = vmatpush.msra.mxu0 %v1936
  %2060 = vmatpush.msra.mxu0 %v1934
  %2061 = vmatpush.msra.mxu0 %v1932
  %2062 = vmatpush.msra.mxu0 %v1930
  %2063 = vmatmul.f32.gmra.mxu0 %v2045
  %v2064 = vpop.f32.mrf.mxu0
  %v2065 = vadd.f32 0.0, %v2064
  %2066 = vdwg.mxu0
  %2067 = vmatpush.msra.mxu0 0.0
  %2068 = vmatpush.msra.mxu0 0.0
  %2069 = vmatpush.msra.mxu0 0.0
  %2070 = vmatpush.msra.mxu0 0.0
  %2071 = vmatpush.msra.mxu0 0.0
  %2072 = vmatpush.msra.mxu0 0.0
  %2073 = vmatpush.msra.mxu0 0.0
  %2074 = vmatpush.msra.mxu0 0.0
  %2075 = vmatpush.msra.mxu0 %v1945
  %2076 = vmatpush.msra.mxu0 %v1943
  %2077 = vmatpush.msra.mxu0 %v1941
  %2078 = vmatpush.msra.mxu0 %v1939
  %2079 = vmatpush.msra.mxu0 %v1937
  %2080 = vmatpush.msra.mxu0 %v1935
  %2081 = vmatpush.msra.mxu0 %v1933
  %2082 = vmatpush.msra.mxu0 %v1931
  %2083 = vmatmul.f32.gmra.mxu0 %v2045
  %v2084 = vpop.f32.mrf.mxu0
  %v2085 = vadd.f32 0.0, %v2084
  %2086 = vdwg.mxu0
  %v2089 = vrot.slane %v2065, 6
  %v2090 = vrot.slane %v2085, 6
  %v2093 = vadd.f32 %v2040, %v2089
  %v2094 = vadd.f32 %v2041, %v2090
  %v2095 = vxor.u32 %v2093, 2147483648
  %v2096 = vxor.u32 %v2094, 2147483648
  %v2097 = vmul.f32 %v2095, 1.442695
  %v2098 = vpow.pop %v2097
  %v2099 = vmul.f32 %v2096, 1.442695
  %v2100 = vpow.pop %v2099
  %v2101 = vadd.f32 %v2098, 1.0
  %v2102 = vadd.f32 %v2100, 1.0
  %v2103 = vrcp.pop %v2101
  %v2104 = vmul.f32 %v2101, %v2103
  %v2105 = vsub.f32 1.0, %v2104
  %v2106 = vmul.f32 %v2103, %v2105
  %v2107 = vadd.f32 %v2103, %v2106
  %vm2108 = vweird.f32 %v2101
  %vm2109 = vweird.f32 %v2103
  %vm2110 = vmor %vm2108, %vm2109
  %v2111 = vsel %vm2110, %v2103, %v2107
  %v2112 = vand.u32 2147483647, %v2101
  %vm2113 = vcmp.eq.f32.partialorder %v2112, 8.507059e+37
  %v2114 = vand.u32 %v2101, 2147483648
  %v2115 = vor.u32 1.1754944e-38, %v2114
  %v2116 = vsel %vm2113, %v2115, %v2111
  %v2117 = vmul.f32 1.0, %v2116
  %v2118 = vrcp.pop %v2102
  %v2119 = vmul.f32 %v2102, %v2118
  %v2120 = vsub.f32 1.0, %v2119
  %v2121 = vmul.f32 %v2118, %v2120
  %v2122 = vadd.f32 %v2118, %v2121
  %vm2123 = vweird.f32 %v2102
  %vm2124 = vweird.f32 %v2118
  %vm2125 = vmor %vm2123, %vm2124
  %v2126 = vsel %vm2125, %v2118, %v2122
  %v2127 = vand.u32 2147483647, %v2102
  %vm2128 = vcmp.eq.f32.partialorder %v2127, 8.507059e+37
  %v2129 = vand.u32 %v2102, 2147483648
  %v2130 = vor.u32 1.1754944e-38, %v2129
  %v2131 = vsel %vm2128, %v2130, %v2126
  %v2132 = vmul.f32 1.0, %v2131
  %v2133 = vtanh.pop %v2094
  %v2135 = vrot.slane %v2037, 6
  %v2137 = vmul.f32 %v2117, %v2135
  %v2138 = vmul.f32 %v2117, %v2133
  %2140 = vrot.lane.b32.xlu0 %v2138, 64
  %v2141 = vpop.permute.xlu0 %2140
  %v2143 = vadd.f32 %v2137, %v2141
  %v2144 = vtanh.pop %v2143
  %v2145 = vmul.f32 %v2132, %v2144
  %v2146 = vld [vmem:[#allocation3] sm:$0x30]
  %v2147 = vld [vmem:[#allocation3 + $0x8] sm:$0x30]
  %v2149 = vrot.slane %v2145, 2
  %2150 = vrot.lane.b32.xlu0 %v2149, 64
  %v2151 = vpop.permute.xlu0 %2150
  %v2152 = vsel %vm1263, %v2151, 0
  %2154 = vmatpush.msra.mxu0 0.0
  %2155 = vmatpush.msra.mxu0 0.0
  %2156 = vmatpush.msra.mxu0 0.0
  %2157 = vmatpush.msra.mxu0 0.0
  %2158 = vmatpush.msra.mxu0 0.0
  %2159 = vmatpush.msra.mxu0 0.0
  %2160 = vmatpush.msra.mxu0 0.0
  %2161 = vmatpush.msra.mxu0 0.0
  %2162 = vmatpush.msra.mxu0 %v1944
  %2163 = vmatpush.msra.mxu0 %v1942
  %2164 = vmatpush.msra.mxu0 %v1940
  %2165 = vmatpush.msra.mxu0 %v1938
  %2166 = vmatpush.msra.mxu0 %v1936
  %2167 = vmatpush.msra.mxu0 %v1934
  %2168 = vmatpush.msra.mxu0 %v1932
  %2169 = vmatpush.msra.mxu0 %v1930
  %2170 = vmatmul.f32.gmra.mxu0 %v2152
  %v2171 = vpop.f32.mrf.mxu0
  %v2172 = vadd.f32 0.0, %v2171
  %2173 = vdwg.mxu0
  %2174 = vmatpush.msra.mxu0 0.0
  %2175 = vmatpush.msra.mxu0 0.0
  %2176 = vmatpush.msra.mxu0 0.0
  %2177 = vmatpush.msra.mxu0 0.0
  %2178 = vmatpush.msra.mxu0 0.0
  %2179 = vmatpush.msra.mxu0 0.0
  %2180 = vmatpush.msra.mxu0 0.0
  %2181 = vmatpush.msra.mxu0 0.0
  %2182 = vmatpush.msra.mxu0 %v1945
  %2183 = vmatpush.msra.mxu0 %v1943
  %2184 = vmatpush.msra.mxu0 %v1941
  %2185 = vmatpush.msra.mxu0 %v1939
  %2186 = vmatpush.msra.mxu0 %v1937
  %2187 = vmatpush.msra.mxu0 %v1935
  %2188 = vmatpush.msra.mxu0 %v1933
  %2189 = vmatpush.msra.mxu0 %v1931
  %2190 = vmatmul.f32.gmra.mxu0 %v2152
  %v2191 = vpop.f32.mrf.mxu0
  %v2192 = vadd.f32 0.0, %v2191
  %2193 = vdwg.mxu0
  %v2196 = vrot.slane %v2172, 4
  %v2197 = vrot.slane %v2192, 4
  %v2200 = vadd.f32 %v2146, %v2196
  %v2201 = vadd.f32 %v2147, %v2197
  %v2202 = vxor.u32 %v2200, 2147483648
  %v2203 = vxor.u32 %v2201, 2147483648
  %v2204 = vmul.f32 %v2202, 1.442695
  %v2205 = vpow.pop %v2204
  %v2206 = vmul.f32 %v2203, 1.442695
  %v2207 = vpow.pop %v2206
  %v2208 = vadd.f32 %v2205, 1.0
  %v2209 = vadd.f32 %v2207, 1.0
  %v2210 = vrcp.pop %v2208
  %v2211 = vmul.f32 %v2208, %v2210
  %v2212 = vsub.f32 1.0, %v2211
  %v2213 = vmul.f32 %v2210, %v2212
  %v2214 = vadd.f32 %v2210, %v2213
  %vm2215 = vweird.f32 %v2208
  %vm2216 = vweird.f32 %v2210
  %vm2217 = vmor %vm2215, %vm2216
  %v2218 = vsel %vm2217, %v2210, %v2214
  %v2219 = vand.u32 2147483647, %v2208
  %vm2220 = vcmp.eq.f32.partialorder %v2219, 8.507059e+37
  %v2221 = vand.u32 %v2208, 2147483648
  %v2222 = vor.u32 1.1754944e-38, %v2221
  %v2223 = vsel %vm2220, %v2222, %v2218
  %v2224 = vmul.f32 1.0, %v2223
  %v2225 = vrcp.pop %v2209
  %v2226 = vmul.f32 %v2209, %v2225
  %v2227 = vsub.f32 1.0, %v2226
  %v2228 = vmul.f32 %v2225, %v2227
  %v2229 = vadd.f32 %v2225, %v2228
  %vm2230 = vweird.f32 %v2209
  %vm2231 = vweird.f32 %v2225
  %vm2232 = vmor %vm2230, %vm2231
  %v2233 = vsel %vm2232, %v2225, %v2229
  %v2234 = vand.u32 2147483647, %v2209
  %vm2235 = vcmp.eq.f32.partialorder %v2234, 8.507059e+37
  %v2236 = vand.u32 %v2209, 2147483648
  %v2237 = vor.u32 1.1754944e-38, %v2236
  %v2238 = vsel %vm2235, %v2237, %v2233
  %v2239 = vmul.f32 1.0, %v2238
  %v2240 = vtanh.pop %v2201
  %v2242 = vrot.slane %v2143, 6
  %v2244 = vmul.f32 %v2224, %v2242
  %v2245 = vmul.f32 %v2224, %v2240
  %2247 = vrot.lane.b32.xlu0 %v2245, 64
  %v2248 = vpop.permute.xlu0 %2247
  %v2250 = vadd.f32 %v2244, %v2248
  %v2251 = vtanh.pop %v2250
  %v2252 = vmul.f32 %v2239, %v2251
  %v2253 = vld [vmem:[#allocation3] sm:$0xc0]
  %v2254 = vld [vmem:[#allocation3 + $0x8] sm:$0xc0]
  %v2256 = vrot.slane %v2252, 4
  %2257 = vrot.lane.b32.xlu0 %v2256, 64
  %v2258 = vpop.permute.xlu0 %2257
  %v2259 = vsel %vm1263, %v2258, 0
  %2261 = vmatpush.msra.mxu0 0.0
  %2262 = vmatpush.msra.mxu0 0.0
  %2263 = vmatpush.msra.mxu0 0.0
  %2264 = vmatpush.msra.mxu0 0.0
  %2265 = vmatpush.msra.mxu0 0.0
  %2266 = vmatpush.msra.mxu0 0.0
  %2267 = vmatpush.msra.mxu0 0.0
  %2268 = vmatpush.msra.mxu0 0.0
  %2269 = vmatpush.msra.mxu0 %v1944
  %2270 = vmatpush.msra.mxu0 %v1942
  %2271 = vmatpush.msra.mxu0 %v1940
  %2272 = vmatpush.msra.mxu0 %v1938
  %2273 = vmatpush.msra.mxu0 %v1936
  %2274 = vmatpush.msra.mxu0 %v1934
  %2275 = vmatpush.msra.mxu0 %v1932
  %2276 = vmatpush.msra.mxu0 %v1930
  %2277 = vmatmul.f32.gmra.mxu0 %v2259
  %v2278 = vpop.f32.mrf.mxu0
  %v2279 = vadd.f32 0.0, %v2278
  %2280 = vdwg.mxu0
  %2281 = vmatpush.msra.mxu0 0.0
  %2282 = vmatpush.msra.mxu0 0.0
  %2283 = vmatpush.msra.mxu0 0.0
  %2284 = vmatpush.msra.mxu0 0.0
  %2285 = vmatpush.msra.mxu0 0.0
  %2286 = vmatpush.msra.mxu0 0.0
  %2287 = vmatpush.msra.mxu0 0.0
  %2288 = vmatpush.msra.mxu0 0.0
  %2289 = vmatpush.msra.mxu0 %v1945
  %2290 = vmatpush.msra.mxu0 %v1943
  %2291 = vmatpush.msra.mxu0 %v1941
  %2292 = vmatpush.msra.mxu0 %v1939
  %2293 = vmatpush.msra.mxu0 %v1937
  %2294 = vmatpush.msra.mxu0 %v1935
  %2295 = vmatpush.msra.mxu0 %v1933
  %2296 = vmatpush.msra.mxu0 %v1931
  %2297 = vmatmul.f32.gmra.mxu0 %v2259
  %v2298 = vpop.f32.mrf.mxu0
  %v2299 = vadd.f32 0.0, %v2298
  %2300 = vdwg.mxu0
  %v2303 = vrot.slane %v2279, 2
  %v2304 = vrot.slane %v2299, 2
  %v2307 = vadd.f32 %v2253, %v2303
  %v2308 = vadd.f32 %v2254, %v2304
  %v2309 = vxor.u32 %v2307, 2147483648
  %v2310 = vxor.u32 %v2308, 2147483648
  %v2311 = vmul.f32 %v2309, 1.442695
  %v2312 = vpow.pop %v2311
  %v2313 = vmul.f32 %v2310, 1.442695
  %v2314 = vpow.pop %v2313
  %v2315 = vadd.f32 %v2312, 1.0
  %v2316 = vadd.f32 %v2314, 1.0
  %v2317 = vrcp.pop %v2315
  %v2318 = vmul.f32 %v2315, %v2317
  %v2319 = vsub.f32 1.0, %v2318
  %v2320 = vmul.f32 %v2317, %v2319
  %v2321 = vadd.f32 %v2317, %v2320
  %vm2322 = vweird.f32 %v2315
  %vm2323 = vweird.f32 %v2317
  %vm2324 = vmor %vm2322, %vm2323
  %v2325 = vsel %vm2324, %v2317, %v2321
  %v2326 = vand.u32 2147483647, %v2315
  %vm2327 = vcmp.eq.f32.partialorder %v2326, 8.507059e+37
  %v2328 = vand.u32 %v2315, 2147483648
  %v2329 = vor.u32 1.1754944e-38, %v2328
  %v2330 = vsel %vm2327, %v2329, %v2325
  %v2331 = vmul.f32 1.0, %v2330
  %v2332 = vrcp.pop %v2316
  %v2333 = vmul.f32 %v2316, %v2332
  %v2334 = vsub.f32 1.0, %v2333
  %v2335 = vmul.f32 %v2332, %v2334
  %v2336 = vadd.f32 %v2332, %v2335
  %vm2337 = vweird.f32 %v2316
  %vm2338 = vweird.f32 %v2332
  %vm2339 = vmor %vm2337, %vm2338
  %v2340 = vsel %vm2339, %v2332, %v2336
  %v2341 = vand.u32 2147483647, %v2316
  %vm2342 = vcmp.eq.f32.partialorder %v2341, 8.507059e+37
  %v2343 = vand.u32 %v2316, 2147483648
  %v2344 = vor.u32 1.1754944e-38, %v2343
  %v2345 = vsel %vm2342, %v2344, %v2340
  %v2346 = vmul.f32 1.0, %v2345
  %v2347 = vtanh.pop %v2308
  %v2349 = vrot.slane %v2250, 6
  %v2351 = vmul.f32 %v2331, %v2349
  %v2352 = vmul.f32 %v2331, %v2347
  %2354 = vrot.lane.b32.xlu0 %v2352, 64
  %v2355 = vpop.permute.xlu0 %2354
  %v2357 = vadd.f32 %v2351, %v2355
  %v2358 = vtanh.pop %v2357
  %v2359 = vmul.f32 %v2346, %v2358
  %v2360 = vld [vmem:[#allocation3 + $0x10] sm:$0x3]
  %v2361 = vld [vmem:[#allocation3 + $0x18] sm:$0x3]
  %v2363 = vrot.slane %v2359, 6
  %2364 = vrot.lane.b32.xlu0 %v2363, 64
  %v2365 = vpop.permute.xlu0 %2364
  %v2366 = vsel %vm1263, %v2365, 0
  %2368 = vmatpush.msra.mxu0 0.0
  %2369 = vmatpush.msra.mxu0 0.0
  %2370 = vmatpush.msra.mxu0 0.0
  %2371 = vmatpush.msra.mxu0 0.0
  %2372 = vmatpush.msra.mxu0 0.0
  %2373 = vmatpush.msra.mxu0 0.0
  %2374 = vmatpush.msra.mxu0 0.0
  %2375 = vmatpush.msra.mxu0 0.0
  %2376 = vmatpush.msra.mxu0 %v1944
  %2377 = vmatpush.msra.mxu0 %v1942
  %2378 = vmatpush.msra.mxu0 %v1940
  %2379 = vmatpush.msra.mxu0 %v1938
  %2380 = vmatpush.msra.mxu0 %v1936
  %2381 = vmatpush.msra.mxu0 %v1934
  %2382 = vmatpush.msra.mxu0 %v1932
  %2383 = vmatpush.msra.mxu0 %v1930
  %2384 = vmatmul.f32.gmra.mxu0 %v2366
  %v2385 = vpop.f32.mrf.mxu0
  %v2386 = vadd.f32 0.0, %v2385
  %2387 = vdwg.mxu0
  %2388 = vmatpush.msra.mxu0 0.0
  %2389 = vmatpush.msra.mxu0 0.0
  %2390 = vmatpush.msra.mxu0 0.0
  %2391 = vmatpush.msra.mxu0 0.0
  %2392 = vmatpush.msra.mxu0 0.0
  %2393 = vmatpush.msra.mxu0 0.0
  %2394 = vmatpush.msra.mxu0 0.0
  %2395 = vmatpush.msra.mxu0 0.0
  %2396 = vmatpush.msra.mxu0 %v1945
  %2397 = vmatpush.msra.mxu0 %v1943
  %2398 = vmatpush.msra.mxu0 %v1941
  %2399 = vmatpush.msra.mxu0 %v1939
  %2400 = vmatpush.msra.mxu0 %v1937
  %2401 = vmatpush.msra.mxu0 %v1935
  %2402 = vmatpush.msra.mxu0 %v1933
  %2403 = vmatpush.msra.mxu0 %v1931
  %2404 = vmatmul.f32.gmra.mxu0 %v2366
  %v2405 = vpop.f32.mrf.mxu0
  %v2406 = vadd.f32 0.0, %v2405
  %2407 = vdwg.mxu0
  %v2408 = vadd.f32 %v2360, %v2386
  %v2409 = vadd.f32 %v2361, %v2406
  %v2410 = vxor.u32 %v2408, 2147483648
  %v2411 = vxor.u32 %v2409, 2147483648
  %v2412 = vmul.f32 %v2410, 1.442695
  %v2413 = vpow.pop %v2412
  %v2414 = vmul.f32 %v2411, 1.442695
  %v2415 = vpow.pop %v2414
  %v2416 = vadd.f32 %v2413, 1.0
  %v2417 = vadd.f32 %v2415, 1.0
  %v2418 = vrcp.pop %v2416
  %v2419 = vmul.f32 %v2416, %v2418
  %v2420 = vsub.f32 1.0, %v2419
  %v2421 = vmul.f32 %v2418, %v2420
  %v2422 = vadd.f32 %v2418, %v2421
  %vm2423 = vweird.f32 %v2416
  %vm2424 = vweird.f32 %v2418
  %vm2425 = vmor %vm2423, %vm2424
  %v2426 = vsel %vm2425, %v2418, %v2422
  %v2427 = vand.u32 2147483647, %v2416
  %vm2428 = vcmp.eq.f32.partialorder %v2427, 8.507059e+37
  %v2429 = vand.u32 %v2416, 2147483648
  %v2430 = vor.u32 1.1754944e-38, %v2429
  %v2431 = vsel %vm2428, %v2430, %v2426
  %v2432 = vmul.f32 1.0, %v2431
  %v2433 = vrcp.pop %v2417
  %v2434 = vmul.f32 %v2417, %v2433
  %v2435 = vsub.f32 1.0, %v2434
  %v2436 = vmul.f32 %v2433, %v2435
  %v2437 = vadd.f32 %v2433, %v2436
  %vm2438 = vweird.f32 %v2417
  %vm2439 = vweird.f32 %v2433
  %vm2440 = vmor %vm2438, %vm2439
  %v2441 = vsel %vm2440, %v2433, %v2437
  %v2442 = vand.u32 2147483647, %v2417
  %vm2443 = vcmp.eq.f32.partialorder %v2442, 8.507059e+37
  %v2444 = vand.u32 %v2417, 2147483648
  %v2445 = vor.u32 1.1754944e-38, %v2444
  %v2446 = vsel %vm2443, %v2445, %v2441
  %v2447 = vmul.f32 1.0, %v2446
  %v2448 = vtanh.pop %v2409
  %v2450 = vrot.slane %v2357, 6
  %v2452 = vmul.f32 %v2432, %v2450
  %v2453 = vmul.f32 %v2432, %v2448
  %2455 = vrot.lane.b32.xlu0 %v2453, 64
  %v2456 = vpop.permute.xlu0 %2455
  %v2458 = vadd.f32 %v2452, %v2456
  %v2459 = vtanh.pop %v2458
  %v2460 = vmul.f32 %v2447, %v2459
  %v2461 = vld [vmem:[#allocation3 + $0x10] sm:$0xc]
  %v2462 = vld [vmem:[#allocation3 + $0x18] sm:$0xc]
  %2464 = vrot.lane.b32.xlu0 %v2460, 64
  %v2465 = vpop.permute.xlu0 %2464
  %v2466 = vsel %vm1263, %v2465, 0
  %2468 = vmatpush.msra.mxu0 0.0
  %2469 = vmatpush.msra.mxu0 0.0
  %2470 = vmatpush.msra.mxu0 0.0
  %2471 = vmatpush.msra.mxu0 0.0
  %2472 = vmatpush.msra.mxu0 0.0
  %2473 = vmatpush.msra.mxu0 0.0
  %2474 = vmatpush.msra.mxu0 0.0
  %2475 = vmatpush.msra.mxu0 0.0
  %2476 = vmatpush.msra.mxu0 %v1944
  %2477 = vmatpush.msra.mxu0 %v1942
  %2478 = vmatpush.msra.mxu0 %v1940
  %2479 = vmatpush.msra.mxu0 %v1938
  %2480 = vmatpush.msra.mxu0 %v1936
  %2481 = vmatpush.msra.mxu0 %v1934
  %2482 = vmatpush.msra.mxu0 %v1932
  %2483 = vmatpush.msra.mxu0 %v1930
  %2484 = vmatmul.f32.gmra.mxu0 %v2466
  %v2485 = vpop.f32.mrf.mxu0
  %v2486 = vadd.f32 0.0, %v2485
  %2487 = vdwg.mxu0
  %2488 = vmatpush.msra.mxu0 0.0
  %2489 = vmatpush.msra.mxu0 0.0
  %2490 = vmatpush.msra.mxu0 0.0
  %2491 = vmatpush.msra.mxu0 0.0
  %2492 = vmatpush.msra.mxu0 0.0
  %2493 = vmatpush.msra.mxu0 0.0
  %2494 = vmatpush.msra.mxu0 0.0
  %2495 = vmatpush.msra.mxu0 0.0
  %2496 = vmatpush.msra.mxu0 %v1945
  %2497 = vmatpush.msra.mxu0 %v1943
  %2498 = vmatpush.msra.mxu0 %v1941
  %2499 = vmatpush.msra.mxu0 %v1939
  %2500 = vmatpush.msra.mxu0 %v1937
  %2501 = vmatpush.msra.mxu0 %v1935
  %2502 = vmatpush.msra.mxu0 %v1933
  %2503 = vmatpush.msra.mxu0 %v1931
  %2504 = vmatmul.f32.gmra.mxu0 %v2466
  %v2505 = vpop.f32.mrf.mxu0
  %v2506 = vadd.f32 0.0, %v2505
  %2507 = vdwg.mxu0
  %v2510 = vrot.slane %v2486, 6
  %v2511 = vrot.slane %v2506, 6
  %v2514 = vadd.f32 %v2461, %v2510
  %v2515 = vadd.f32 %v2462, %v2511
  %v2516 = vxor.u32 %v2514, 2147483648
  %v2517 = vxor.u32 %v2515, 2147483648
  %v2518 = vmul.f32 %v2516, 1.442695
  %v2519 = vpow.pop %v2518
  %v2520 = vmul.f32 %v2517, 1.442695
  %v2521 = vpow.pop %v2520
  %v2522 = vadd.f32 %v2519, 1.0
  %v2523 = vadd.f32 %v2521, 1.0
  %v2524 = vrcp.pop %v2522
  %v2525 = vmul.f32 %v2522, %v2524
  %v2526 = vsub.f32 1.0, %v2525
  %v2527 = vmul.f32 %v2524, %v2526
  %v2528 = vadd.f32 %v2524, %v2527
  %vm2529 = vweird.f32 %v2522
  %vm2530 = vweird.f32 %v2524
  %vm2531 = vmor %vm2529, %vm2530
  %v2532 = vsel %vm2531, %v2524, %v2528
  %v2533 = vand.u32 2147483647, %v2522
  %vm2534 = vcmp.eq.f32.partialorder %v2533, 8.507059e+37
  %v2535 = vand.u32 %v2522, 2147483648
  %v2536 = vor.u32 1.1754944e-38, %v2535
  %v2537 = vsel %vm2534, %v2536, %v2532
  %v2538 = vmul.f32 1.0, %v2537
  %v2539 = vrcp.pop %v2523
  %v2540 = vmul.f32 %v2523, %v2539
  %v2541 = vsub.f32 1.0, %v2540
  %v2542 = vmul.f32 %v2539, %v2541
  %v2543 = vadd.f32 %v2539, %v2542
  %vm2544 = vweird.f32 %v2523
  %vm2545 = vweird.f32 %v2539
  %vm2546 = vmor %vm2544, %vm2545
  %v2547 = vsel %vm2546, %v2539, %v2543
  %v2548 = vand.u32 2147483647, %v2523
  %vm2549 = vcmp.eq.f32.partialorder %v2548, 8.507059e+37
  %v2550 = vand.u32 %v2523, 2147483648
  %v2551 = vor.u32 1.1754944e-38, %v2550
  %v2552 = vsel %vm2549, %v2551, %v2547
  %v2553 = vmul.f32 1.0, %v2552
  %v2554 = vtanh.pop %v2515
  %v2556 = vrot.slane %v2458, 6
  %v2558 = vmul.f32 %v2538, %v2556
  %v2559 = vmul.f32 %v2538, %v2554
  %2561 = vrot.lane.b32.xlu0 %v2559, 64
  %v2562 = vpop.permute.xlu0 %2561
  %v2564 = vadd.f32 %v2558, %v2562
  %v2565 = vtanh.pop %v2564
  %v2566 = vmul.f32 %v2553, %v2565
  %v2567 = vld [vmem:[#allocation3 + $0x10] sm:$0x30]
  %v2568 = vld [vmem:[#allocation3 + $0x18] sm:$0x30]
  %v2570 = vrot.slane %v2566, 2
  %2571 = vrot.lane.b32.xlu0 %v2570, 64
  %v2572 = vpop.permute.xlu0 %2571
  %v2573 = vsel %vm1263, %v2572, 0
  %2575 = vmatpush.msra.mxu0 0.0
  %2576 = vmatpush.msra.mxu0 0.0
  %2577 = vmatpush.msra.mxu0 0.0
  %2578 = vmatpush.msra.mxu0 0.0
  %2579 = vmatpush.msra.mxu0 0.0
  %2580 = vmatpush.msra.mxu0 0.0
  %2581 = vmatpush.msra.mxu0 0.0
  %2582 = vmatpush.msra.mxu0 0.0
  %2583 = vmatpush.msra.mxu0 %v1944
  %2584 = vmatpush.msra.mxu0 %v1942
  %2585 = vmatpush.msra.mxu0 %v1940
  %2586 = vmatpush.msra.mxu0 %v1938
  %2587 = vmatpush.msra.mxu0 %v1936
  %2588 = vmatpush.msra.mxu0 %v1934
  %2589 = vmatpush.msra.mxu0 %v1932
  %2590 = vmatpush.msra.mxu0 %v1930
  %2591 = vmatmul.f32.gmra.mxu0 %v2573
  %v2592 = vpop.f32.mrf.mxu0
  %v2593 = vadd.f32 0.0, %v2592
  %2594 = vdwg.mxu0
  %2595 = vmatpush.msra.mxu0 0.0
  %2596 = vmatpush.msra.mxu0 0.0
  %2597 = vmatpush.msra.mxu0 0.0
  %2598 = vmatpush.msra.mxu0 0.0
  %2599 = vmatpush.msra.mxu0 0.0
  %2600 = vmatpush.msra.mxu0 0.0
  %2601 = vmatpush.msra.mxu0 0.0
  %2602 = vmatpush.msra.mxu0 0.0
  %2603 = vmatpush.msra.mxu0 %v1945
  %2604 = vmatpush.msra.mxu0 %v1943
  %2605 = vmatpush.msra.mxu0 %v1941
  %2606 = vmatpush.msra.mxu0 %v1939
  %2607 = vmatpush.msra.mxu0 %v1937
  %2608 = vmatpush.msra.mxu0 %v1935
  %2609 = vmatpush.msra.mxu0 %v1933
  %2610 = vmatpush.msra.mxu0 %v1931
  %2611 = vmatmul.f32.gmra.mxu0 %v2573
  %v2612 = vpop.f32.mrf.mxu0
  %v2613 = vadd.f32 0.0, %v2612
  %2614 = vdwg.mxu0
  %v2617 = vrot.slane %v2593, 4
  %v2618 = vrot.slane %v2613, 4
  %v2621 = vadd.f32 %v2567, %v2617
  %v2622 = vadd.f32 %v2568, %v2618
  %v2623 = vxor.u32 %v2621, 2147483648
  %v2624 = vxor.u32 %v2622, 2147483648
  %v2625 = vmul.f32 %v2623, 1.442695
  %v2626 = vpow.pop %v2625
  %v2627 = vmul.f32 %v2624, 1.442695
  %v2628 = vpow.pop %v2627
  %v2629 = vadd.f32 %v2626, 1.0
  %v2630 = vadd.f32 %v2628, 1.0
  %v2631 = vrcp.pop %v2629
  %v2632 = vmul.f32 %v2629, %v2631
  %v2633 = vsub.f32 1.0, %v2632
  %v2634 = vmul.f32 %v2631, %v2633
  %v2635 = vadd.f32 %v2631, %v2634
  %vm2636 = vweird.f32 %v2629
  %vm2637 = vweird.f32 %v2631
  %vm2638 = vmor %vm2636, %vm2637
  %v2639 = vsel %vm2638, %v2631, %v2635
  %v2640 = vand.u32 2147483647, %v2629
  %vm2641 = vcmp.eq.f32.partialorder %v2640, 8.507059e+37
  %v2642 = vand.u32 %v2629, 2147483648
  %v2643 = vor.u32 1.1754944e-38, %v2642
  %v2644 = vsel %vm2641, %v2643, %v2639
  %v2645 = vmul.f32 1.0, %v2644
  %v2646 = vrcp.pop %v2630
  %v2647 = vmul.f32 %v2630, %v2646
  %v2648 = vsub.f32 1.0, %v2647
  %v2649 = vmul.f32 %v2646, %v2648
  %v2650 = vadd.f32 %v2646, %v2649
  %vm2651 = vweird.f32 %v2630
  %vm2652 = vweird.f32 %v2646
  %vm2653 = vmor %vm2651, %vm2652
  %v2654 = vsel %vm2653, %v2646, %v2650
  %v2655 = vand.u32 2147483647, %v2630
  %vm2656 = vcmp.eq.f32.partialorder %v2655, 8.507059e+37
  %v2657 = vand.u32 %v2630, 2147483648
  %v2658 = vor.u32 1.1754944e-38, %v2657
  %v2659 = vsel %vm2656, %v2658, %v2654
  %v2660 = vmul.f32 1.0, %v2659
  %v2661 = vtanh.pop %v2622
  %v2663 = vrot.slane %v2564, 6
  %v2665 = vmul.f32 %v2645, %v2663
  %v2666 = vmul.f32 %v2645, %v2661
  %2668 = vrot.lane.b32.xlu0 %v2666, 64
  %v2669 = vpop.permute.xlu0 %2668
  %v2671 = vadd.f32 %v2665, %v2669
  %v2672 = vtanh.pop %v2671
  %v2673 = vmul.f32 %v2660, %v2672
  %v2674 = vld [vmem:[#allocation3 + $0x10] sm:$0xc0]
  %v2675 = vld [vmem:[#allocation3 + $0x18] sm:$0xc0]
  %v2677 = vrot.slane %v2673, 4
  %2678 = vrot.lane.b32.xlu0 %v2677, 64
  %v2679 = vpop.permute.xlu0 %2678
  %v2680 = vsel %vm1263, %v2679, 0
  %2682 = vmatpush.msra.mxu0 0.0
  %2683 = vmatpush.msra.mxu0 0.0
  %2684 = vmatpush.msra.mxu0 0.0
  %2685 = vmatpush.msra.mxu0 0.0
  %2686 = vmatpush.msra.mxu0 0.0
  %2687 = vmatpush.msra.mxu0 0.0
  %2688 = vmatpush.msra.mxu0 0.0
  %2689 = vmatpush.msra.mxu0 0.0
  %2690 = vmatpush.msra.mxu0 %v1944
  %2691 = vmatpush.msra.mxu0 %v1942
  %2692 = vmatpush.msra.mxu0 %v1940
  %2693 = vmatpush.msra.mxu0 %v1938
  %2694 = vmatpush.msra.mxu0 %v1936
  %2695 = vmatpush.msra.mxu0 %v1934
  %2696 = vmatpush.msra.mxu0 %v1932
  %2697 = vmatpush.msra.mxu0 %v1930
  %2698 = vmatmul.f32.gmra.mxu0 %v2680
  %v2699 = vpop.f32.mrf.mxu0
  %v2700 = vadd.f32 0.0, %v2699
  %2701 = vdwg.mxu0
  %2702 = vmatpush.msra.mxu0 0.0
  %2703 = vmatpush.msra.mxu0 0.0
  %2704 = vmatpush.msra.mxu0 0.0
  %2705 = vmatpush.msra.mxu0 0.0
  %2706 = vmatpush.msra.mxu0 0.0
  %2707 = vmatpush.msra.mxu0 0.0
  %2708 = vmatpush.msra.mxu0 0.0
  %2709 = vmatpush.msra.mxu0 0.0
  %2710 = vmatpush.msra.mxu0 %v1945
  %2711 = vmatpush.msra.mxu0 %v1943
  %2712 = vmatpush.msra.mxu0 %v1941
  %2713 = vmatpush.msra.mxu0 %v1939
  %2714 = vmatpush.msra.mxu0 %v1937
  %2715 = vmatpush.msra.mxu0 %v1935
  %2716 = vmatpush.msra.mxu0 %v1933
  %2717 = vmatpush.msra.mxu0 %v1931
  %2718 = vmatmul.f32.gmra.mxu0 %v2680
  %v2719 = vpop.f32.mrf.mxu0
  %v2720 = vadd.f32 0.0, %v2719
  %2721 = vdwg.mxu0
  %v2724 = vrot.slane %v2700, 2
  %v2725 = vrot.slane %v2720, 2
  %v2728 = vadd.f32 %v2674, %v2724
  %v2729 = vadd.f32 %v2675, %v2725
  %v2730 = vxor.u32 %v2728, 2147483648
  %v2731 = vxor.u32 %v2729, 2147483648
  %v2732 = vmul.f32 %v2730, 1.442695
  %v2733 = vpow.pop %v2732
  %v2734 = vmul.f32 %v2731, 1.442695
  %v2735 = vpow.pop %v2734
  %v2736 = vadd.f32 %v2733, 1.0
  %v2737 = vadd.f32 %v2735, 1.0
  %v2738 = vrcp.pop %v2736
  %v2739 = vmul.f32 %v2736, %v2738
  %v2740 = vsub.f32 1.0, %v2739
  %v2741 = vmul.f32 %v2738, %v2740
  %v2742 = vadd.f32 %v2738, %v2741
  %vm2743 = vweird.f32 %v2736
  %vm2744 = vweird.f32 %v2738
  %vm2745 = vmor %vm2743, %vm2744
  %v2746 = vsel %vm2745, %v2738, %v2742
  %v2747 = vand.u32 2147483647, %v2736
  %vm2748 = vcmp.eq.f32.partialorder %v2747, 8.507059e+37
  %v2749 = vand.u32 %v2736, 2147483648
  %v2750 = vor.u32 1.1754944e-38, %v2749
  %v2751 = vsel %vm2748, %v2750, %v2746
  %v2752 = vmul.f32 1.0, %v2751
  %v2753 = vrcp.pop %v2737
  %v2754 = vmul.f32 %v2737, %v2753
  %v2755 = vsub.f32 1.0, %v2754
  %v2756 = vmul.f32 %v2753, %v2755
  %v2757 = vadd.f32 %v2753, %v2756
  %vm2758 = vweird.f32 %v2737
  %vm2759 = vweird.f32 %v2753
  %vm2760 = vmor %vm2758, %vm2759
  %v2761 = vsel %vm2760, %v2753, %v2757
  %v2762 = vand.u32 2147483647, %v2737
  %vm2763 = vcmp.eq.f32.partialorder %v2762, 8.507059e+37
  %v2764 = vand.u32 %v2737, 2147483648
  %v2765 = vor.u32 1.1754944e-38, %v2764
  %v2766 = vsel %vm2763, %v2765, %v2761
  %v2767 = vmul.f32 1.0, %v2766
  %v2768 = vtanh.pop %v2729
  %v2770 = vrot.slane %v2671, 6
  %v2772 = vmul.f32 %v2752, %v2770
  %v2773 = vmul.f32 %v2752, %v2768
  %2775 = vrot.lane.b32.xlu0 %v2773, 64
  %v2776 = vpop.permute.xlu0 %2775
  %v2778 = vadd.f32 %v2772, %v2776
  %v2779 = vtanh.pop %v2778
  %v2780 = vmul.f32 %v2767, %v2779
  %2782 = vrot.lane.b32.xlu0 %v2149, 112
  %v2783 = vpop.permute.xlu0 %2782
  %2785 = vrot.lane.b32.xlu0 %v2256, 32
  %v2786 = vpop.permute.xlu0 %2785
  %2788 = vrot.lane.b32.xlu0 %v2363, 80
  %v2789 = vpop.permute.xlu0 %2788
  %2791 = vrot.lane.b32.xlu0 %v2570, 48
  %v2792 = vpop.permute.xlu0 %2791
  %2794 = vrot.lane.b32.xlu0 %v2677, 96
  %v2795 = vpop.permute.xlu0 %2794
  %v2798 = vrot.slane %v2780, 6
  %2799 = vrot.lane.b32.xlu0 %v2798, 16
  %v2800 = vpop.permute.xlu0 %2799
  %v2802 = vsel %vm73, %v2044, %v2783
  %v2803 = vsel %vm1265, %v2802, %v2786
  %vm2804 = vcmask 130048
  %v2805 = vsel %vm2804, %v2786, %v2789
  %v2806 = vsel %vm1263, %v2805, %v2460
  %vm2807 = vcmask 916480
  %v2808 = vsel %vm2807, %v2806, %v2792
  %v2809 = vsel %vm110, %v2792, %v2795
  %vm2810 = vcmask 654336
  %v2811 = vsel %vm2810, %v2809, %v2800
  %v2815 = vrot.slane %v2808, 6
  %v2816 = vrot.slane %v2811, 4
  %v2817 = vsel %vm633, %v2803, %v2815
  %v2818 = vsel %vm635, %v2817, %v2816
  %2820 = vst [vmem:[%s19] sm:$0x3f] %v2818
  // Predicated region
  $region74: #{lstm_vae_forward.1} parent=0 // pred_check
    _
  $region75: #{lstm_vae_forward.1} parent=0 // pred_check_branch
    %2822 = sbr.rel (0) target = $region77
  $region76: #{lstm_vae_forward.1} parent=0 // pred_region
    _
  $region77: #{lstm_vae_forward.1} parent=0 // pred_fallthru
    _
  // Predicated region
  $region78: #{lstm_vae_forward.1} parent=0 // pred_check
    _
  $region79: #{lstm_vae_forward.1} parent=0 // pred_check_branch
    %2824 = sbr.rel (0) target = $region81
  $region80: #{lstm_vae_forward.1} parent=0 // pred_region
    _
  $region81: #{lstm_vae_forward.1} parent=0 // pred_fallthru
    _
  // Predicated region
  $region82: #{lstm_vae_forward.1} parent=0 // pred_check
    _
  $region83: #{lstm_vae_forward.1} parent=0 // pred_check_branch
    %2826 = sbr.rel (0) target = $region85
  $region84: #{lstm_vae_forward.1} parent=0 // pred_region
    _
  $region85: #{lstm_vae_forward.1} parent=0 // pred_fallthru
    _
  // Predicated region
  $region86: #{lstm_vae_forward.1} parent=0 // pred_check
    _
  $region87: #{lstm_vae_forward.1} parent=0 // pred_check_branch
    %2828 = sbr.rel (0) target = $region89
  $region88: #{lstm_vae_forward.1} parent=0 // pred_region
    _
  $region89: #{lstm_vae_forward.1} parent=0 // pred_fallthru
    _

</llo_original>
